<compile_context>
chip_gen: v7x
topology: tpu7x:2x2x1
jax: 0.10.0
libtpu: 0.0.40
codegen_flags: <defaults>
</compile_context>

<pallas_src>
import jax
import jax.numpy as jnp
from jax import lax
from jax.experimental import pallas as pl
from jax.experimental.pallas import tpu as pltpu


def _bottleneck_kernel(x_ref, w1_ref, s1_ref, b1_ref, w2_ref, s2_ref, b2_ref,
                       w3_ref, s3_ref, b3_ref, shift_ref, o_ref):
    f32 = jnp.float32
    x = x_ref[0]                                              # (C, HW)

    # --- stage 1: 1x1 conv + folded BN + ReLU (C -> Cr) -----------------------
    y1 = jnp.dot(w1_ref[...], x, preferred_element_type=f32)  # (Cr, HW)
    y1 = jnp.maximum(y1 * s1_ref[...] + b1_ref[...], 0.0)

    # --- stage 2: 3x3 'same' conv + folded BN + ReLU ---------------------------
    # out[:, p] = sum_k W2_k @ y1[:, shifted(p, k)]  with zero padding; the
    # shift + padding is baked into shift_ref[k] (HW, HW) so both factors run
    # on the MXU.
    acc = jnp.zeros_like(y1)
    for k in range(9):
        zk = jnp.dot(w2_ref[k], y1, preferred_element_type=f32)        # (Cr, HW)
        acc = acc + jnp.dot(zk, shift_ref[k], preferred_element_type=f32)
    y2 = jnp.maximum(acc * s2_ref[...] + b2_ref[...], 0.0)

    # --- stage 3: 1x1 conv + folded BN (no activation) (Cr -> C) --------------
    y3 = jnp.dot(w3_ref[...], y2, preferred_element_type=f32)  # (C, HW)
    y3 = y3 * s3_ref[...] + b3_ref[...]

    # --- residual add (identity shortcut) + final ReLU ------------------------
    o_ref[0] = jnp.maximum(y3 + x, 0.0).astype(o_ref.dtype)


def _make_tap_shift_matrices(H, W):
    """9 selection matrices S_k (HW, HW): (y @ S_k)[:, p] = y[:, p + dy*W + dx]
    when the tap is inside the image, else 0 (zero padding)."""
    HW = H * W
    idx = jnp.arange(HW, dtype=jnp.int32)
    row, col = idx // W, idx % W
    mats = []
    for dy in (-1, 0, 1):
        for dx in (-1, 0, 1):
            valid = ((row + dy >= 0) & (row + dy < H) &
                     (col + dx >= 0) & (col + dx < W))
            src = idx + dy * W + dx
            sel = (idx[:, None] == src[None, :]) & valid[None, :]
            mats.append(sel.astype(jnp.float32))
    return jnp.stack(mats, axis=0)                            # (9, HW, HW)


def bottleneck_forward(x, params):
    """Pallas implementation of BottleNeck.forward.  x: (B, C, H, W) NCHW.
    Returns (relu(block(x) + x), kl) with kl == 0."""
    w1, s1, b1, w2, s2, b2, w3, s3, b3 = params
    B, C, H, W = x.shape
    Cr = w1.shape[0]
    HW = H * W

    x_flat = x.reshape(B, C, HW)                       # pixels on lanes (lane-dense)
    w2_taps = jnp.transpose(w2, (2, 3, 0, 1)).reshape(9, Cr, Cr)   # (k, out, in)
    shift = _make_tap_shift_matrices(H, W)
    s1c, b1c = s1.reshape(Cr, 1), b1.reshape(Cr, 1)
    s2c, b2c = s2.reshape(Cr, 1), b2.reshape(Cr, 1)
    s3c, b3c = s3.reshape(C, 1), b3.reshape(C, 1)

    full2 = lambda shape: pl.BlockSpec(shape, lambda b: (0, 0))
    full3 = lambda shape: pl.BlockSpec(shape, lambda b: (0, 0, 0))

    out_flat = pl.pallas_call(
        _bottleneck_kernel,
        out_shape=jax.ShapeDtypeStruct((B, C, HW), x.dtype),
        grid=(B,),
        in_specs=[
            pl.BlockSpec((1, C, HW), lambda b: (b, 0, 0)),     # x
            full2((Cr, C)), full2((Cr, 1)), full2((Cr, 1)),    # w1, s1, b1
            full3((9, Cr, Cr)), full2((Cr, 1)), full2((Cr, 1)),# w2 taps, s2, b2
            full2((C, Cr)), full2((C, 1)), full2((C, 1)),      # w3, s3, b3
            full3((9, HW, HW)),                                # shift matrices
        ],
        out_specs=pl.BlockSpec((1, C, HW), lambda b: (b, 0, 0)),
        compiler_params=pltpu.CompilerParams(
            dimension_semantics=("parallel",)),
    )(x_flat, w1, s1c, b1c, w2_taps, s2c, b2c, w3, s3c, b3c, shift)

    # TODO(synk): Bayesian weight sampling / KL of BayesConv* is not specified;
    # deterministic weights are used and kl is the constant 0.
    return out_flat.reshape(B, C, H, W), 0


def bottleneck_ref(x, params):
    """Pure-JAX reference (independent of the Pallas kernel)."""
    w1, s1, b1, w2, s2, b2, w3, s3, b3 = params
    hi = lax.Precision.HIGHEST
    y1 = jnp.einsum('rc,bchw->brhw', w1, x, precision=hi)
    y1 = jax.nn.relu(y1 * s1[None, :, None, None] + b1[None, :, None, None])
    y2 = lax.conv_general_dilated(y1, w2, (1, 1), ((1, 1), (1, 1)),
                                  dimension_numbers=('NCHW', 'OIHW', 'NCHW'),
                                  precision=hi)
    y2 = jax.nn.relu(y2 * s2[None, :, None, None] + b2[None, :, None, None])
    y3 = jnp.einsum('cr,brhw->bchw', w3, y2, precision=hi)
    y3 = y3 * s3[None, :, None, None] + b3[None, :, None, None]
    return jax.nn.relu(y3 + x)


if __name__ == "__main__":
    key = jax.random.PRNGKey(0)
    B, C, H, W = 2, 32, 16, 16      # out_channels = 32, spatial 16x16
    reduction = 4
    Cr = C // reduction             # 8

    ks = jax.random.split(key, 10)
    x = jax.random.normal(ks[0], (B, C, H, W), jnp.float32)
    w1 = jax.random.normal(ks[1], (Cr, C), jnp.float32) / (C ** 0.5)
    w2 = jax.random.normal(ks[2], (Cr, Cr, 3, 3), jnp.float32) / ((9 * Cr) ** 0.5)
    w3 = jax.random.normal(ks[3], (C, Cr), jnp.float32) / (Cr ** 0.5)
    s1 = 1.0 + 0.1 * jax.random.normal(ks[4], (Cr,), jnp.float32)
    b1 = 0.1 * jax.random.normal(ks[5], (Cr,), jnp.float32)
    s2 = 1.0 + 0.1 * jax.random.normal(ks[6], (Cr,), jnp.float32)
    b2 = 0.1 * jax.random.normal(ks[7], (Cr,), jnp.float32)
    s3 = 1.0 + 0.1 * jax.random.normal(ks[8], (C,), jnp.float32)
    b3 = 0.1 * jax.random.normal(ks[9], (C,), jnp.float32)
    params = (w1, s1, b1, w2, s2, b2, w3, s3, b3)

    out, kl = bottleneck_forward(x, params)
    out = jax.block_until_ready(out)

    ref = bottleneck_ref(x, params)
    assert out.shape == ref.shape, (out.shape, ref.shape)
    assert out.dtype == ref.dtype
    assert kl == 0
    err = float(jnp.max(jnp.abs(out - ref)))
    assert err < 1e-2, f"Pallas BottleNeck mismatch: max abs err = {err}"

    print("KERNEL_OK")
</pallas_src>

<mosaic_0001>
module attributes {stable_mosaic.version = 11 : i64} {
  func.func @_bottleneck_kernel(%arg0: i32, %arg1: memref<1x32x256xf32, #tpu.memory_space<vmem>>, %arg2: memref<8x32xf32, #tpu.memory_space<vmem>>, %arg3: memref<8x1xf32, #tpu.memory_space<vmem>>, %arg4: memref<8x1xf32, #tpu.memory_space<vmem>>, %arg5: memref<9x8x8xf32, #tpu.memory_space<vmem>>, %arg6: memref<8x1xf32, #tpu.memory_space<vmem>>, %arg7: memref<8x1xf32, #tpu.memory_space<vmem>>, %arg8: memref<32x8xf32, #tpu.memory_space<vmem>>, %arg9: memref<32x1xf32, #tpu.memory_space<vmem>>, %arg10: memref<32x1xf32, #tpu.memory_space<vmem>>, %arg11: memref<9x256x256xf32, #tpu.memory_space<vmem>>, %arg12: memref<1x32x256xf32, #tpu.memory_space<vmem>>) attributes {dimension_semantics = [#tpu.dimension_semantics<parallel>], iteration_bounds = array<i64: 2>, scalar_prefetch = 0 : i64, scratch_operands = 0 : i64, tpu.core_type = #tpu.core_type<tc>, window_params = [{transform_indices = @transform_0, window_bounds = array<i64: 1, 32, 256>}, {pipeline_mode = #tpu.pipeline_mode<synchronous>, transform_indices = @transform_1, window_bounds = array<i64: 8, 32>}, {pipeline_mode = #tpu.pipeline_mode<synchronous>, transform_indices = @transform_2, window_bounds = array<i64: 8, 1>}, {pipeline_mode = #tpu.pipeline_mode<synchronous>, transform_indices = @transform_3, window_bounds = array<i64: 8, 1>}, {pipeline_mode = #tpu.pipeline_mode<synchronous>, transform_indices = @transform_4, window_bounds = array<i64: 9, 8, 8>}, {pipeline_mode = #tpu.pipeline_mode<synchronous>, transform_indices = @transform_5, window_bounds = array<i64: 8, 1>}, {pipeline_mode = #tpu.pipeline_mode<synchronous>, transform_indices = @transform_6, window_bounds = array<i64: 8, 1>}, {pipeline_mode = #tpu.pipeline_mode<synchronous>, transform_indices = @transform_7, window_bounds = array<i64: 32, 8>}, {pipeline_mode = #tpu.pipeline_mode<synchronous>, transform_indices = @transform_8, window_bounds = array<i64: 32, 1>}, {pipeline_mode = #tpu.pipeline_mode<synchronous>, transform_indices = @transform_9, window_bounds = array<i64: 32, 1>}, {pipeline_mode = #tpu.pipeline_mode<synchronous>, transform_indices = @transform_10, window_bounds = array<i64: 9, 256, 256>}, {transform_indices = @transform_11, window_bounds = array<i64: 1, 32, 256>}]} {
    %c0 = arith.constant 0 : index
    %c0_0 = arith.constant 0 : index
    %c0_1 = arith.constant 0 : index
    %0 = vector.load %arg1[%c0, %c0_0, %c0_1] : memref<1x32x256xf32, #tpu.memory_space<vmem>>, vector<1x32x256xf32>
    %1 = vector.shape_cast %0 : vector<1x32x256xf32> to vector<32x256xf32>
    %c0_2 = arith.constant 0 : index
    %c0_3 = arith.constant 0 : index
    %2 = vector.load %arg2[%c0_2, %c0_3] : memref<8x32xf32, #tpu.memory_space<vmem>>, vector<8x32xf32>
    %cst = arith.constant dense<0.000000e+00> : vector<8x256xf32>
    %3 = tpu.matmul %2, %1, %cst {dimension_numbers = #tpu.dot_dimension_numbers<[1], [0], [0], [1], [0, 0, 1, 1], [], []>} : vector<8x32xf32>, vector<32x256xf32>, vector<8x256xf32> -> vector<8x256xf32>
    %c0_4 = arith.constant 0 : index
    %c0_5 = arith.constant 0 : index
    %4 = vector.load %arg3[%c0_4, %c0_5] : memref<8x1xf32, #tpu.memory_space<vmem>>, vector<8x1xf32>
    %5 = vector.broadcast %4 : vector<8x1xf32> to vector<8x256xf32>
    %6 = arith.mulf %3, %5 : vector<8x256xf32>
    %c0_6 = arith.constant 0 : index
    %c0_7 = arith.constant 0 : index
    %7 = vector.load %arg4[%c0_6, %c0_7] : memref<8x1xf32, #tpu.memory_space<vmem>>, vector<8x1xf32>
    %8 = vector.broadcast %7 : vector<8x1xf32> to vector<8x256xf32>
    %9 = arith.addf %6, %8 : vector<8x256xf32>
    %cst_8 = arith.constant 0.000000e+00 : f32
    %10 = vector.broadcast %cst_8 : f32 to vector<8x256xf32>
    %11 = arith.maximumf %9, %10 : vector<8x256xf32>
    %cst_9 = arith.constant 0.000000e+00 : f32
    %12 = vector.broadcast %cst_9 : f32 to vector<8x256xf32>
    %c0_10 = arith.constant 0 : index
    %c0_11 = arith.constant 0 : index
    %c0_12 = arith.constant 0 : index
    %13 = vector.load %arg5[%c0_10, %c0_11, %c0_12] : memref<9x8x8xf32, #tpu.memory_space<vmem>>, vector<1x8x8xf32>
    %14 = vector.shape_cast %13 : vector<1x8x8xf32> to vector<8x8xf32>
    %cst_13 = arith.constant dense<0.000000e+00> : vector<8x256xf32>
    %15 = tpu.matmul %14, %11, %cst_13 {dimension_numbers = #tpu.dot_dimension_numbers<[1], [0], [0], [1], [0, 0, 1, 1], [], []>} : vector<8x8xf32>, vector<8x256xf32>, vector<8x256xf32> -> vector<8x256xf32>
    %c0_14 = arith.constant 0 : index
    %c0_15 = arith.constant 0 : index
    %c0_16 = arith.constant 0 : index
    %16 = vector.load %arg11[%c0_14, %c0_15, %c0_16] : memref<9x256x256xf32, #tpu.memory_space<vmem>>, vector<1x256x256xf32>
    %17 = vector.shape_cast %16 : vector<1x256x256xf32> to vector<256x256xf32>
    %cst_17 = arith.constant dense<0.000000e+00> : vector<8x256xf32>
    %18 = tpu.matmul %15, %17, %cst_17 {dimension_numbers = #tpu.dot_dimension_numbers<[1], [0], [0], [1], [0, 0, 1, 1], [], []>} : vector<8x256xf32>, vector<256x256xf32>, vector<8x256xf32> -> vector<8x256xf32>
    %19 = arith.addf %12, %18 : vector<8x256xf32>
    %c1 = arith.constant 1 : index
    %c0_18 = arith.constant 0 : index
    %c0_19 = arith.constant 0 : index
    %20 = vector.load %arg5[%c1, %c0_18, %c0_19] : memref<9x8x8xf32, #tpu.memory_space<vmem>>, vector<1x8x8xf32>
    %21 = vector.shape_cast %20 : vector<1x8x8xf32> to vector<8x8xf32>
    %cst_20 = arith.constant dense<0.000000e+00> : vector<8x256xf32>
    %22 = tpu.matmul %21, %11, %cst_20 {dimension_numbers = #tpu.dot_dimension_numbers<[1], [0], [0], [1], [0, 0, 1, 1], [], []>} : vector<8x8xf32>, vector<8x256xf32>, vector<8x256xf32> -> vector<8x256xf32>
    %c1_21 = arith.constant 1 : index
    %c0_22 = arith.constant 0 : index
    %c0_23 = arith.constant 0 : index
    %23 = vector.load %arg11[%c1_21, %c0_22, %c0_23] : memref<9x256x256xf32, #tpu.memory_space<vmem>>, vector<1x256x256xf32>
    %24 = vector.shape_cast %23 : vector<1x256x256xf32> to vector<256x256xf32>
    %cst_24 = arith.constant dense<0.000000e+00> : vector<8x256xf32>
    %25 = tpu.matmul %22, %24, %cst_24 {dimension_numbers = #tpu.dot_dimension_numbers<[1], [0], [0], [1], [0, 0, 1, 1], [], []>} : vector<8x256xf32>, vector<256x256xf32>, vector<8x256xf32> -> vector<8x256xf32>
    %26 = arith.addf %19, %25 : vector<8x256xf32>
    %c2 = arith.constant 2 : index
    %c0_25 = arith.constant 0 : index
    %c0_26 = arith.constant 0 : index
    %27 = vector.load %arg5[%c2, %c0_25, %c0_26] : memref<9x8x8xf32, #tpu.memory_space<vmem>>, vector<1x8x8xf32>
    %28 = vector.shape_cast %27 : vector<1x8x8xf32> to vector<8x8xf32>
    %cst_27 = arith.constant dense<0.000000e+00> : vector<8x256xf32>
    %29 = tpu.matmul %28, %11, %cst_27 {dimension_numbers = #tpu.dot_dimension_numbers<[1], [0], [0], [1], [0, 0, 1, 1], [], []>} : vector<8x8xf32>, vector<8x256xf32>, vector<8x256xf32> -> vector<8x256xf32>
    %c2_28 = arith.constant 2 : index
    %c0_29 = arith.constant 0 : index
    %c0_30 = arith.constant 0 : index
    %30 = vector.load %arg11[%c2_28, %c0_29, %c0_30] : memref<9x256x256xf32, #tpu.memory_space<vmem>>, vector<1x256x256xf32>
    %31 = vector.shape_cast %30 : vector<1x256x256xf32> to vector<256x256xf32>
    %cst_31 = arith.constant dense<0.000000e+00> : vector<8x256xf32>
    %32 = tpu.matmul %29, %31, %cst_31 {dimension_numbers = #tpu.dot_dimension_numbers<[1], [0], [0], [1], [0, 0, 1, 1], [], []>} : vector<8x256xf32>, vector<256x256xf32>, vector<8x256xf32> -> vector<8x256xf32>
    %33 = arith.addf %26, %32 : vector<8x256xf32>
    %c3 = arith.constant 3 : index
    %c0_32 = arith.constant 0 : index
    %c0_33 = arith.constant 0 : index
    %34 = vector.load %arg5[%c3, %c0_32, %c0_33] : memref<9x8x8xf32, #tpu.memory_space<vmem>>, vector<1x8x8xf32>
    %35 = vector.shape_cast %34 : vector<1x8x8xf32> to vector<8x8xf32>
    %cst_34 = arith.constant dense<0.000000e+00> : vector<8x256xf32>
    %36 = tpu.matmul %35, %11, %cst_34 {dimension_numbers = #tpu.dot_dimension_numbers<[1], [0], [0], [1], [0, 0, 1, 1], [], []>} : vector<8x8xf32>, vector<8x256xf32>, vector<8x256xf32> -> vector<8x256xf32>
    %c3_35 = arith.constant 3 : index
    %c0_36 = arith.constant 0 : index
    %c0_37 = arith.constant 0 : index
    %37 = vector.load %arg11[%c3_35, %c0_36, %c0_37] : memref<9x256x256xf32, #tpu.memory_space<vmem>>, vector<1x256x256xf32>
    %38 = vector.shape_cast %37 : vector<1x256x256xf32> to vector<256x256xf32>
    %cst_38 = arith.constant dense<0.000000e+00> : vector<8x256xf32>
    %39 = tpu.matmul %36, %38, %cst_38 {dimension_numbers = #tpu.dot_dimension_numbers<[1], [0], [0], [1], [0, 0, 1, 1], [], []>} : vector<8x256xf32>, vector<256x256xf32>, vector<8x256xf32> -> vector<8x256xf32>
    %40 = arith.addf %33, %39 : vector<8x256xf32>
    %c4 = arith.constant 4 : index
    %c0_39 = arith.constant 0 : index
    %c0_40 = arith.constant 0 : index
    %41 = vector.load %arg5[%c4, %c0_39, %c0_40] : memref<9x8x8xf32, #tpu.memory_space<vmem>>, vector<1x8x8xf32>
    %42 = vector.shape_cast %41 : vector<1x8x8xf32> to vector<8x8xf32>
    %cst_41 = arith.constant dense<0.000000e+00> : vector<8x256xf32>
    %43 = tpu.matmul %42, %11, %cst_41 {dimension_numbers = #tpu.dot_dimension_numbers<[1], [0], [0], [1], [0, 0, 1, 1], [], []>} : vector<8x8xf32>, vector<8x256xf32>, vector<8x256xf32> -> vector<8x256xf32>
    %c4_42 = arith.constant 4 : index
    %c0_43 = arith.constant 0 : index
    %c0_44 = arith.constant 0 : index
    %44 = vector.load %arg11[%c4_42, %c0_43, %c0_44] : memref<9x256x256xf32, #tpu.memory_space<vmem>>, vector<1x256x256xf32>
    %45 = vector.shape_cast %44 : vector<1x256x256xf32> to vector<256x256xf32>
    %cst_45 = arith.constant dense<0.000000e+00> : vector<8x256xf32>
    %46 = tpu.matmul %43, %45, %cst_45 {dimension_numbers = #tpu.dot_dimension_numbers<[1], [0], [0], [1], [0, 0, 1, 1], [], []>} : vector<8x256xf32>, vector<256x256xf32>, vector<8x256xf32> -> vector<8x256xf32>
    %47 = arith.addf %40, %46 : vector<8x256xf32>
    %c5 = arith.constant 5 : index
    %c0_46 = arith.constant 0 : index
    %c0_47 = arith.constant 0 : index
    %48 = vector.load %arg5[%c5, %c0_46, %c0_47] : memref<9x8x8xf32, #tpu.memory_space<vmem>>, vector<1x8x8xf32>
    %49 = vector.shape_cast %48 : vector<1x8x8xf32> to vector<8x8xf32>
    %cst_48 = arith.constant dense<0.000000e+00> : vector<8x256xf32>
    %50 = tpu.matmul %49, %11, %cst_48 {dimension_numbers = #tpu.dot_dimension_numbers<[1], [0], [0], [1], [0, 0, 1, 1], [], []>} : vector<8x8xf32>, vector<8x256xf32>, vector<8x256xf32> -> vector<8x256xf32>
    %c5_49 = arith.constant 5 : index
    %c0_50 = arith.constant 0 : index
    %c0_51 = arith.constant 0 : index
    %51 = vector.load %arg11[%c5_49, %c0_50, %c0_51] : memref<9x256x256xf32, #tpu.memory_space<vmem>>, vector<1x256x256xf32>
    %52 = vector.shape_cast %51 : vector<1x256x256xf32> to vector<256x256xf32>
    %cst_52 = arith.constant dense<0.000000e+00> : vector<8x256xf32>
    %53 = tpu.matmul %50, %52, %cst_52 {dimension_numbers = #tpu.dot_dimension_numbers<[1], [0], [0], [1], [0, 0, 1, 1], [], []>} : vector<8x256xf32>, vector<256x256xf32>, vector<8x256xf32> -> vector<8x256xf32>
    %54 = arith.addf %47, %53 : vector<8x256xf32>
    %c6 = arith.constant 6 : index
    %c0_53 = arith.constant 0 : index
    %c0_54 = arith.constant 0 : index
    %55 = vector.load %arg5[%c6, %c0_53, %c0_54] : memref<9x8x8xf32, #tpu.memory_space<vmem>>, vector<1x8x8xf32>
    %56 = vector.shape_cast %55 : vector<1x8x8xf32> to vector<8x8xf32>
    %cst_55 = arith.constant dense<0.000000e+00> : vector<8x256xf32>
    %57 = tpu.matmul %56, %11, %cst_55 {dimension_numbers = #tpu.dot_dimension_numbers<[1], [0], [0], [1], [0, 0, 1, 1], [], []>} : vector<8x8xf32>, vector<8x256xf32>, vector<8x256xf32> -> vector<8x256xf32>
    %c6_56 = arith.constant 6 : index
    %c0_57 = arith.constant 0 : index
    %c0_58 = arith.constant 0 : index
    %58 = vector.load %arg11[%c6_56, %c0_57, %c0_58] : memref<9x256x256xf32, #tpu.memory_space<vmem>>, vector<1x256x256xf32>
    %59 = vector.shape_cast %58 : vector<1x256x256xf32> to vector<256x256xf32>
    %cst_59 = arith.constant dense<0.000000e+00> : vector<8x256xf32>
    %60 = tpu.matmul %57, %59, %cst_59 {dimension_numbers = #tpu.dot_dimension_numbers<[1], [0], [0], [1], [0, 0, 1, 1], [], []>} : vector<8x256xf32>, vector<256x256xf32>, vector<8x256xf32> -> vector<8x256xf32>
    %61 = arith.addf %54, %60 : vector<8x256xf32>
    %c7 = arith.constant 7 : index
    %c0_60 = arith.constant 0 : index
    %c0_61 = arith.constant 0 : index
    %62 = vector.load %arg5[%c7, %c0_60, %c0_61] : memref<9x8x8xf32, #tpu.memory_space<vmem>>, vector<1x8x8xf32>
    %63 = vector.shape_cast %62 : vector<1x8x8xf32> to vector<8x8xf32>
    %cst_62 = arith.constant dense<0.000000e+00> : vector<8x256xf32>
    %64 = tpu.matmul %63, %11, %cst_62 {dimension_numbers = #tpu.dot_dimension_numbers<[1], [0], [0], [1], [0, 0, 1, 1], [], []>} : vector<8x8xf32>, vector<8x256xf32>, vector<8x256xf32> -> vector<8x256xf32>
    %c7_63 = arith.constant 7 : index
    %c0_64 = arith.constant 0 : index
    %c0_65 = arith.constant 0 : index
    %65 = vector.load %arg11[%c7_63, %c0_64, %c0_65] : memref<9x256x256xf32, #tpu.memory_space<vmem>>, vector<1x256x256xf32>
    %66 = vector.shape_cast %65 : vector<1x256x256xf32> to vector<256x256xf32>
    %cst_66 = arith.constant dense<0.000000e+00> : vector<8x256xf32>
    %67 = tpu.matmul %64, %66, %cst_66 {dimension_numbers = #tpu.dot_dimension_numbers<[1], [0], [0], [1], [0, 0, 1, 1], [], []>} : vector<8x256xf32>, vector<256x256xf32>, vector<8x256xf32> -> vector<8x256xf32>
    %68 = arith.addf %61, %67 : vector<8x256xf32>
    %c8 = arith.constant 8 : index
    %c0_67 = arith.constant 0 : index
    %c0_68 = arith.constant 0 : index
    %69 = vector.load %arg5[%c8, %c0_67, %c0_68] : memref<9x8x8xf32, #tpu.memory_space<vmem>>, vector<1x8x8xf32>
    %70 = vector.shape_cast %69 : vector<1x8x8xf32> to vector<8x8xf32>
    %cst_69 = arith.constant dense<0.000000e+00> : vector<8x256xf32>
    %71 = tpu.matmul %70, %11, %cst_69 {dimension_numbers = #tpu.dot_dimension_numbers<[1], [0], [0], [1], [0, 0, 1, 1], [], []>} : vector<8x8xf32>, vector<8x256xf32>, vector<8x256xf32> -> vector<8x256xf32>
    %c8_70 = arith.constant 8 : index
    %c0_71 = arith.constant 0 : index
    %c0_72 = arith.constant 0 : index
    %72 = vector.load %arg11[%c8_70, %c0_71, %c0_72] : memref<9x256x256xf32, #tpu.memory_space<vmem>>, vector<1x256x256xf32>
    %73 = vector.shape_cast %72 : vector<1x256x256xf32> to vector<256x256xf32>
    %cst_73 = arith.constant dense<0.000000e+00> : vector<8x256xf32>
    %74 = tpu.matmul %71, %73, %cst_73 {dimension_numbers = #tpu.dot_dimension_numbers<[1], [0], [0], [1], [0, 0, 1, 1], [], []>} : vector<8x256xf32>, vector<256x256xf32>, vector<8x256xf32> -> vector<8x256xf32>
    %75 = arith.addf %68, %74 : vector<8x256xf32>
    %c0_74 = arith.constant 0 : index
    %c0_75 = arith.constant 0 : index
    %76 = vector.load %arg6[%c0_74, %c0_75] : memref<8x1xf32, #tpu.memory_space<vmem>>, vector<8x1xf32>
    %77 = vector.broadcast %76 : vector<8x1xf32> to vector<8x256xf32>
    %78 = arith.mulf %75, %77 : vector<8x256xf32>
    %c0_76 = arith.constant 0 : index
    %c0_77 = arith.constant 0 : index
    %79 = vector.load %arg7[%c0_76, %c0_77] : memref<8x1xf32, #tpu.memory_space<vmem>>, vector<8x1xf32>
    %80 = vector.broadcast %79 : vector<8x1xf32> to vector<8x256xf32>
    %81 = arith.addf %78, %80 : vector<8x256xf32>
    %cst_78 = arith.constant 0.000000e+00 : f32
    %82 = vector.broadcast %cst_78 : f32 to vector<8x256xf32>
    %83 = arith.maximumf %81, %82 : vector<8x256xf32>
    %c0_79 = arith.constant 0 : index
    %c0_80 = arith.constant 0 : index
    %84 = vector.load %arg8[%c0_79, %c0_80] : memref<32x8xf32, #tpu.memory_space<vmem>>, vector<32x8xf32>
    %cst_81 = arith.constant dense<0.000000e+00> : vector<32x256xf32>
    %85 = tpu.matmul %84, %83, %cst_81 {dimension_numbers = #tpu.dot_dimension_numbers<[1], [0], [0], [1], [0, 0, 1, 1], [], []>} : vector<32x8xf32>, vector<8x256xf32>, vector<32x256xf32> -> vector<32x256xf32>
    %c0_82 = arith.constant 0 : index
    %c0_83 = arith.constant 0 : index
    %86 = vector.load %arg9[%c0_82, %c0_83] : memref<32x1xf32, #tpu.memory_space<vmem>>, vector<32x1xf32>
    %87 = vector.broadcast %86 : vector<32x1xf32> to vector<32x256xf32>
    %88 = arith.mulf %85, %87 : vector<32x256xf32>
    %c0_84 = arith.constant 0 : index
    %c0_85 = arith.constant 0 : index
    %89 = vector.load %arg10[%c0_84, %c0_85] : memref<32x1xf32, #tpu.memory_space<vmem>>, vector<32x1xf32>
    %90 = vector.broadcast %89 : vector<32x1xf32> to vector<32x256xf32>
    %91 = arith.addf %88, %90 : vector<32x256xf32>
    %92 = arith.addf %91, %1 : vector<32x256xf32>
    %cst_86 = arith.constant 0.000000e+00 : f32
    %93 = vector.broadcast %cst_86 : f32 to vector<32x256xf32>
    %94 = arith.maximumf %92, %93 : vector<32x256xf32>
    %c0_87 = arith.constant 0 : index
    %c0_88 = arith.constant 0 : index
    %c0_89 = arith.constant 0 : index
    %95 = vector.load %arg12[%c0_87, %c0_88, %c0_89] : memref<1x32x256xf32, #tpu.memory_space<vmem>>, vector<1x32x256xf32>
    %96 = vector.shape_cast %95 : vector<1x32x256xf32> to vector<32x256xf32>
    %97 = vector.shape_cast %94 : vector<32x256xf32> to vector<1x32x256xf32>
    tpu.vector_store %arg12[%c0_87, %c0_88, %c0_89], %97 {strides = array<i32>} : memref<1x32x256xf32, #tpu.memory_space<vmem>>, vector<1x32x256xf32>,
    return
  }
  func.func @transform_0(%arg0: i32) -> (i32, i32, i32) {
    %c0_i32 = arith.constant 0 : i32
    %c0_i32_0 = arith.constant 0 : i32
    %c0_i32_1 = arith.constant 0 : i32
    return %arg0, %c0_i32, %c0_i32_0 : i32, i32, i32
  }
  func.func @transform_1(%arg0: i32) -> (i32, i32) {
    %c0_i32 = arith.constant 0 : i32
    %c0_i32_0 = arith.constant 0 : i32
    %c0_i32_1 = arith.constant 0 : i32
    return %c0_i32, %c0_i32_0 : i32, i32
  }
  func.func @transform_2(%arg0: i32) -> (i32, i32) {
    %c0_i32 = arith.constant 0 : i32
    %c0_i32_0 = arith.constant 0 : i32
    %c0_i32_1 = arith.constant 0 : i32
    return %c0_i32, %c0_i32_0 : i32, i32
  }
  func.func @transform_3(%arg0: i32) -> (i32, i32) {
    %c0_i32 = arith.constant 0 : i32
    %c0_i32_0 = arith.constant 0 : i32
    %c0_i32_1 = arith.constant 0 : i32
    return %c0_i32, %c0_i32_0 : i32, i32
  }
  func.func @transform_4(%arg0: i32) -> (i32, i32, i32) {
    %c0_i32 = arith.constant 0 : i32
    %c0_i32_0 = arith.constant 0 : i32
    %c0_i32_1 = arith.constant 0 : i32
    %c0_i32_2 = arith.constant 0 : i32
    return %c0_i32, %c0_i32_0, %c0_i32_1 : i32, i32, i32
  }
  func.func @transform_5(%arg0: i32) -> (i32, i32) {
    %c0_i32 = arith.constant 0 : i32
    %c0_i32_0 = arith.constant 0 : i32
    %c0_i32_1 = arith.constant 0 : i32
    return %c0_i32, %c0_i32_0 : i32, i32
  }
  func.func @transform_6(%arg0: i32) -> (i32, i32) {
    %c0_i32 = arith.constant 0 : i32
    %c0_i32_0 = arith.constant 0 : i32
    %c0_i32_1 = arith.constant 0 : i32
    return %c0_i32, %c0_i32_0 : i32, i32
  }
  func.func @transform_7(%arg0: i32) -> (i32, i32) {
    %c0_i32 = arith.constant 0 : i32
    %c0_i32_0 = arith.constant 0 : i32
    %c0_i32_1 = arith.constant 0 : i32
    return %c0_i32, %c0_i32_0 : i32, i32
  }
  func.func @transform_8(%arg0: i32) -> (i32, i32) {
    %c0_i32 = arith.constant 0 : i32
    %c0_i32_0 = arith.constant 0 : i32
    %c0_i32_1 = arith.constant 0 : i32
    return %c0_i32, %c0_i32_0 : i32, i32
  }
  func.func @transform_9(%arg0: i32) -> (i32, i32) {
    %c0_i32 = arith.constant 0 : i32
    %c0_i32_0 = arith.constant 0 : i32
    %c0_i32_1 = arith.constant 0 : i32
    return %c0_i32, %c0_i32_0 : i32, i32
  }
  func.func @transform_10(%arg0: i32) -> (i32, i32, i32) {
    %c0_i32 = arith.constant 0 : i32
    %c0_i32_0 = arith.constant 0 : i32
    %c0_i32_1 = arith.constant 0 : i32
    %c0_i32_2 = arith.constant 0 : i32
    return %c0_i32, %c0_i32_0, %c0_i32_1 : i32, i32, i32
  }
  func.func @transform_11(%arg0: i32) -> (i32, i32, i32) {
    %c0_i32 = arith.constant 0 : i32
    %c0_i32_0 = arith.constant 0 : i32
    %c0_i32_1 = arith.constant 0 : i32
    return %arg0, %c0_i32, %c0_i32_0 : i32, i32, i32
  }
}

</mosaic_0001>

<llo_original>
// kernel: tpu_custom_call.1
$region0: #{tpu_custom_call.1}
  #allocation0 [shape = 'u32[]', space=smem, size = 0x4, offset = 0x4, fixed_abs, tag = 'smem constant byte address 0x4 - core index']
  #allocation1 [shape = 'u32[144,128]{1,0:T(1,128)}', space=vmem, size = 0x12000, scoped, tag = 'internal scratch']
  %s0 = inlined_call_operand.hbm [shape: f32[2,32,256], index: 0, kind: input, shape index: {}]
  %s1 = inlined_call_operand.hbm [shape: f32[8,32], index: 1, kind: input, shape index: {}]
  %s2 = inlined_call_operand.vmem [shape: f32[8,1], index: 2, kind: input, shape index: {}]
  %s3 = inlined_call_operand.vmem [shape: f32[8,1], index: 3, kind: input, shape index: {}]
  %s4 = inlined_call_operand.vmem [shape: f32[9,8,8], index: 4, kind: input, shape index: {}]
  %s5 = inlined_call_operand.vmem [shape: f32[8,1], index: 5, kind: input, shape index: {}]
  %s6 = inlined_call_operand.vmem [shape: f32[8,1], index: 6, kind: input, shape index: {}]
  %s7 = inlined_call_operand.vmem [shape: f32[32,8], index: 7, kind: input, shape index: {}]
  %s8 = inlined_call_operand.vmem [shape: f32[32,1], index: 8, kind: input, shape index: {}]
  %s9 = inlined_call_operand.vmem [shape: f32[32,1], index: 9, kind: input, shape index: {}]
  %s10 = inlined_call_operand.hbm [shape: f32[9,256,256], index: 10, kind: input, shape index: {}]
  %s11 = inlined_call_operand.hbm [shape: f32[2,32,256], index: 11, kind: output, shape index: {}]
  %s12 = sld [smem:[#allocation0]]
  $region89: #{tpu_custom_call.1} parent=0
    _
  %s14 = ssub.s32 1, %s12
  %s15 = scalar_select 0, %s14, %s12
  $region1: #{tpu_custom_call.1} parent=0
    #allocation2 [shape = 'u8[65536]{0}', space=vmem, size = 0x10000, scoped, tag = 'input window, operand 0']
    #allocation3 [shape = 's32[2]{0}', space=sflag, size = 0x8, scoped, tag = 'scoped memory for tpu_custom_call.1']
    #allocation4 [shape = 's32[2]{0}', space=sflag, size = 0x8, scoped, tag = 'scoped memory for tpu_custom_call.1']
    #allocation5 [shape = 'u8[4096]{0}', space=vmem, size = 0x1000, scoped, tag = 'input window, operand 1, single buffered']
    #allocation6 [shape = 's32[1]{0}', space=sflag, size = 0x4, scoped, tag = 'scoped memory for tpu_custom_call.1']
    #allocation7 [shape = 'u8[2359296]{0}', space=vmem, size = 0x240000, scoped, tag = 'input window, operand 10, single buffered']
    #allocation8 [shape = 'u8[65536]{0}', space=vmem, size = 0x10000, scoped, tag = 'output window, operand 0']
    %16 = vsyncpa [#allocation3], 0
    %s17 = scalar_lea.sflag [#allocation3], 1
    %18 = vsyncpa %s17, 0
    %19 = vsyncpa [#allocation6], 0
    %20 = vsyncpa [#allocation4], 0
    %s21 = scalar_lea.sflag [#allocation4], 1
    %22 = vsyncpa %s21, 0
    loop: start=0, step=1, limit=4
    $region2: #{tpu_custom_call.1} parent=1 // loop_pre_header
      _
    $region3: #{tpu_custom_call.1} parent=1 // loop_header
      %s24 = sphi 0, %s28
      %p25 = scmp.ge.s32.totalorder %s24, 4
      %s34 = sphi 0, %s36
      %s37 = sphi 0, %s34
      %s38 = sphi 0, %s37
      %s54 = sphi 0, %s38
      %s58 = sphi 0, %s58
      %s60 = sphi 0, %s58
      %s61 = sphi 0, %s60
      %s75 = sphi 0, %s61
      %s79 = sphi 0, %s79
      %s81 = sphi 0, %s79
      %s82 = sphi 0, %s81
      %s96 = sphi 0, %s82
      %s100 = sphi 0, %s100
      %s102 = sphi 0, %s100
      %s103 = sphi 0, %s102
      %s117 = sphi 0, %s103
      %s121 = sphi 0, %s121
      %s123 = sphi 0, %s121
      %s124 = sphi 0, %s123
      %s138 = sphi 0, %s124
      %s142 = sphi 0, %s142
      %s144 = sphi 0, %s142
      %s145 = sphi 0, %s144
      %s159 = sphi 0, %s145
      %s163 = sphi 0, %s163
      %s165 = sphi 0, %s163
      %s166 = sphi 0, %s165
      %s180 = sphi 0, %s166
      %s184 = sphi 0, %s184
      %s186 = sphi 0, %s184
      %s187 = sphi 0, %s186
      %s201 = sphi 0, %s187
      %s205 = sphi 0, %s205
      %s207 = sphi 0, %s205
      %s208 = sphi 0, %s207
      %s222 = sphi 0, %s208
      %s226 = sphi 0, %s226
      %s228 = sphi 0, %s226
      %s229 = sphi 0, %s228
      %s243 = sphi 0, %s229
      %s247 = sphi 0, %s247
      %s249 = sphi 0, %s247
      %s250 = sphi 0, %s249
      %s264 = sphi 0, %s250
      %s270 = sphi 0, %s272
      %s273 = sphi 0, %s270
      %s274 = sphi 0, %s273
      %s290 = sphi 0, %s274
    $region4: #{tpu_custom_call.1} parent=1 // loop_header_branch
      %27 = sbr.rel (%p25) target = $region8
    $region5: #{tpu_custom_call.1} parent=1 // loop_body
      %s29 = ssub.s32 %s24, 1
      %s30 = ssub.s32 %s24, 2
      %s31 = sadd.s32 %s24, 1
      %s32 = ssub.s32 %s24, %s31
      %p33 = scmp.eq.s32.totalorder %s32, 0
      %s35 = sadd.s32 %s34, 1
      %s36 = scalar_select %p33, %s34, %s35
      %p39 = pneg %p33
      %p40 = scmp.eq.s32.totalorder %s24, 1
      %p41 = por %p39, %p40
      %p42 = scmp.ne.s32.totalorder %s34, %s37
      %p43 = scmp.eq.s32.totalorder %s24, 0
      %p44 = por %p42, %p43
      %p45 = scmp.ne.s32.totalorder %s34, %s37
      %p46 = scmp.eq.s32.totalorder %s29, 1
      %p47 = por %p45, %p46
      %p48 = scmp.ne.s32.totalorder %s37, %s38
      %p49 = scmp.eq.s32.totalorder %s29, 0
      %p50 = por %p48, %p49
      %p51 = scmp.ne.s32.totalorder %s37, %s38
      %p52 = scmp.eq.s32.totalorder %s30, 1
      %p53 = por %p51, %p52
      %p55 = scmp.ne.s32.totalorder %s38, %s54
      %p56 = scmp.eq.s32.totalorder %s30, 0
      %p57 = por %p55, %p56
      %s59 = sadd.s32 %s58, 1
      %p62 = scmp.eq.s32.totalorder %s24, 1
      %p63 = scmp.ne.s32.totalorder %s58, %s60
      %p64 = scmp.eq.s32.totalorder %s24, 0
      %p65 = por %p63, %p64
      %p66 = scmp.ne.s32.totalorder %s58, %s60
      %p67 = scmp.eq.s32.totalorder %s29, 1
      %p68 = por %p66, %p67
      %p69 = scmp.ne.s32.totalorder %s60, %s61
      %p70 = scmp.eq.s32.totalorder %s29, 0
      %p71 = por %p69, %p70
      %p72 = scmp.ne.s32.totalorder %s60, %s61
      %p73 = scmp.eq.s32.totalorder %s30, 1
      %p74 = por %p72, %p73
      %p76 = scmp.ne.s32.totalorder %s61, %s75
      %p77 = scmp.eq.s32.totalorder %s30, 0
      %p78 = por %p76, %p77
      %s80 = sadd.s32 %s79, 1
      %p83 = scmp.eq.s32.totalorder %s24, 1
      %p84 = scmp.ne.s32.totalorder %s79, %s81
      %p85 = scmp.eq.s32.totalorder %s24, 0
      %p86 = por %p84, %p85
      %p87 = scmp.ne.s32.totalorder %s79, %s81
      %p88 = scmp.eq.s32.totalorder %s29, 1
      %p89 = por %p87, %p88
      %p90 = scmp.ne.s32.totalorder %s81, %s82
      %p91 = scmp.eq.s32.totalorder %s29, 0
      %p92 = por %p90, %p91
      %p93 = scmp.ne.s32.totalorder %s81, %s82
      %p94 = scmp.eq.s32.totalorder %s30, 1
      %p95 = por %p93, %p94
      %p97 = scmp.ne.s32.totalorder %s82, %s96
      %p98 = scmp.eq.s32.totalorder %s30, 0
      %p99 = por %p97, %p98
      %s101 = sadd.s32 %s100, 1
      %p104 = scmp.eq.s32.totalorder %s24, 1
      %p105 = scmp.ne.s32.totalorder %s100, %s102
      %p106 = scmp.eq.s32.totalorder %s24, 0
      %p107 = por %p105, %p106
      %p108 = scmp.ne.s32.totalorder %s100, %s102
      %p109 = scmp.eq.s32.totalorder %s29, 1
      %p110 = por %p108, %p109
      %p111 = scmp.ne.s32.totalorder %s102, %s103
      %p112 = scmp.eq.s32.totalorder %s29, 0
      %p113 = por %p111, %p112
      %p114 = scmp.ne.s32.totalorder %s102, %s103
      %p115 = scmp.eq.s32.totalorder %s30, 1
      %p116 = por %p114, %p115
      %p118 = scmp.ne.s32.totalorder %s103, %s117
      %p119 = scmp.eq.s32.totalorder %s30, 0
      %p120 = por %p118, %p119
      %s122 = sadd.s32 %s121, 1
      %p125 = scmp.eq.s32.totalorder %s24, 1
      %p126 = scmp.ne.s32.totalorder %s121, %s123
      %p127 = scmp.eq.s32.totalorder %s24, 0
      %p128 = por %p126, %p127
      %p129 = scmp.ne.s32.totalorder %s121, %s123
      %p130 = scmp.eq.s32.totalorder %s29, 1
      %p131 = por %p129, %p130
      %p132 = scmp.ne.s32.totalorder %s123, %s124
      %p133 = scmp.eq.s32.totalorder %s29, 0
      %p134 = por %p132, %p133
      %p135 = scmp.ne.s32.totalorder %s123, %s124
      %p136 = scmp.eq.s32.totalorder %s30, 1
      %p137 = por %p135, %p136
      %p139 = scmp.ne.s32.totalorder %s124, %s138
      %p140 = scmp.eq.s32.totalorder %s30, 0
      %p141 = por %p139, %p140
      %s143 = sadd.s32 %s142, 1
      %p146 = scmp.eq.s32.totalorder %s24, 1
      %p147 = scmp.ne.s32.totalorder %s142, %s144
      %p148 = scmp.eq.s32.totalorder %s24, 0
      %p149 = por %p147, %p148
      %p150 = scmp.ne.s32.totalorder %s142, %s144
      %p151 = scmp.eq.s32.totalorder %s29, 1
      %p152 = por %p150, %p151
      %p153 = scmp.ne.s32.totalorder %s144, %s145
      %p154 = scmp.eq.s32.totalorder %s29, 0
      %p155 = por %p153, %p154
      %p156 = scmp.ne.s32.totalorder %s144, %s145
      %p157 = scmp.eq.s32.totalorder %s30, 1
      %p158 = por %p156, %p157
      %p160 = scmp.ne.s32.totalorder %s145, %s159
      %p161 = scmp.eq.s32.totalorder %s30, 0
      %p162 = por %p160, %p161
      %s164 = sadd.s32 %s163, 1
      %p167 = scmp.eq.s32.totalorder %s24, 1
      %p168 = scmp.ne.s32.totalorder %s163, %s165
      %p169 = scmp.eq.s32.totalorder %s24, 0
      %p170 = por %p168, %p169
      %p171 = scmp.ne.s32.totalorder %s163, %s165
      %p172 = scmp.eq.s32.totalorder %s29, 1
      %p173 = por %p171, %p172
      %p174 = scmp.ne.s32.totalorder %s165, %s166
      %p175 = scmp.eq.s32.totalorder %s29, 0
      %p176 = por %p174, %p175
      %p177 = scmp.ne.s32.totalorder %s165, %s166
      %p178 = scmp.eq.s32.totalorder %s30, 1
      %p179 = por %p177, %p178
      %p181 = scmp.ne.s32.totalorder %s166, %s180
      %p182 = scmp.eq.s32.totalorder %s30, 0
      %p183 = por %p181, %p182
      %s185 = sadd.s32 %s184, 1
      %p188 = scmp.eq.s32.totalorder %s24, 1
      %p189 = scmp.ne.s32.totalorder %s184, %s186
      %p190 = scmp.eq.s32.totalorder %s24, 0
      %p191 = por %p189, %p190
      %p192 = scmp.ne.s32.totalorder %s184, %s186
      %p193 = scmp.eq.s32.totalorder %s29, 1
      %p194 = por %p192, %p193
      %p195 = scmp.ne.s32.totalorder %s186, %s187
      %p196 = scmp.eq.s32.totalorder %s29, 0
      %p197 = por %p195, %p196
      %p198 = scmp.ne.s32.totalorder %s186, %s187
      %p199 = scmp.eq.s32.totalorder %s30, 1
      %p200 = por %p198, %p199
      %p202 = scmp.ne.s32.totalorder %s187, %s201
      %p203 = scmp.eq.s32.totalorder %s30, 0
      %p204 = por %p202, %p203
      %s206 = sadd.s32 %s205, 1
      %p209 = scmp.eq.s32.totalorder %s24, 1
      %p210 = scmp.ne.s32.totalorder %s205, %s207
      %p211 = scmp.eq.s32.totalorder %s24, 0
      %p212 = por %p210, %p211
      %p213 = scmp.ne.s32.totalorder %s205, %s207
      %p214 = scmp.eq.s32.totalorder %s29, 1
      %p215 = por %p213, %p214
      %p216 = scmp.ne.s32.totalorder %s207, %s208
      %p217 = scmp.eq.s32.totalorder %s29, 0
      %p218 = por %p216, %p217
      %p219 = scmp.ne.s32.totalorder %s207, %s208
      %p220 = scmp.eq.s32.totalorder %s30, 1
      %p221 = por %p219, %p220
      %p223 = scmp.ne.s32.totalorder %s208, %s222
      %p224 = scmp.eq.s32.totalorder %s30, 0
      %p225 = por %p223, %p224
      %s227 = sadd.s32 %s226, 1
      %p230 = scmp.eq.s32.totalorder %s24, 1
      %p231 = scmp.ne.s32.totalorder %s226, %s228
      %p232 = scmp.eq.s32.totalorder %s24, 0
      %p233 = por %p231, %p232
      %p234 = scmp.ne.s32.totalorder %s226, %s228
      %p235 = scmp.eq.s32.totalorder %s29, 1
      %p236 = por %p234, %p235
      %p237 = scmp.ne.s32.totalorder %s228, %s229
      %p238 = scmp.eq.s32.totalorder %s29, 0
      %p239 = por %p237, %p238
      %p240 = scmp.ne.s32.totalorder %s228, %s229
      %p241 = scmp.eq.s32.totalorder %s30, 1
      %p242 = por %p240, %p241
      %p244 = scmp.ne.s32.totalorder %s229, %s243
      %p245 = scmp.eq.s32.totalorder %s30, 0
      %p246 = por %p244, %p245
      %s248 = sadd.s32 %s247, 1
      %p251 = scmp.eq.s32.totalorder %s24, 1
      %p252 = scmp.ne.s32.totalorder %s247, %s249
      %p253 = scmp.eq.s32.totalorder %s24, 0
      %p254 = por %p252, %p253
      %p255 = scmp.ne.s32.totalorder %s247, %s249
      %p256 = scmp.eq.s32.totalorder %s29, 1
      %p257 = por %p255, %p256
      %p258 = scmp.ne.s32.totalorder %s249, %s250
      %p259 = scmp.eq.s32.totalorder %s29, 0
      %p260 = por %p258, %p259
      %p261 = scmp.ne.s32.totalorder %s249, %s250
      %p262 = scmp.eq.s32.totalorder %s30, 1
      %p263 = por %p261, %p262
      %p265 = scmp.ne.s32.totalorder %s250, %s264
      %p266 = scmp.eq.s32.totalorder %s30, 0
      %p267 = por %p265, %p266
      %s268 = ssub.s32 %s24, %s31
      %p269 = scmp.eq.s32.totalorder %s268, 0
      %s271 = sadd.s32 %s270, 1
      %s272 = scalar_select %p269, %s270, %s271
      %p275 = pneg %p269
      %p276 = scmp.eq.s32.totalorder %s24, 1
      %p277 = por %p275, %p276
      %p278 = scmp.ne.s32.totalorder %s270, %s273
      %p279 = scmp.eq.s32.totalorder %s24, 0
      %p280 = por %p278, %p279
      %p281 = scmp.ne.s32.totalorder %s270, %s273
      %p282 = scmp.eq.s32.totalorder %s29, 1
      %p283 = por %p281, %p282
      %p284 = scmp.ne.s32.totalorder %s273, %s274
      %p285 = scmp.eq.s32.totalorder %s29, 0
      %p286 = por %p284, %p285
      %p287 = scmp.ne.s32.totalorder %s273, %s274
      %p288 = scmp.eq.s32.totalorder %s30, 1
      %p289 = por %p287, %p288
      %p291 = scmp.ne.s32.totalorder %s274, %s290
      %p292 = scmp.eq.s32.totalorder %s30, 0
      %p293 = por %p291, %p292
      %p294 = scmp.le.s32.totalorder 1, %s24
      %p295 = scmp.lt.s32.totalorder %s24, 3
      %p296 = pnand %p294, %p295
      %p297 = pneg %p296
      // Predicated region
      $region9: #{tpu_custom_call.1} parent=5 // pred_check
        _
      $region10: #{tpu_custom_call.1} parent=5 // pred_check_branch
        %299 = sbr.rel (%p296) target = $region12
      $region11: #{tpu_custom_call.1} parent=5 // pred_region
        %s300 = ssub.s32 %s24, 1
        // Predicated region
        $region13: #{tpu_custom_call.1} parent=11 // pred_check
          %p301 = pneg %p71
        $region14: #{tpu_custom_call.1} parent=11 // pred_check_branch
          %303 = sbr.rel (%p301) target = $region16
        $region15: #{tpu_custom_call.1} parent=11 // pred_region
          %s305 = ssub.s32 128, 128
          %306 = vsyncadd [#allocation6], %s305
          %s308 = sshll.u32 [#allocation5], 4
          %s309 = int_to_ptr.vmem [resolvable:$true] %s308
          %311 = dma.hbm_to_vmem [thread:$0]  %s1, 128, %s309, [#allocation6]
        $region16: #{tpu_custom_call.1} parent=11 // pred_fallthru
          _
        // Predicated region
        $region17: #{tpu_custom_call.1} parent=11 // pred_check
          %p312 = pneg %p92
        $region18: #{tpu_custom_call.1} parent=11 // pred_check_branch
          %314 = sbr.rel (%p312) target = $region20
        $region19: #{tpu_custom_call.1} parent=11 // pred_region
          _
        $region20: #{tpu_custom_call.1} parent=11 // pred_fallthru
          _
        // Predicated region
        $region21: #{tpu_custom_call.1} parent=11 // pred_check
          %p315 = pneg %p113
        $region22: #{tpu_custom_call.1} parent=11 // pred_check_branch
          %317 = sbr.rel (%p315) target = $region24
        $region23: #{tpu_custom_call.1} parent=11 // pred_region
          _
        $region24: #{tpu_custom_call.1} parent=11 // pred_fallthru
          _
        // Predicated region
        $region25: #{tpu_custom_call.1} parent=11 // pred_check
          %p318 = pneg %p134
        $region26: #{tpu_custom_call.1} parent=11 // pred_check_branch
          %320 = sbr.rel (%p318) target = $region28
        $region27: #{tpu_custom_call.1} parent=11 // pred_region
          _
        $region28: #{tpu_custom_call.1} parent=11 // pred_fallthru
          _
        // Predicated region
        $region29: #{tpu_custom_call.1} parent=11 // pred_check
          %p321 = pneg %p155
        $region30: #{tpu_custom_call.1} parent=11 // pred_check_branch
          %323 = sbr.rel (%p321) target = $region32
        $region31: #{tpu_custom_call.1} parent=11 // pred_region
          _
        $region32: #{tpu_custom_call.1} parent=11 // pred_fallthru
          _
        // Predicated region
        $region33: #{tpu_custom_call.1} parent=11 // pred_check
          %p324 = pneg %p176
        $region34: #{tpu_custom_call.1} parent=11 // pred_check_branch
          %326 = sbr.rel (%p324) target = $region36
        $region35: #{tpu_custom_call.1} parent=11 // pred_region
          _
        $region36: #{tpu_custom_call.1} parent=11 // pred_fallthru
          _
        // Predicated region
        $region37: #{tpu_custom_call.1} parent=11 // pred_check
          %p327 = pneg %p197
        $region38: #{tpu_custom_call.1} parent=11 // pred_check_branch
          %329 = sbr.rel (%p327) target = $region40
        $region39: #{tpu_custom_call.1} parent=11 // pred_region
          _
        $region40: #{tpu_custom_call.1} parent=11 // pred_fallthru
          _
        // Predicated region
        $region41: #{tpu_custom_call.1} parent=11 // pred_check
          %p330 = pneg %p218
        $region42: #{tpu_custom_call.1} parent=11 // pred_check_branch
          %332 = sbr.rel (%p330) target = $region44
        $region43: #{tpu_custom_call.1} parent=11 // pred_region
          _
        $region44: #{tpu_custom_call.1} parent=11 // pred_fallthru
          _
        // Predicated region
        $region45: #{tpu_custom_call.1} parent=11 // pred_check
          %p333 = pneg %p239
        $region46: #{tpu_custom_call.1} parent=11 // pred_check_branch
          %335 = sbr.rel (%p333) target = $region48
        $region47: #{tpu_custom_call.1} parent=11 // pred_region
          _
        $region48: #{tpu_custom_call.1} parent=11 // pred_fallthru
          _
        // Predicated region
        $region49: #{tpu_custom_call.1} parent=11 // pred_check
          %p336 = pneg %p260
        $region50: #{tpu_custom_call.1} parent=11 // pred_check_branch
          %338 = sbr.rel (%p336) target = $region52
        $region51: #{tpu_custom_call.1} parent=11 // pred_region
          %s340 = ssub.s32 73728, 73728
          %341 = vsyncadd [#allocation6], %s340
          %s342 = sshll.u32 [#allocation7], 4
          %s343 = int_to_ptr.vmem [resolvable:$true] %s342
          %348 = dma.hbm_to_vmem [thread:$0]  %s10, 73728, %s343, [#allocation6], 256, 256, 16
        $region52: #{tpu_custom_call.1} parent=11 // pred_fallthru
          _
      $region12: #{tpu_custom_call.1} parent=5 // pred_fallthru
        _
      %p349 = scmp.lt.s32.totalorder %s24, 2
      // Predicated region
      $region53: #{tpu_custom_call.1} parent=5 // pred_check
        %p350 = pneg %p349
      $region54: #{tpu_custom_call.1} parent=5 // pred_check_branch
        %352 = sbr.rel (%p350) target = $region56
      $region55: #{tpu_custom_call.1} parent=5 // pred_region
        // Predicated region
        $region57: #{tpu_custom_call.1} parent=55 // pred_check
          %p353 = pneg %p44
        $region58: #{tpu_custom_call.1} parent=55 // pred_check_branch
          %355 = sbr.rel (%p353) target = $region60
        $region59: #{tpu_custom_call.1} parent=55 // pred_region
          %s356 = sand.u32 %s34, 1
          %s357 = scalar_lea.sflag [#allocation3], %s356
          %s358 = sand.u32 %s34, 1
          %s359 = smul.addr %s358, 64
          %s360 = scalar_lea.vmem [#allocation2], %s359
          %s362 = ssub.s32 1024, 1024
          %363 = vsyncadd %s357, %s362
          %s364 = smul.addr %s24, 8
          %s365 = smul.addr %s364, 128
          %s366 = scalar_lea.hbm %s0, %s365
          %s367 = sshll.u32 %s360, 4
          %s368 = int_to_ptr.vmem [resolvable:$true] %s367
          %373 = dma.hbm_to_vmem [thread:$0]  %s366, 1024, %s368, %s357, 256, 256, 16
        $region60: #{tpu_custom_call.1} parent=55 // pred_fallthru
          _
      $region56: #{tpu_custom_call.1} parent=5 // pred_fallthru
        _
      %p374 = scmp.le.s32.totalorder 1, %s24
      %p375 = scmp.lt.s32.totalorder %s24, 3
      %p376 = pnand %p374, %p375
      %p377 = pneg %p376
      // Predicated region
      $region61: #{tpu_custom_call.1} parent=5 // pred_check
        _
      $region62: #{tpu_custom_call.1} parent=5 // pred_check_branch
        %379 = sbr.rel (%p376) target = $region64
      $region63: #{tpu_custom_call.1} parent=5 // pred_region
        %s380 = ssub.s32 %s24, 1
        %s381 = sand.u32 %s37, 1
        %s382 = scalar_lea.sflag [#allocation3], %s381
        %s383 = sand.u32 %s37, 1
        %s384 = smul.addr %s383, 64
        %s385 = scalar_lea.vmem [#allocation2], %s384
        // Predicated region
        $region65: #{tpu_custom_call.1} parent=63 // pred_check
          %p386 = pneg %p50
        $region66: #{tpu_custom_call.1} parent=63 // pred_check_branch
          %388 = sbr.rel (%p386) target = $region68
        $region67: #{tpu_custom_call.1} parent=63 // pred_region
          %389 = dma.done %s382, 1024
        $region68: #{tpu_custom_call.1} parent=63 // pred_fallthru
          _
        // Predicated region
        $region69: #{tpu_custom_call.1} parent=63 // pred_check
          %p390 = pneg %p71
        $region70: #{tpu_custom_call.1} parent=63 // pred_check_branch
          %392 = sbr.rel (%p390) target = $region72
        $region71: #{tpu_custom_call.1} parent=63 // pred_region
          %393 = dma.done [#allocation6], 128
        $region72: #{tpu_custom_call.1} parent=63 // pred_fallthru
          _
        // Predicated region
        $region73: #{tpu_custom_call.1} parent=63 // pred_check
          %p394 = pneg %p260
        $region74: #{tpu_custom_call.1} parent=63 // pred_check_branch
          %396 = sbr.rel (%p394) target = $region76
        $region75: #{tpu_custom_call.1} parent=63 // pred_region
          %397 = dma.done [#allocation6], 73728
        $region76: #{tpu_custom_call.1} parent=63 // pred_fallthru
          _
        %s398 = sand.u32 %s37, 1
        %s399 = scalar_lea.sflag [#allocation3], %s398
        %s400 = sand.u32 %s37, 1
        %s401 = smul.addr %s400, 64
        %s402 = scalar_lea.vmem [#allocation2], %s401
        %p403 = pneg %p50
        %p404 = pneg %p47
        %p405 = pneg %p71
        %p406 = pneg %p68
        %p407 = pneg %p92
        %p408 = pneg %p89
        %p409 = pneg %p113
        %p410 = pneg %p110
        %p411 = pneg %p134
        %p412 = pneg %p131
        %p413 = pneg %p155
        %p414 = pneg %p152
        %p415 = pneg %p176
        %p416 = pneg %p173
        %p417 = pneg %p197
        %p418 = pneg %p194
        %p419 = pneg %p218
        %p420 = pneg %p215
        %p421 = pneg %p239
        %p422 = pneg %p236
        %p423 = pneg %p260
        %p424 = pneg %p257
        %p425 = pneg %p286
        %p426 = pneg %p283
        %s427 = sand.u32 %s273, 1
        %s428 = scalar_lea.sflag [#allocation4], %s427
        %s429 = sand.u32 %s273, 1
        %s430 = smul.addr %s429, 64
        %s431 = scalar_lea.vmem [#allocation8], %s430
        %v432 = vld [vmem:[%s385] sm:$0xff]
        %v433 = vld [vmem:[%s385 + $0x8] sm:$0xff]
        %v434 = vld [vmem:[%s385 + $0x10] sm:$0xff]
        %v435 = vld [vmem:[%s385 + $0x18] sm:$0xff]
        %v436 = vld [vmem:[%s385 + $0x20] sm:$0xff]
        %v437 = vld [vmem:[%s385 + $0x28] sm:$0xff]
        %v438 = vld [vmem:[%s385 + $0x30] sm:$0xff]
        %v439 = vld [vmem:[%s385 + $0x38] sm:$0xff]
        %v440 = vld [vmem:[#allocation5] sm:$0xff]
        %vm441 = vcmask 261120
        %v443 = vsel %vm441, %v440, 0
        %445 = vmatprep.subr.mxu0 %v433
        %446 = vmatpush1.msra.mxu0 %v432
        %447 = vmatprep.subr.mxu0 %v435
        %448 = vmatpush1.msra.mxu0 %v434
        %449 = vmatprep.subr.mxu0 %v437
        %450 = vmatpush1.msra.mxu0 %v436
        %451 = vmatprep.subr.mxu0 %v439
        %452 = vmatpush1.msra.mxu0 %v438
        %453 = vmatprep.subr.mxu0 0.0
        %454 = vmatpush1.msra.mxu0 0.0
        %455 = vmatprep.subr.mxu0 0.0
        %456 = vmatpush1.msra.mxu0 0.0
        %457 = vmatprep.subr.mxu0 0.0
        %458 = vmatpush1.msra.mxu0 0.0
        %459 = vmatprep.subr.mxu0 0.0
        %460 = vmatpush1.msra.mxu0 0.0
        %461 = vmatprep.subr.mxu0 0.0
        %462 = vmatpush1.msra.mxu0 0.0
        %463 = vmatprep.subr.mxu0 0.0
        %464 = vmatpush1.msra.mxu0 0.0
        %465 = vmatprep.subr.mxu0 0.0
        %466 = vmatpush1.msra.mxu0 0.0
        %467 = vmatprep.subr.mxu0 0.0
        %468 = vmatpush1.msra.mxu0 0.0
        %469 = vmatprep.subr.mxu0 0.0
        %470 = vmatpush1.msra.mxu0 0.0
        %471 = vmatprep.subr.mxu0 0.0
        %472 = vmatpush1.msra.mxu0 0.0
        %473 = vmatprep.subr.mxu0 0.0
        %474 = vmatpush1.msra.mxu0 0.0
        %475 = vmatprep.subr.mxu0 0.0
        %476 = vmatpush1.msra.mxu0 0.0
        %477 = vmatprep.subr.mxu0 0.0
        %478 = vmatpush1.msra.mxu0 0.0
        %479 = vmatprep.subr.mxu0 0.0
        %480 = vmatpush1.msra.mxu0 0.0
        %481 = vmatprep.subr.mxu0 0.0
        %482 = vmatpush1.msra.mxu0 0.0
        %483 = vmatprep.subr.mxu0 0.0
        %484 = vmatpush1.msra.mxu0 0.0
        %485 = vmatprep.subr.mxu0 0.0
        %486 = vmatpush1.msra.mxu0 0.0
        %487 = vmatprep.subr.mxu0 0.0
        %488 = vmatpush1.msra.mxu0 0.0
        %489 = vmatprep.subr.mxu0 0.0
        %490 = vmatpush1.msra.mxu0 0.0
        %491 = vmatprep.subr.mxu0 0.0
        %492 = vmatpush1.msra.mxu0 0.0
        %493 = vmatprep.subr.mxu0 0.0
        %494 = vmatpush1.msra.mxu0 0.0
        %495 = vmatprep.subr.mxu0 0.0
        %496 = vmatpush1.msra.mxu0 0.0
        %497 = vmatprep.subr.mxu0 0.0
        %498 = vmatpush1.msra.mxu0 0.0
        %499 = vmatprep.subr.mxu0 0.0
        %500 = vmatpush1.msra.mxu0 0.0
        %501 = vmatprep.subr.mxu0 0.0
        %502 = vmatpush1.msra.mxu0 0.0
        %503 = vmatprep.subr.mxu0 0.0
        %504 = vmatpush1.msra.mxu0 0.0
        %505 = vmatprep.subr.mxu0 0.0
        %506 = vmatpush1.msra.mxu0 0.0
        %507 = vmatprep.subr.mxu0 0.0
        %508 = vmatpush1.msra.mxu0 0.0
        %509 = vmatprep.mubr.f32.mxu0 0.0
        %510 = vmatmul.mubr.f32.gmra.mrb[0].mxu0 %v443
        %v511 = vpop.f32.mrb[0].mxu0
        %v512 = vadd.f32 0.0, %v511
        %v513 = vpop.f32.mrb[0].mxu0
        %v514 = vadd.f32 0.0, %v513
        %515 = vdwg.mxu0
        %v516 = vld [vmem:[%s2] sm:$0xff]
        %518 = vset.pattern.permute.xlu0 0
        %519 = vperm.xlu0 %518, %v516
        %v520 = vpop.permute.xlu0 %519
        %v522 = vmul.f32 %v512, %v520
        %v523 = vmul.f32 %v514, %v520
        %v524 = vld [vmem:[%s3] sm:$0xff]
        %526 = vset.pattern.permute.xlu0 0
        %527 = vperm.xlu0 %526, %v524
        %v528 = vpop.permute.xlu0 %527
        %v530 = vadd.f32 %v522, %v528
        %v531 = vadd.f32 %v523, %v528
        %v532 = vmax.f32 %v530, 0.0
        %v533 = vmax.f32 %v531, 0.0
        %v534 = vld [vmem:[%s4] sm:$0xff]
        %vm535 = vcmask 64512
        %v537 = vsel %vm535, %v534, 0
        %539 = vmatprep.subr.mxu0 %v533
        %540 = vmatpush1.msra.mxu0 %v532
        %541 = vmatprep.subr.mxu0 0.0
        %542 = vmatpush1.msra.mxu0 0.0
        %543 = vmatprep.subr.mxu0 0.0
        %544 = vmatpush1.msra.mxu0 0.0
        %545 = vmatprep.subr.mxu0 0.0
        %546 = vmatpush1.msra.mxu0 0.0
        %547 = vmatprep.subr.mxu0 0.0
        %548 = vmatpush1.msra.mxu0 0.0
        %549 = vmatprep.subr.mxu0 0.0
        %550 = vmatpush1.msra.mxu0 0.0
        %551 = vmatprep.subr.mxu0 0.0
        %552 = vmatpush1.msra.mxu0 0.0
        %553 = vmatprep.subr.mxu0 0.0
        %554 = vmatpush1.msra.mxu0 0.0
        %555 = vmatprep.subr.mxu0 0.0
        %556 = vmatpush1.msra.mxu0 0.0
        %557 = vmatprep.subr.mxu0 0.0
        %558 = vmatpush1.msra.mxu0 0.0
        %559 = vmatprep.subr.mxu0 0.0
        %560 = vmatpush1.msra.mxu0 0.0
        %561 = vmatprep.subr.mxu0 0.0
        %562 = vmatpush1.msra.mxu0 0.0
        %563 = vmatprep.subr.mxu0 0.0
        %564 = vmatpush1.msra.mxu0 0.0
        %565 = vmatprep.subr.mxu0 0.0
        %566 = vmatpush1.msra.mxu0 0.0
        %567 = vmatprep.subr.mxu0 0.0
        %568 = vmatpush1.msra.mxu0 0.0
        %569 = vmatprep.subr.mxu0 0.0
        %570 = vmatpush1.msra.mxu0 0.0
        %571 = vmatprep.subr.mxu0 0.0
        %572 = vmatpush1.msra.mxu0 0.0
        %573 = vmatprep.subr.mxu0 0.0
        %574 = vmatpush1.msra.mxu0 0.0
        %575 = vmatprep.subr.mxu0 0.0
        %576 = vmatpush1.msra.mxu0 0.0
        %577 = vmatprep.subr.mxu0 0.0
        %578 = vmatpush1.msra.mxu0 0.0
        %579 = vmatprep.subr.mxu0 0.0
        %580 = vmatpush1.msra.mxu0 0.0
        %581 = vmatprep.subr.mxu0 0.0
        %582 = vmatpush1.msra.mxu0 0.0
        %583 = vmatprep.subr.mxu0 0.0
        %584 = vmatpush1.msra.mxu0 0.0
        %585 = vmatprep.subr.mxu0 0.0
        %586 = vmatpush1.msra.mxu0 0.0
        %587 = vmatprep.subr.mxu0 0.0
        %588 = vmatpush1.msra.mxu0 0.0
        %589 = vmatprep.subr.mxu0 0.0
        %590 = vmatpush1.msra.mxu0 0.0
        %591 = vmatprep.subr.mxu0 0.0
        %592 = vmatpush1.msra.mxu0 0.0
        %593 = vmatprep.subr.mxu0 0.0
        %594 = vmatpush1.msra.mxu0 0.0
        %595 = vmatprep.subr.mxu0 0.0
        %596 = vmatpush1.msra.mxu0 0.0
        %597 = vmatprep.subr.mxu0 0.0
        %598 = vmatpush1.msra.mxu0 0.0
        %599 = vmatprep.subr.mxu0 0.0
        %600 = vmatpush1.msra.mxu0 0.0
        %601 = vmatprep.subr.mxu0 0.0
        %602 = vmatpush1.msra.mxu0 0.0
        %603 = vmatprep.mubr.f32.mxu0 0.0
        %604 = vmatmul.mubr.f32.gmra.mrb[0].mxu0 %v537
        %v605 = vpop.f32.mrb[0].mxu0
        %v606 = vadd.f32 0.0, %v605
        %v607 = vpop.f32.mrb[0].mxu0
        %v608 = vadd.f32 0.0, %v607
        %609 = vdwg.mxu0
        %v610 = vld [vmem:[#allocation7] sm:$0xff]
        %v611 = vld [vmem:[#allocation7 + $0x8] sm:$0xff]
        %v612 = vld [vmem:[#allocation7 + $0x10] sm:$0xff]
        %v613 = vld [vmem:[#allocation7 + $0x18] sm:$0xff]
        %v614 = vld [vmem:[#allocation7 + $0x20] sm:$0xff]
        %v615 = vld [vmem:[#allocation7 + $0x28] sm:$0xff]
        %v616 = vld [vmem:[#allocation7 + $0x30] sm:$0xff]
        %v617 = vld [vmem:[#allocation7 + $0x38] sm:$0xff]
        %v618 = vld [vmem:[#allocation7 + $0x40] sm:$0xff]
        %v619 = vld [vmem:[#allocation7 + $0x48] sm:$0xff]
        %v620 = vld [vmem:[#allocation7 + $0x50] sm:$0xff]
        %v621 = vld [vmem:[#allocation7 + $0x58] sm:$0xff]
        %v622 = vld [vmem:[#allocation7 + $0x60] sm:$0xff]
        %v623 = vld [vmem:[#allocation7 + $0x68] sm:$0xff]
        %v624 = vld [vmem:[#allocation7 + $0x70] sm:$0xff]
        %v625 = vld [vmem:[#allocation7 + $0x78] sm:$0xff]
        %v626 = vld [vmem:[#allocation7 + $0x80] sm:$0xff]
        %v627 = vld [vmem:[#allocation7 + $0x88] sm:$0xff]
        %v628 = vld [vmem:[#allocation7 + $0x90] sm:$0xff]
        %v629 = vld [vmem:[#allocation7 + $0x98] sm:$0xff]
        %v630 = vld [vmem:[#allocation7 + $0xa0] sm:$0xff]
        %v631 = vld [vmem:[#allocation7 + $0xa8] sm:$0xff]
        %v632 = vld [vmem:[#allocation7 + $0xb0] sm:$0xff]
        %v633 = vld [vmem:[#allocation7 + $0xb8] sm:$0xff]
        %v634 = vld [vmem:[#allocation7 + $0xc0] sm:$0xff]
        %v635 = vld [vmem:[#allocation7 + $0xc8] sm:$0xff]
        %v636 = vld [vmem:[#allocation7 + $0xd0] sm:$0xff]
        %v637 = vld [vmem:[#allocation7 + $0xd8] sm:$0xff]
        %v638 = vld [vmem:[#allocation7 + $0xe0] sm:$0xff]
        %v639 = vld [vmem:[#allocation7 + $0xe8] sm:$0xff]
        %v640 = vld [vmem:[#allocation7 + $0xf0] sm:$0xff]
        %v641 = vld [vmem:[#allocation7 + $0xf8] sm:$0xff]
        %v642 = vld [vmem:[#allocation7 + $0x100] sm:$0xff]
        %v643 = vld [vmem:[#allocation7 + $0x108] sm:$0xff]
        %v644 = vld [vmem:[#allocation7 + $0x110] sm:$0xff]
        %v645 = vld [vmem:[#allocation7 + $0x118] sm:$0xff]
        %v646 = vld [vmem:[#allocation7 + $0x120] sm:$0xff]
        %v647 = vld [vmem:[#allocation7 + $0x128] sm:$0xff]
        %v648 = vld [vmem:[#allocation7 + $0x130] sm:$0xff]
        %v649 = vld [vmem:[#allocation7 + $0x138] sm:$0xff]
        %v650 = vld [vmem:[#allocation7 + $0x140] sm:$0xff]
        %v651 = vld [vmem:[#allocation7 + $0x148] sm:$0xff]
        %v652 = vld [vmem:[#allocation7 + $0x150] sm:$0xff]
        %v653 = vld [vmem:[#allocation7 + $0x158] sm:$0xff]
        %v654 = vld [vmem:[#allocation7 + $0x160] sm:$0xff]
        %v655 = vld [vmem:[#allocation7 + $0x168] sm:$0xff]
        %v656 = vld [vmem:[#allocation7 + $0x170] sm:$0xff]
        %v657 = vld [vmem:[#allocation7 + $0x178] sm:$0xff]
        %v658 = vld [vmem:[#allocation7 + $0x180] sm:$0xff]
        %v659 = vld [vmem:[#allocation7 + $0x188] sm:$0xff]
        %v660 = vld [vmem:[#allocation7 + $0x190] sm:$0xff]
        %v661 = vld [vmem:[#allocation7 + $0x198] sm:$0xff]
        %v662 = vld [vmem:[#allocation7 + $0x1a0] sm:$0xff]
        %v663 = vld [vmem:[#allocation7 + $0x1a8] sm:$0xff]
        %v664 = vld [vmem:[#allocation7 + $0x1b0] sm:$0xff]
        %v665 = vld [vmem:[#allocation7 + $0x1b8] sm:$0xff]
        %v666 = vld [vmem:[#allocation7 + $0x1c0] sm:$0xff]
        %v667 = vld [vmem:[#allocation7 + $0x1c8] sm:$0xff]
        %v668 = vld [vmem:[#allocation7 + $0x1d0] sm:$0xff]
        %v669 = vld [vmem:[#allocation7 + $0x1d8] sm:$0xff]
        %v670 = vld [vmem:[#allocation7 + $0x1e0] sm:$0xff]
        %v671 = vld [vmem:[#allocation7 + $0x1e8] sm:$0xff]
        %v672 = vld [vmem:[#allocation7 + $0x1f0] sm:$0xff]
        %v673 = vld [vmem:[#allocation7 + $0x1f8] sm:$0xff]
        %s674 = scalar_lea.vmem %s4, 8
        %v675 = vld [vmem:[%s674] sm:$0xff]
        %v677 = vsel %vm535, %v675, 0
        %679 = vmatprep.subr.mxu0 %v533
        %680 = vmatpush1.msra.mxu0 %v532
        %681 = vmatprep.subr.mxu0 0.0
        %682 = vmatpush1.msra.mxu0 0.0
        %683 = vmatprep.subr.mxu0 0.0
        %684 = vmatpush1.msra.mxu0 0.0
        %685 = vmatprep.subr.mxu0 0.0
        %686 = vmatpush1.msra.mxu0 0.0
        %687 = vmatprep.subr.mxu0 0.0
        %688 = vmatpush1.msra.mxu0 0.0
        %689 = vmatprep.subr.mxu0 0.0
        %690 = vmatpush1.msra.mxu0 0.0
        %691 = vmatprep.subr.mxu0 0.0
        %692 = vmatpush1.msra.mxu0 0.0
        %693 = vmatprep.subr.mxu0 0.0
        %694 = vmatpush1.msra.mxu0 0.0
        %695 = vmatprep.subr.mxu0 0.0
        %696 = vmatpush1.msra.mxu0 0.0
        %697 = vmatprep.subr.mxu0 0.0
        %698 = vmatpush1.msra.mxu0 0.0
        %699 = vmatprep.subr.mxu0 0.0
        %700 = vmatpush1.msra.mxu0 0.0
        %701 = vmatprep.subr.mxu0 0.0
        %702 = vmatpush1.msra.mxu0 0.0
        %703 = vmatprep.subr.mxu0 0.0
        %704 = vmatpush1.msra.mxu0 0.0
        %705 = vmatprep.subr.mxu0 0.0
        %706 = vmatpush1.msra.mxu0 0.0
        %707 = vmatprep.subr.mxu0 0.0
        %708 = vmatpush1.msra.mxu0 0.0
        %709 = vmatprep.subr.mxu0 0.0
        %710 = vmatpush1.msra.mxu0 0.0
        %711 = vmatprep.subr.mxu0 0.0
        %712 = vmatpush1.msra.mxu0 0.0
        %713 = vmatprep.subr.mxu0 0.0
        %714 = vmatpush1.msra.mxu0 0.0
        %715 = vmatprep.subr.mxu0 0.0
        %716 = vmatpush1.msra.mxu0 0.0
        %717 = vmatprep.subr.mxu0 0.0
        %718 = vmatpush1.msra.mxu0 0.0
        %719 = vmatprep.subr.mxu0 0.0
        %720 = vmatpush1.msra.mxu0 0.0
        %721 = vmatprep.subr.mxu0 0.0
        %722 = vmatpush1.msra.mxu0 0.0
        %723 = vmatprep.subr.mxu0 0.0
        %724 = vmatpush1.msra.mxu0 0.0
        %725 = vmatprep.subr.mxu0 0.0
        %726 = vmatpush1.msra.mxu0 0.0
        %727 = vmatprep.subr.mxu0 0.0
        %728 = vmatpush1.msra.mxu0 0.0
        %729 = vmatprep.subr.mxu0 0.0
        %730 = vmatpush1.msra.mxu0 0.0
        %731 = vmatprep.subr.mxu0 0.0
        %732 = vmatpush1.msra.mxu0 0.0
        %733 = vmatprep.subr.mxu0 0.0
        %734 = vmatpush1.msra.mxu0 0.0
        %735 = vmatprep.subr.mxu0 0.0
        %736 = vmatpush1.msra.mxu0 0.0
        %737 = vmatprep.subr.mxu0 0.0
        %738 = vmatpush1.msra.mxu0 0.0
        %739 = vmatprep.subr.mxu0 0.0
        %740 = vmatpush1.msra.mxu0 0.0
        %741 = vmatprep.subr.mxu0 0.0
        %742 = vmatpush1.msra.mxu0 0.0
        %743 = vmatprep.mubr.f32.mxu0 0.0
        %744 = vmatmul.mubr.f32.gmra.mrb[0].mxu0 %v677
        %v745 = vpop.f32.mrb[0].mxu0
        %v746 = vadd.f32 0.0, %v745
        %v747 = vpop.f32.mrb[0].mxu0
        %v748 = vadd.f32 0.0, %v747
        %749 = vdwg.mxu0
        %s750 = scalar_lea.vmem [#allocation7], 512
        %v751 = vld [vmem:[%s750] sm:$0xff]
        %v752 = vld [vmem:[%s750 + $0x8] sm:$0xff]
        %v753 = vld [vmem:[%s750 + $0x10] sm:$0xff]
        %v754 = vld [vmem:[%s750 + $0x18] sm:$0xff]
        %v755 = vld [vmem:[%s750 + $0x20] sm:$0xff]
        %v756 = vld [vmem:[%s750 + $0x28] sm:$0xff]
        %v757 = vld [vmem:[%s750 + $0x30] sm:$0xff]
        %v758 = vld [vmem:[%s750 + $0x38] sm:$0xff]
        %v759 = vld [vmem:[%s750 + $0x40] sm:$0xff]
        %v760 = vld [vmem:[%s750 + $0x48] sm:$0xff]
        %v761 = vld [vmem:[%s750 + $0x50] sm:$0xff]
        %v762 = vld [vmem:[%s750 + $0x58] sm:$0xff]
        %v763 = vld [vmem:[%s750 + $0x60] sm:$0xff]
        %v764 = vld [vmem:[%s750 + $0x68] sm:$0xff]
        %v765 = vld [vmem:[%s750 + $0x70] sm:$0xff]
        %v766 = vld [vmem:[%s750 + $0x78] sm:$0xff]
        %v767 = vld [vmem:[%s750 + $0x80] sm:$0xff]
        %v768 = vld [vmem:[%s750 + $0x88] sm:$0xff]
        %v769 = vld [vmem:[%s750 + $0x90] sm:$0xff]
        %v770 = vld [vmem:[%s750 + $0x98] sm:$0xff]
        %v771 = vld [vmem:[%s750 + $0xa0] sm:$0xff]
        %v772 = vld [vmem:[%s750 + $0xa8] sm:$0xff]
        %v773 = vld [vmem:[%s750 + $0xb0] sm:$0xff]
        %v774 = vld [vmem:[%s750 + $0xb8] sm:$0xff]
        %v775 = vld [vmem:[%s750 + $0xc0] sm:$0xff]
        %v776 = vld [vmem:[%s750 + $0xc8] sm:$0xff]
        %v777 = vld [vmem:[%s750 + $0xd0] sm:$0xff]
        %v778 = vld [vmem:[%s750 + $0xd8] sm:$0xff]
        %v779 = vld [vmem:[%s750 + $0xe0] sm:$0xff]
        %v780 = vld [vmem:[%s750 + $0xe8] sm:$0xff]
        %v781 = vld [vmem:[%s750 + $0xf0] sm:$0xff]
        %v782 = vld [vmem:[%s750 + $0xf8] sm:$0xff]
        %v783 = vld [vmem:[%s750 + $0x100] sm:$0xff]
        %v784 = vld [vmem:[%s750 + $0x108] sm:$0xff]
        %v785 = vld [vmem:[%s750 + $0x110] sm:$0xff]
        %v786 = vld [vmem:[%s750 + $0x118] sm:$0xff]
        %v787 = vld [vmem:[%s750 + $0x120] sm:$0xff]
        %v788 = vld [vmem:[%s750 + $0x128] sm:$0xff]
        %v789 = vld [vmem:[%s750 + $0x130] sm:$0xff]
        %v790 = vld [vmem:[%s750 + $0x138] sm:$0xff]
        %v791 = vld [vmem:[%s750 + $0x140] sm:$0xff]
        %v792 = vld [vmem:[%s750 + $0x148] sm:$0xff]
        %v793 = vld [vmem:[%s750 + $0x150] sm:$0xff]
        %v794 = vld [vmem:[%s750 + $0x158] sm:$0xff]
        %v795 = vld [vmem:[%s750 + $0x160] sm:$0xff]
        %v796 = vld [vmem:[%s750 + $0x168] sm:$0xff]
        %v797 = vld [vmem:[%s750 + $0x170] sm:$0xff]
        %v798 = vld [vmem:[%s750 + $0x178] sm:$0xff]
        %v799 = vld [vmem:[%s750 + $0x180] sm:$0xff]
        %v800 = vld [vmem:[%s750 + $0x188] sm:$0xff]
        %v801 = vld [vmem:[%s750 + $0x190] sm:$0xff]
        %v802 = vld [vmem:[%s750 + $0x198] sm:$0xff]
        %v803 = vld [vmem:[%s750 + $0x1a0] sm:$0xff]
        %v804 = vld [vmem:[%s750 + $0x1a8] sm:$0xff]
        %v805 = vld [vmem:[%s750 + $0x1b0] sm:$0xff]
        %v806 = vld [vmem:[%s750 + $0x1b8] sm:$0xff]
        %v807 = vld [vmem:[%s750 + $0x1c0] sm:$0xff]
        %v808 = vld [vmem:[%s750 + $0x1c8] sm:$0xff]
        %v809 = vld [vmem:[%s750 + $0x1d0] sm:$0xff]
        %v810 = vld [vmem:[%s750 + $0x1d8] sm:$0xff]
        %v811 = vld [vmem:[%s750 + $0x1e0] sm:$0xff]
        %v812 = vld [vmem:[%s750 + $0x1e8] sm:$0xff]
        %v813 = vld [vmem:[%s750 + $0x1f0] sm:$0xff]
        %v814 = vld [vmem:[%s750 + $0x1f8] sm:$0xff]
        %815 = vmatprep.subr.mxu0 %v752
        %816 = vmatpush1.msra.mxu0 %v751
        %817 = vmatprep.subr.mxu0 %v754
        %818 = vmatpush1.msra.mxu0 %v753
        %819 = vmatprep.subr.mxu0 %v756
        %820 = vmatpush1.msra.mxu0 %v755
        %821 = vmatprep.subr.mxu0 %v758
        %822 = vmatpush1.msra.mxu0 %v757
        %823 = vmatprep.subr.mxu0 %v760
        %824 = vmatpush1.msra.mxu0 %v759
        %825 = vmatprep.subr.mxu0 %v762
        %826 = vmatpush1.msra.mxu0 %v761
        %827 = vmatprep.subr.mxu0 %v764
        %828 = vmatpush1.msra.mxu0 %v763
        %829 = vmatprep.subr.mxu0 %v766
        %830 = vmatpush1.msra.mxu0 %v765
        %831 = vmatprep.subr.mxu0 %v768
        %832 = vmatpush1.msra.mxu0 %v767
        %833 = vmatprep.subr.mxu0 %v770
        %834 = vmatpush1.msra.mxu0 %v769
        %835 = vmatprep.subr.mxu0 %v772
        %836 = vmatpush1.msra.mxu0 %v771
        %837 = vmatprep.subr.mxu0 %v774
        %838 = vmatpush1.msra.mxu0 %v773
        %839 = vmatprep.subr.mxu0 %v776
        %840 = vmatpush1.msra.mxu0 %v775
        %841 = vmatprep.subr.mxu0 %v778
        %842 = vmatpush1.msra.mxu0 %v777
        %843 = vmatprep.subr.mxu0 %v780
        %844 = vmatpush1.msra.mxu0 %v779
        %845 = vmatprep.subr.mxu0 %v782
        %846 = vmatpush1.msra.mxu0 %v781
        %847 = vmatprep.subr.mxu0 %v784
        %848 = vmatpush1.msra.mxu0 %v783
        %849 = vmatprep.subr.mxu0 %v786
        %850 = vmatpush1.msra.mxu0 %v785
        %851 = vmatprep.subr.mxu0 %v788
        %852 = vmatpush1.msra.mxu0 %v787
        %853 = vmatprep.subr.mxu0 %v790
        %854 = vmatpush1.msra.mxu0 %v789
        %855 = vmatprep.subr.mxu0 %v792
        %856 = vmatpush1.msra.mxu0 %v791
        %857 = vmatprep.subr.mxu0 %v794
        %858 = vmatpush1.msra.mxu0 %v793
        %859 = vmatprep.subr.mxu0 %v796
        %860 = vmatpush1.msra.mxu0 %v795
        %861 = vmatprep.subr.mxu0 %v798
        %862 = vmatpush1.msra.mxu0 %v797
        %863 = vmatprep.subr.mxu0 %v800
        %864 = vmatpush1.msra.mxu0 %v799
        %865 = vmatprep.subr.mxu0 %v802
        %866 = vmatpush1.msra.mxu0 %v801
        %867 = vmatprep.subr.mxu0 %v804
        %868 = vmatpush1.msra.mxu0 %v803
        %869 = vmatprep.subr.mxu0 %v806
        %870 = vmatpush1.msra.mxu0 %v805
        %871 = vmatprep.subr.mxu0 %v808
        %872 = vmatpush1.msra.mxu0 %v807
        %873 = vmatprep.subr.mxu0 %v810
        %874 = vmatpush1.msra.mxu0 %v809
        %875 = vmatprep.subr.mxu0 %v812
        %876 = vmatpush1.msra.mxu0 %v811
        %877 = vmatprep.subr.mxu0 %v814
        %878 = vmatpush1.msra.mxu0 %v813
        %879 = vmatprep.mubr.f32.mxu0 %v748
        %880 = vmatmul.mubr.f32.gmra.mrb[0].mxu0 %v746
        %v881 = vpop.f32.mrb[0].mxu0
        %v882 = vadd.f32 0.0, %v881
        %v883 = vpop.f32.mrb[0].mxu0
        %v884 = vadd.f32 0.0, %v883
        %885 = vdwg.mxu0
        %886 = vmatprep.subr.mxu0 %v611
        %887 = vmatpush1.msra.mxu0 %v610
        %888 = vmatprep.subr.mxu0 %v613
        %889 = vmatpush1.msra.mxu0 %v612
        %890 = vmatprep.subr.mxu0 %v615
        %891 = vmatpush1.msra.mxu0 %v614
        %892 = vmatprep.subr.mxu0 %v617
        %893 = vmatpush1.msra.mxu0 %v616
        %894 = vmatprep.subr.mxu0 %v619
        %895 = vmatpush1.msra.mxu0 %v618
        %896 = vmatprep.subr.mxu0 %v621
        %897 = vmatpush1.msra.mxu0 %v620
        %898 = vmatprep.subr.mxu0 %v623
        %899 = vmatpush1.msra.mxu0 %v622
        %900 = vmatprep.subr.mxu0 %v625
        %901 = vmatpush1.msra.mxu0 %v624
        %902 = vmatprep.subr.mxu0 %v627
        %903 = vmatpush1.msra.mxu0 %v626
        %904 = vmatprep.subr.mxu0 %v629
        %905 = vmatpush1.msra.mxu0 %v628
        %906 = vmatprep.subr.mxu0 %v631
        %907 = vmatpush1.msra.mxu0 %v630
        %908 = vmatprep.subr.mxu0 %v633
        %909 = vmatpush1.msra.mxu0 %v632
        %910 = vmatprep.subr.mxu0 %v635
        %911 = vmatpush1.msra.mxu0 %v634
        %912 = vmatprep.subr.mxu0 %v637
        %913 = vmatpush1.msra.mxu0 %v636
        %914 = vmatprep.subr.mxu0 %v639
        %915 = vmatpush1.msra.mxu0 %v638
        %916 = vmatprep.subr.mxu0 %v641
        %917 = vmatpush1.msra.mxu0 %v640
        %918 = vmatprep.subr.mxu0 %v643
        %919 = vmatpush1.msra.mxu0 %v642
        %920 = vmatprep.subr.mxu0 %v645
        %921 = vmatpush1.msra.mxu0 %v644
        %922 = vmatprep.subr.mxu0 %v647
        %923 = vmatpush1.msra.mxu0 %v646
        %924 = vmatprep.subr.mxu0 %v649
        %925 = vmatpush1.msra.mxu0 %v648
        %926 = vmatprep.subr.mxu0 %v651
        %927 = vmatpush1.msra.mxu0 %v650
        %928 = vmatprep.subr.mxu0 %v653
        %929 = vmatpush1.msra.mxu0 %v652
        %930 = vmatprep.subr.mxu0 %v655
        %931 = vmatpush1.msra.mxu0 %v654
        %932 = vmatprep.subr.mxu0 %v657
        %933 = vmatpush1.msra.mxu0 %v656
        %934 = vmatprep.subr.mxu0 %v659
        %935 = vmatpush1.msra.mxu0 %v658
        %936 = vmatprep.subr.mxu0 %v661
        %937 = vmatpush1.msra.mxu0 %v660
        %938 = vmatprep.subr.mxu0 %v663
        %939 = vmatpush1.msra.mxu0 %v662
        %940 = vmatprep.subr.mxu0 %v665
        %941 = vmatpush1.msra.mxu0 %v664
        %942 = vmatprep.subr.mxu0 %v667
        %943 = vmatpush1.msra.mxu0 %v666
        %944 = vmatprep.subr.mxu0 %v669
        %945 = vmatpush1.msra.mxu0 %v668
        %946 = vmatprep.subr.mxu0 %v671
        %947 = vmatpush1.msra.mxu0 %v670
        %948 = vmatprep.subr.mxu0 %v673
        %949 = vmatpush1.msra.mxu0 %v672
        %950 = vmatprep.mubr.f32.mxu0 %v608
        %951 = vmatmul.mubr.f32.gmra.mrb[0].mxu0 %v606
        %v952 = vpop.f32.mrb[0].mxu0
        %v953 = vadd.f32 %v882, %v952
        %v954 = vpop.f32.mrb[0].mxu0
        %v955 = vadd.f32 %v884, %v954
        %956 = vdwg.mxu0
        %s957 = scalar_lea.vmem %s4, 16
        %v958 = vld [vmem:[%s957] sm:$0xff]
        %v960 = vsel %vm535, %v958, 0
        %962 = vmatprep.subr.mxu0 %v533
        %963 = vmatpush1.msra.mxu0 %v532
        %964 = vmatprep.subr.mxu0 0.0
        %965 = vmatpush1.msra.mxu0 0.0
        %966 = vmatprep.subr.mxu0 0.0
        %967 = vmatpush1.msra.mxu0 0.0
        %968 = vmatprep.subr.mxu0 0.0
        %969 = vmatpush1.msra.mxu0 0.0
        %970 = vmatprep.subr.mxu0 0.0
        %971 = vmatpush1.msra.mxu0 0.0
        %972 = vmatprep.subr.mxu0 0.0
        %973 = vmatpush1.msra.mxu0 0.0
        %974 = vmatprep.subr.mxu0 0.0
        %975 = vmatpush1.msra.mxu0 0.0
        %976 = vmatprep.subr.mxu0 0.0
        %977 = vmatpush1.msra.mxu0 0.0
        %978 = vmatprep.subr.mxu0 0.0
        %979 = vmatpush1.msra.mxu0 0.0
        %980 = vmatprep.subr.mxu0 0.0
        %981 = vmatpush1.msra.mxu0 0.0
        %982 = vmatprep.subr.mxu0 0.0
        %983 = vmatpush1.msra.mxu0 0.0
        %984 = vmatprep.subr.mxu0 0.0
        %985 = vmatpush1.msra.mxu0 0.0
        %986 = vmatprep.subr.mxu0 0.0
        %987 = vmatpush1.msra.mxu0 0.0
        %988 = vmatprep.subr.mxu0 0.0
        %989 = vmatpush1.msra.mxu0 0.0
        %990 = vmatprep.subr.mxu0 0.0
        %991 = vmatpush1.msra.mxu0 0.0
        %992 = vmatprep.subr.mxu0 0.0
        %993 = vmatpush1.msra.mxu0 0.0
        %994 = vmatprep.subr.mxu0 0.0
        %995 = vmatpush1.msra.mxu0 0.0
        %996 = vmatprep.subr.mxu0 0.0
        %997 = vmatpush1.msra.mxu0 0.0
        %998 = vmatprep.subr.mxu0 0.0
        %999 = vmatpush1.msra.mxu0 0.0
        %1000 = vmatprep.subr.mxu0 0.0
        %1001 = vmatpush1.msra.mxu0 0.0
        %1002 = vmatprep.subr.mxu0 0.0
        %1003 = vmatpush1.msra.mxu0 0.0
        %1004 = vmatprep.subr.mxu0 0.0
        %1005 = vmatpush1.msra.mxu0 0.0
        %1006 = vmatprep.subr.mxu0 0.0
        %1007 = vmatpush1.msra.mxu0 0.0
        %1008 = vmatprep.subr.mxu0 0.0
        %1009 = vmatpush1.msra.mxu0 0.0
        %1010 = vmatprep.subr.mxu0 0.0
        %1011 = vmatpush1.msra.mxu0 0.0
        %1012 = vmatprep.subr.mxu0 0.0
        %1013 = vmatpush1.msra.mxu0 0.0
        %1014 = vmatprep.subr.mxu0 0.0
        %1015 = vmatpush1.msra.mxu0 0.0
        %1016 = vmatprep.subr.mxu0 0.0
        %1017 = vmatpush1.msra.mxu0 0.0
        %1018 = vmatprep.subr.mxu0 0.0
        %1019 = vmatpush1.msra.mxu0 0.0
        %1020 = vmatprep.subr.mxu0 0.0
        %1021 = vmatpush1.msra.mxu0 0.0
        %1022 = vmatprep.subr.mxu0 0.0
        %1023 = vmatpush1.msra.mxu0 0.0
        %1024 = vmatprep.subr.mxu0 0.0
        %1025 = vmatpush1.msra.mxu0 0.0
        %1026 = vmatprep.mubr.f32.mxu0 0.0
        %1027 = vmatmul.mubr.f32.gmra.mrb[0].mxu0 %v960
        %v1028 = vpop.f32.mrb[0].mxu0
        %v1029 = vadd.f32 0.0, %v1028
        %v1030 = vpop.f32.mrb[0].mxu0
        %v1031 = vadd.f32 0.0, %v1030
        %1032 = vdwg.mxu0
        %s1033 = scalar_lea.vmem [#allocation7], 1024
        %v1034 = vld [vmem:[%s1033] sm:$0xff]
        %v1035 = vld [vmem:[%s1033 + $0x8] sm:$0xff]
        %v1036 = vld [vmem:[%s1033 + $0x10] sm:$0xff]
        %v1037 = vld [vmem:[%s1033 + $0x18] sm:$0xff]
        %v1038 = vld [vmem:[%s1033 + $0x20] sm:$0xff]
        %v1039 = vld [vmem:[%s1033 + $0x28] sm:$0xff]
        %v1040 = vld [vmem:[%s1033 + $0x30] sm:$0xff]
        %v1041 = vld [vmem:[%s1033 + $0x38] sm:$0xff]
        %v1042 = vld [vmem:[%s1033 + $0x40] sm:$0xff]
        %v1043 = vld [vmem:[%s1033 + $0x48] sm:$0xff]
        %v1044 = vld [vmem:[%s1033 + $0x50] sm:$0xff]
        %v1045 = vld [vmem:[%s1033 + $0x58] sm:$0xff]
        %v1046 = vld [vmem:[%s1033 + $0x60] sm:$0xff]
        %v1047 = vld [vmem:[%s1033 + $0x68] sm:$0xff]
        %v1048 = vld [vmem:[%s1033 + $0x70] sm:$0xff]
        %v1049 = vld [vmem:[%s1033 + $0x78] sm:$0xff]
        %v1050 = vld [vmem:[%s1033 + $0x80] sm:$0xff]
        %v1051 = vld [vmem:[%s1033 + $0x88] sm:$0xff]
        %v1052 = vld [vmem:[%s1033 + $0x90] sm:$0xff]
        %v1053 = vld [vmem:[%s1033 + $0x98] sm:$0xff]
        %v1054 = vld [vmem:[%s1033 + $0xa0] sm:$0xff]
        %v1055 = vld [vmem:[%s1033 + $0xa8] sm:$0xff]
        %v1056 = vld [vmem:[%s1033 + $0xb0] sm:$0xff]
        %v1057 = vld [vmem:[%s1033 + $0xb8] sm:$0xff]
        %v1058 = vld [vmem:[%s1033 + $0xc0] sm:$0xff]
        %v1059 = vld [vmem:[%s1033 + $0xc8] sm:$0xff]
        %v1060 = vld [vmem:[%s1033 + $0xd0] sm:$0xff]
        %v1061 = vld [vmem:[%s1033 + $0xd8] sm:$0xff]
        %v1062 = vld [vmem:[%s1033 + $0xe0] sm:$0xff]
        %v1063 = vld [vmem:[%s1033 + $0xe8] sm:$0xff]
        %v1064 = vld [vmem:[%s1033 + $0xf0] sm:$0xff]
        %v1065 = vld [vmem:[%s1033 + $0xf8] sm:$0xff]
        %v1066 = vld [vmem:[%s1033 + $0x100] sm:$0xff]
        %v1067 = vld [vmem:[%s1033 + $0x108] sm:$0xff]
        %v1068 = vld [vmem:[%s1033 + $0x110] sm:$0xff]
        %v1069 = vld [vmem:[%s1033 + $0x118] sm:$0xff]
        %v1070 = vld [vmem:[%s1033 + $0x120] sm:$0xff]
        %v1071 = vld [vmem:[%s1033 + $0x128] sm:$0xff]
        %v1072 = vld [vmem:[%s1033 + $0x130] sm:$0xff]
        %v1073 = vld [vmem:[%s1033 + $0x138] sm:$0xff]
        %v1074 = vld [vmem:[%s1033 + $0x140] sm:$0xff]
        %v1075 = vld [vmem:[%s1033 + $0x148] sm:$0xff]
        %v1076 = vld [vmem:[%s1033 + $0x150] sm:$0xff]
        %v1077 = vld [vmem:[%s1033 + $0x158] sm:$0xff]
        %v1078 = vld [vmem:[%s1033 + $0x160] sm:$0xff]
        %v1079 = vld [vmem:[%s1033 + $0x168] sm:$0xff]
        %v1080 = vld [vmem:[%s1033 + $0x170] sm:$0xff]
        %v1081 = vld [vmem:[%s1033 + $0x178] sm:$0xff]
        %v1082 = vld [vmem:[%s1033 + $0x180] sm:$0xff]
        %v1083 = vld [vmem:[%s1033 + $0x188] sm:$0xff]
        %v1084 = vld [vmem:[%s1033 + $0x190] sm:$0xff]
        %v1085 = vld [vmem:[%s1033 + $0x198] sm:$0xff]
        %v1086 = vld [vmem:[%s1033 + $0x1a0] sm:$0xff]
        %v1087 = vld [vmem:[%s1033 + $0x1a8] sm:$0xff]
        %v1088 = vld [vmem:[%s1033 + $0x1b0] sm:$0xff]
        %v1089 = vld [vmem:[%s1033 + $0x1b8] sm:$0xff]
        %v1090 = vld [vmem:[%s1033 + $0x1c0] sm:$0xff]
        %v1091 = vld [vmem:[%s1033 + $0x1c8] sm:$0xff]
        %v1092 = vld [vmem:[%s1033 + $0x1d0] sm:$0xff]
        %v1093 = vld [vmem:[%s1033 + $0x1d8] sm:$0xff]
        %v1094 = vld [vmem:[%s1033 + $0x1e0] sm:$0xff]
        %v1095 = vld [vmem:[%s1033 + $0x1e8] sm:$0xff]
        %v1096 = vld [vmem:[%s1033 + $0x1f0] sm:$0xff]
        %v1097 = vld [vmem:[%s1033 + $0x1f8] sm:$0xff]
        %1098 = vmatprep.subr.mxu0 %v1035
        %1099 = vmatpush1.msra.mxu0 %v1034
        %1100 = vmatprep.subr.mxu0 %v1037
        %1101 = vmatpush1.msra.mxu0 %v1036
        %1102 = vmatprep.subr.mxu0 %v1039
        %1103 = vmatpush1.msra.mxu0 %v1038
        %1104 = vmatprep.subr.mxu0 %v1041
        %1105 = vmatpush1.msra.mxu0 %v1040
        %1106 = vmatprep.subr.mxu0 %v1043
        %1107 = vmatpush1.msra.mxu0 %v1042
        %1108 = vmatprep.subr.mxu0 %v1045
        %1109 = vmatpush1.msra.mxu0 %v1044
        %1110 = vmatprep.subr.mxu0 %v1047
        %1111 = vmatpush1.msra.mxu0 %v1046
        %1112 = vmatprep.subr.mxu0 %v1049
        %1113 = vmatpush1.msra.mxu0 %v1048
        %1114 = vmatprep.subr.mxu0 %v1051
        %1115 = vmatpush1.msra.mxu0 %v1050
        %1116 = vmatprep.subr.mxu0 %v1053
        %1117 = vmatpush1.msra.mxu0 %v1052
        %1118 = vmatprep.subr.mxu0 %v1055
        %1119 = vmatpush1.msra.mxu0 %v1054
        %1120 = vmatprep.subr.mxu0 %v1057
        %1121 = vmatpush1.msra.mxu0 %v1056
        %1122 = vmatprep.subr.mxu0 %v1059
        %1123 = vmatpush1.msra.mxu0 %v1058
        %1124 = vmatprep.subr.mxu0 %v1061
        %1125 = vmatpush1.msra.mxu0 %v1060
        %1126 = vmatprep.subr.mxu0 %v1063
        %1127 = vmatpush1.msra.mxu0 %v1062
        %1128 = vmatprep.subr.mxu0 %v1065
        %1129 = vmatpush1.msra.mxu0 %v1064
        %1130 = vmatprep.subr.mxu0 %v1067
        %1131 = vmatpush1.msra.mxu0 %v1066
        %1132 = vmatprep.subr.mxu0 %v1069
        %1133 = vmatpush1.msra.mxu0 %v1068
        %1134 = vmatprep.subr.mxu0 %v1071
        %1135 = vmatpush1.msra.mxu0 %v1070
        %1136 = vmatprep.subr.mxu0 %v1073
        %1137 = vmatpush1.msra.mxu0 %v1072
        %1138 = vmatprep.subr.mxu0 %v1075
        %1139 = vmatpush1.msra.mxu0 %v1074
        %1140 = vmatprep.subr.mxu0 %v1077
        %1141 = vmatpush1.msra.mxu0 %v1076
        %1142 = vmatprep.subr.mxu0 %v1079
        %1143 = vmatpush1.msra.mxu0 %v1078
        %1144 = vmatprep.subr.mxu0 %v1081
        %1145 = vmatpush1.msra.mxu0 %v1080
        %1146 = vmatprep.subr.mxu0 %v1083
        %1147 = vmatpush1.msra.mxu0 %v1082
        %1148 = vmatprep.subr.mxu0 %v1085
        %1149 = vmatpush1.msra.mxu0 %v1084
        %1150 = vmatprep.subr.mxu0 %v1087
        %1151 = vmatpush1.msra.mxu0 %v1086
        %1152 = vmatprep.subr.mxu0 %v1089
        %1153 = vmatpush1.msra.mxu0 %v1088
        %1154 = vmatprep.subr.mxu0 %v1091
        %1155 = vmatpush1.msra.mxu0 %v1090
        %1156 = vmatprep.subr.mxu0 %v1093
        %1157 = vmatpush1.msra.mxu0 %v1092
        %1158 = vmatprep.subr.mxu0 %v1095
        %1159 = vmatpush1.msra.mxu0 %v1094
        %1160 = vmatprep.subr.mxu0 %v1097
        %1161 = vmatpush1.msra.mxu0 %v1096
        %1162 = vmatprep.mubr.f32.mxu0 %v1031
        %1163 = vmatmul.mubr.f32.gmra.mrb[0].mxu0 %v1029
        %v1164 = vpop.f32.mrb[0].mxu0
        %v1165 = vadd.f32 0.0, %v1164
        %v1166 = vpop.f32.mrb[0].mxu0
        %v1167 = vadd.f32 0.0, %v1166
        %1168 = vdwg.mxu0
        %v1169 = vadd.f32 %v953, %v1165
        %v1170 = vadd.f32 %v955, %v1167
        %s1171 = scalar_lea.vmem %s4, 24
        %v1172 = vld [vmem:[%s1171] sm:$0xff]
        %v1174 = vsel %vm535, %v1172, 0
        %1176 = vmatprep.subr.mxu0 %v533
        %1177 = vmatpush1.msra.mxu0 %v532
        %1178 = vmatprep.subr.mxu0 0.0
        %1179 = vmatpush1.msra.mxu0 0.0
        %1180 = vmatprep.subr.mxu0 0.0
        %1181 = vmatpush1.msra.mxu0 0.0
        %1182 = vmatprep.subr.mxu0 0.0
        %1183 = vmatpush1.msra.mxu0 0.0
        %1184 = vmatprep.subr.mxu0 0.0
        %1185 = vmatpush1.msra.mxu0 0.0
        %1186 = vmatprep.subr.mxu0 0.0
        %1187 = vmatpush1.msra.mxu0 0.0
        %1188 = vmatprep.subr.mxu0 0.0
        %1189 = vmatpush1.msra.mxu0 0.0
        %1190 = vmatprep.subr.mxu0 0.0
        %1191 = vmatpush1.msra.mxu0 0.0
        %1192 = vmatprep.subr.mxu0 0.0
        %1193 = vmatpush1.msra.mxu0 0.0
        %1194 = vmatprep.subr.mxu0 0.0
        %1195 = vmatpush1.msra.mxu0 0.0
        %1196 = vmatprep.subr.mxu0 0.0
        %1197 = vmatpush1.msra.mxu0 0.0
        %1198 = vmatprep.subr.mxu0 0.0
        %1199 = vmatpush1.msra.mxu0 0.0
        %1200 = vmatprep.subr.mxu0 0.0
        %1201 = vmatpush1.msra.mxu0 0.0
        %1202 = vmatprep.subr.mxu0 0.0
        %1203 = vmatpush1.msra.mxu0 0.0
        %1204 = vmatprep.subr.mxu0 0.0
        %1205 = vmatpush1.msra.mxu0 0.0
        %1206 = vmatprep.subr.mxu0 0.0
        %1207 = vmatpush1.msra.mxu0 0.0
        %1208 = vmatprep.subr.mxu0 0.0
        %1209 = vmatpush1.msra.mxu0 0.0
        %1210 = vmatprep.subr.mxu0 0.0
        %1211 = vmatpush1.msra.mxu0 0.0
        %1212 = vmatprep.subr.mxu0 0.0
        %1213 = vmatpush1.msra.mxu0 0.0
        %1214 = vmatprep.subr.mxu0 0.0
        %1215 = vmatpush1.msra.mxu0 0.0
        %1216 = vmatprep.subr.mxu0 0.0
        %1217 = vmatpush1.msra.mxu0 0.0
        %1218 = vmatprep.subr.mxu0 0.0
        %1219 = vmatpush1.msra.mxu0 0.0
        %1220 = vmatprep.subr.mxu0 0.0
        %1221 = vmatpush1.msra.mxu0 0.0
        %1222 = vmatprep.subr.mxu0 0.0
        %1223 = vmatpush1.msra.mxu0 0.0
        %1224 = vmatprep.subr.mxu0 0.0
        %1225 = vmatpush1.msra.mxu0 0.0
        %1226 = vmatprep.subr.mxu0 0.0
        %1227 = vmatpush1.msra.mxu0 0.0
        %1228 = vmatprep.subr.mxu0 0.0
        %1229 = vmatpush1.msra.mxu0 0.0
        %1230 = vmatprep.subr.mxu0 0.0
        %1231 = vmatpush1.msra.mxu0 0.0
        %1232 = vmatprep.subr.mxu0 0.0
        %1233 = vmatpush1.msra.mxu0 0.0
        %1234 = vmatprep.subr.mxu0 0.0
        %1235 = vmatpush1.msra.mxu0 0.0
        %1236 = vmatprep.subr.mxu0 0.0
        %1237 = vmatpush1.msra.mxu0 0.0
        %1238 = vmatprep.subr.mxu0 0.0
        %1239 = vmatpush1.msra.mxu0 0.0
        %1240 = vmatprep.mubr.f32.mxu0 0.0
        %1241 = vmatmul.mubr.f32.gmra.mrb[0].mxu0 %v1174
        %v1242 = vpop.f32.mrb[0].mxu0
        %v1243 = vadd.f32 0.0, %v1242
        %v1244 = vpop.f32.mrb[0].mxu0
        %v1245 = vadd.f32 0.0, %v1244
        %1246 = vdwg.mxu0
        %s1247 = scalar_lea.vmem [#allocation7], 1536
        %v1248 = vld [vmem:[%s1247] sm:$0xff]
        %v1249 = vld [vmem:[%s1247 + $0x8] sm:$0xff]
        %v1250 = vld [vmem:[%s1247 + $0x10] sm:$0xff]
        %v1251 = vld [vmem:[%s1247 + $0x18] sm:$0xff]
        %v1252 = vld [vmem:[%s1247 + $0x20] sm:$0xff]
        %v1253 = vld [vmem:[%s1247 + $0x28] sm:$0xff]
        %v1254 = vld [vmem:[%s1247 + $0x30] sm:$0xff]
        %v1255 = vld [vmem:[%s1247 + $0x38] sm:$0xff]
        %v1256 = vld [vmem:[%s1247 + $0x40] sm:$0xff]
        %v1257 = vld [vmem:[%s1247 + $0x48] sm:$0xff]
        %v1258 = vld [vmem:[%s1247 + $0x50] sm:$0xff]
        %v1259 = vld [vmem:[%s1247 + $0x58] sm:$0xff]
        %v1260 = vld [vmem:[%s1247 + $0x60] sm:$0xff]
        %v1261 = vld [vmem:[%s1247 + $0x68] sm:$0xff]
        %v1262 = vld [vmem:[%s1247 + $0x70] sm:$0xff]
        %v1263 = vld [vmem:[%s1247 + $0x78] sm:$0xff]
        %v1264 = vld [vmem:[%s1247 + $0x80] sm:$0xff]
        %v1265 = vld [vmem:[%s1247 + $0x88] sm:$0xff]
        %v1266 = vld [vmem:[%s1247 + $0x90] sm:$0xff]
        %v1267 = vld [vmem:[%s1247 + $0x98] sm:$0xff]
        %v1268 = vld [vmem:[%s1247 + $0xa0] sm:$0xff]
        %v1269 = vld [vmem:[%s1247 + $0xa8] sm:$0xff]
        %v1270 = vld [vmem:[%s1247 + $0xb0] sm:$0xff]
        %v1271 = vld [vmem:[%s1247 + $0xb8] sm:$0xff]
        %v1272 = vld [vmem:[%s1247 + $0xc0] sm:$0xff]
        %v1273 = vld [vmem:[%s1247 + $0xc8] sm:$0xff]
        %v1274 = vld [vmem:[%s1247 + $0xd0] sm:$0xff]
        %v1275 = vld [vmem:[%s1247 + $0xd8] sm:$0xff]
        %v1276 = vld [vmem:[%s1247 + $0xe0] sm:$0xff]
        %v1277 = vld [vmem:[%s1247 + $0xe8] sm:$0xff]
        %v1278 = vld [vmem:[%s1247 + $0xf0] sm:$0xff]
        %v1279 = vld [vmem:[%s1247 + $0xf8] sm:$0xff]
        %v1280 = vld [vmem:[%s1247 + $0x100] sm:$0xff]
        %v1281 = vld [vmem:[%s1247 + $0x108] sm:$0xff]
        %v1282 = vld [vmem:[%s1247 + $0x110] sm:$0xff]
        %v1283 = vld [vmem:[%s1247 + $0x118] sm:$0xff]
        %v1284 = vld [vmem:[%s1247 + $0x120] sm:$0xff]
        %v1285 = vld [vmem:[%s1247 + $0x128] sm:$0xff]
        %v1286 = vld [vmem:[%s1247 + $0x130] sm:$0xff]
        %v1287 = vld [vmem:[%s1247 + $0x138] sm:$0xff]
        %v1288 = vld [vmem:[%s1247 + $0x140] sm:$0xff]
        %v1289 = vld [vmem:[%s1247 + $0x148] sm:$0xff]
        %v1290 = vld [vmem:[%s1247 + $0x150] sm:$0xff]
        %v1291 = vld [vmem:[%s1247 + $0x158] sm:$0xff]
        %v1292 = vld [vmem:[%s1247 + $0x160] sm:$0xff]
        %v1293 = vld [vmem:[%s1247 + $0x168] sm:$0xff]
        %v1294 = vld [vmem:[%s1247 + $0x170] sm:$0xff]
        %v1295 = vld [vmem:[%s1247 + $0x178] sm:$0xff]
        %v1296 = vld [vmem:[%s1247 + $0x180] sm:$0xff]
        %v1297 = vld [vmem:[%s1247 + $0x188] sm:$0xff]
        %v1298 = vld [vmem:[%s1247 + $0x190] sm:$0xff]
        %v1299 = vld [vmem:[%s1247 + $0x198] sm:$0xff]
        %v1300 = vld [vmem:[%s1247 + $0x1a0] sm:$0xff]
        %v1301 = vld [vmem:[%s1247 + $0x1a8] sm:$0xff]
        %v1302 = vld [vmem:[%s1247 + $0x1b0] sm:$0xff]
        %v1303 = vld [vmem:[%s1247 + $0x1b8] sm:$0xff]
        %v1304 = vld [vmem:[%s1247 + $0x1c0] sm:$0xff]
        %v1305 = vld [vmem:[%s1247 + $0x1c8] sm:$0xff]
        %v1306 = vld [vmem:[%s1247 + $0x1d0] sm:$0xff]
        %v1307 = vld [vmem:[%s1247 + $0x1d8] sm:$0xff]
        %v1308 = vld [vmem:[%s1247 + $0x1e0] sm:$0xff]
        %v1309 = vld [vmem:[%s1247 + $0x1e8] sm:$0xff]
        %v1310 = vld [vmem:[%s1247 + $0x1f0] sm:$0xff]
        %v1311 = vld [vmem:[%s1247 + $0x1f8] sm:$0xff]
        %1312 = vmatprep.subr.mxu0 %v1249
        %1313 = vmatpush1.msra.mxu0 %v1248
        %1314 = vmatprep.subr.mxu0 %v1251
        %1315 = vmatpush1.msra.mxu0 %v1250
        %1316 = vmatprep.subr.mxu0 %v1253
        %1317 = vmatpush1.msra.mxu0 %v1252
        %1318 = vmatprep.subr.mxu0 %v1255
        %1319 = vmatpush1.msra.mxu0 %v1254
        %1320 = vmatprep.subr.mxu0 %v1257
        %1321 = vmatpush1.msra.mxu0 %v1256
        %1322 = vmatprep.subr.mxu0 %v1259
        %1323 = vmatpush1.msra.mxu0 %v1258
        %1324 = vmatprep.subr.mxu0 %v1261
        %1325 = vmatpush1.msra.mxu0 %v1260
        %1326 = vmatprep.subr.mxu0 %v1263
        %1327 = vmatpush1.msra.mxu0 %v1262
        %1328 = vmatprep.subr.mxu0 %v1265
        %1329 = vmatpush1.msra.mxu0 %v1264
        %1330 = vmatprep.subr.mxu0 %v1267
        %1331 = vmatpush1.msra.mxu0 %v1266
        %1332 = vmatprep.subr.mxu0 %v1269
        %1333 = vmatpush1.msra.mxu0 %v1268
        %1334 = vmatprep.subr.mxu0 %v1271
        %1335 = vmatpush1.msra.mxu0 %v1270
        %1336 = vmatprep.subr.mxu0 %v1273
        %1337 = vmatpush1.msra.mxu0 %v1272
        %1338 = vmatprep.subr.mxu0 %v1275
        %1339 = vmatpush1.msra.mxu0 %v1274
        %1340 = vmatprep.subr.mxu0 %v1277
        %1341 = vmatpush1.msra.mxu0 %v1276
        %1342 = vmatprep.subr.mxu0 %v1279
        %1343 = vmatpush1.msra.mxu0 %v1278
        %1344 = vmatprep.subr.mxu0 %v1281
        %1345 = vmatpush1.msra.mxu0 %v1280
        %1346 = vmatprep.subr.mxu0 %v1283
        %1347 = vmatpush1.msra.mxu0 %v1282
        %1348 = vmatprep.subr.mxu0 %v1285
        %1349 = vmatpush1.msra.mxu0 %v1284
        %1350 = vmatprep.subr.mxu0 %v1287
        %1351 = vmatpush1.msra.mxu0 %v1286
        %1352 = vmatprep.subr.mxu0 %v1289
        %1353 = vmatpush1.msra.mxu0 %v1288
        %1354 = vmatprep.subr.mxu0 %v1291
        %1355 = vmatpush1.msra.mxu0 %v1290
        %1356 = vmatprep.subr.mxu0 %v1293
        %1357 = vmatpush1.msra.mxu0 %v1292
        %1358 = vmatprep.subr.mxu0 %v1295
        %1359 = vmatpush1.msra.mxu0 %v1294
        %1360 = vmatprep.subr.mxu0 %v1297
        %1361 = vmatpush1.msra.mxu0 %v1296
        %1362 = vmatprep.subr.mxu0 %v1299
        %1363 = vmatpush1.msra.mxu0 %v1298
        %1364 = vmatprep.subr.mxu0 %v1301
        %1365 = vmatpush1.msra.mxu0 %v1300
        %1366 = vmatprep.subr.mxu0 %v1303
        %1367 = vmatpush1.msra.mxu0 %v1302
        %1368 = vmatprep.subr.mxu0 %v1305
        %1369 = vmatpush1.msra.mxu0 %v1304
        %1370 = vmatprep.subr.mxu0 %v1307
        %1371 = vmatpush1.msra.mxu0 %v1306
        %1372 = vmatprep.subr.mxu0 %v1309
        %1373 = vmatpush1.msra.mxu0 %v1308
        %1374 = vmatprep.subr.mxu0 %v1311
        %1375 = vmatpush1.msra.mxu0 %v1310
        %1376 = vmatprep.mubr.f32.mxu0 %v1245
        %1377 = vmatmul.mubr.f32.gmra.mrb[0].mxu0 %v1243
        %v1378 = vpop.f32.mrb[0].mxu0
        %v1379 = vadd.f32 0.0, %v1378
        %v1380 = vpop.f32.mrb[0].mxu0
        %v1381 = vadd.f32 0.0, %v1380
        %1382 = vdwg.mxu0
        %v1383 = vadd.f32 %v1169, %v1379
        %v1384 = vadd.f32 %v1170, %v1381
        %s1385 = scalar_lea.vmem %s4, 32
        %v1386 = vld [vmem:[%s1385] sm:$0xff]
        %v1388 = vsel %vm535, %v1386, 0
        %1390 = vmatprep.subr.mxu0 %v533
        %1391 = vmatpush1.msra.mxu0 %v532
        %1392 = vmatprep.subr.mxu0 0.0
        %1393 = vmatpush1.msra.mxu0 0.0
        %1394 = vmatprep.subr.mxu0 0.0
        %1395 = vmatpush1.msra.mxu0 0.0
        %1396 = vmatprep.subr.mxu0 0.0
        %1397 = vmatpush1.msra.mxu0 0.0
        %1398 = vmatprep.subr.mxu0 0.0
        %1399 = vmatpush1.msra.mxu0 0.0
        %1400 = vmatprep.subr.mxu0 0.0
        %1401 = vmatpush1.msra.mxu0 0.0
        %1402 = vmatprep.subr.mxu0 0.0
        %1403 = vmatpush1.msra.mxu0 0.0
        %1404 = vmatprep.subr.mxu0 0.0
        %1405 = vmatpush1.msra.mxu0 0.0
        %1406 = vmatprep.subr.mxu0 0.0
        %1407 = vmatpush1.msra.mxu0 0.0
        %1408 = vmatprep.subr.mxu0 0.0
        %1409 = vmatpush1.msra.mxu0 0.0
        %1410 = vmatprep.subr.mxu0 0.0
        %1411 = vmatpush1.msra.mxu0 0.0
        %1412 = vmatprep.subr.mxu0 0.0
        %1413 = vmatpush1.msra.mxu0 0.0
        %1414 = vmatprep.subr.mxu0 0.0
        %1415 = vmatpush1.msra.mxu0 0.0
        %1416 = vmatprep.subr.mxu0 0.0
        %1417 = vmatpush1.msra.mxu0 0.0
        %1418 = vmatprep.subr.mxu0 0.0
        %1419 = vmatpush1.msra.mxu0 0.0
        %1420 = vmatprep.subr.mxu0 0.0
        %1421 = vmatpush1.msra.mxu0 0.0
        %1422 = vmatprep.subr.mxu0 0.0
        %1423 = vmatpush1.msra.mxu0 0.0
        %1424 = vmatprep.subr.mxu0 0.0
        %1425 = vmatpush1.msra.mxu0 0.0
        %1426 = vmatprep.subr.mxu0 0.0
        %1427 = vmatpush1.msra.mxu0 0.0
        %1428 = vmatprep.subr.mxu0 0.0
        %1429 = vmatpush1.msra.mxu0 0.0
        %1430 = vmatprep.subr.mxu0 0.0
        %1431 = vmatpush1.msra.mxu0 0.0
        %1432 = vmatprep.subr.mxu0 0.0
        %1433 = vmatpush1.msra.mxu0 0.0
        %1434 = vmatprep.subr.mxu0 0.0
        %1435 = vmatpush1.msra.mxu0 0.0
        %1436 = vmatprep.subr.mxu0 0.0
        %1437 = vmatpush1.msra.mxu0 0.0
        %1438 = vmatprep.subr.mxu0 0.0
        %1439 = vmatpush1.msra.mxu0 0.0
        %1440 = vmatprep.subr.mxu0 0.0
        %1441 = vmatpush1.msra.mxu0 0.0
        %1442 = vmatprep.subr.mxu0 0.0
        %1443 = vmatpush1.msra.mxu0 0.0
        %1444 = vmatprep.subr.mxu0 0.0
        %1445 = vmatpush1.msra.mxu0 0.0
        %1446 = vmatprep.subr.mxu0 0.0
        %1447 = vmatpush1.msra.mxu0 0.0
        %1448 = vmatprep.subr.mxu0 0.0
        %1449 = vmatpush1.msra.mxu0 0.0
        %1450 = vmatprep.subr.mxu0 0.0
        %1451 = vmatpush1.msra.mxu0 0.0
        %1452 = vmatprep.subr.mxu0 0.0
        %1453 = vmatpush1.msra.mxu0 0.0
        %1454 = vmatprep.mubr.f32.mxu0 0.0
        %1455 = vmatmul.mubr.f32.gmra.mrb[0].mxu0 %v1388
        %v1456 = vpop.f32.mrb[0].mxu0
        %v1457 = vadd.f32 0.0, %v1456
        %v1458 = vpop.f32.mrb[0].mxu0
        %v1459 = vadd.f32 0.0, %v1458
        %1460 = vdwg.mxu0
        %s1461 = scalar_lea.vmem [#allocation7], 2048
        %v1462 = vld [vmem:[%s1461] sm:$0xff]
        %v1463 = vld [vmem:[%s1461 + $0x8] sm:$0xff]
        %v1464 = vld [vmem:[%s1461 + $0x10] sm:$0xff]
        %v1465 = vld [vmem:[%s1461 + $0x18] sm:$0xff]
        %v1466 = vld [vmem:[%s1461 + $0x20] sm:$0xff]
        %v1467 = vld [vmem:[%s1461 + $0x28] sm:$0xff]
        %v1468 = vld [vmem:[%s1461 + $0x30] sm:$0xff]
        %v1469 = vld [vmem:[%s1461 + $0x38] sm:$0xff]
        %v1470 = vld [vmem:[%s1461 + $0x40] sm:$0xff]
        %v1471 = vld [vmem:[%s1461 + $0x48] sm:$0xff]
        %v1472 = vld [vmem:[%s1461 + $0x50] sm:$0xff]
        %v1473 = vld [vmem:[%s1461 + $0x58] sm:$0xff]
        %v1474 = vld [vmem:[%s1461 + $0x60] sm:$0xff]
        %v1475 = vld [vmem:[%s1461 + $0x68] sm:$0xff]
        %v1476 = vld [vmem:[%s1461 + $0x70] sm:$0xff]
        %v1477 = vld [vmem:[%s1461 + $0x78] sm:$0xff]
        %v1478 = vld [vmem:[%s1461 + $0x80] sm:$0xff]
        %v1479 = vld [vmem:[%s1461 + $0x88] sm:$0xff]
        %v1480 = vld [vmem:[%s1461 + $0x90] sm:$0xff]
        %v1481 = vld [vmem:[%s1461 + $0x98] sm:$0xff]
        %v1482 = vld [vmem:[%s1461 + $0xa0] sm:$0xff]
        %v1483 = vld [vmem:[%s1461 + $0xa8] sm:$0xff]
        %v1484 = vld [vmem:[%s1461 + $0xb0] sm:$0xff]
        %v1485 = vld [vmem:[%s1461 + $0xb8] sm:$0xff]
        %v1486 = vld [vmem:[%s1461 + $0xc0] sm:$0xff]
        %v1487 = vld [vmem:[%s1461 + $0xc8] sm:$0xff]
        %v1488 = vld [vmem:[%s1461 + $0xd0] sm:$0xff]
        %v1489 = vld [vmem:[%s1461 + $0xd8] sm:$0xff]
        %v1490 = vld [vmem:[%s1461 + $0xe0] sm:$0xff]
        %v1491 = vld [vmem:[%s1461 + $0xe8] sm:$0xff]
        %v1492 = vld [vmem:[%s1461 + $0xf0] sm:$0xff]
        %v1493 = vld [vmem:[%s1461 + $0xf8] sm:$0xff]
        %v1494 = vld [vmem:[%s1461 + $0x100] sm:$0xff]
        %v1495 = vld [vmem:[%s1461 + $0x108] sm:$0xff]
        %v1496 = vld [vmem:[%s1461 + $0x110] sm:$0xff]
        %v1497 = vld [vmem:[%s1461 + $0x118] sm:$0xff]
        %v1498 = vld [vmem:[%s1461 + $0x120] sm:$0xff]
        %v1499 = vld [vmem:[%s1461 + $0x128] sm:$0xff]
        %v1500 = vld [vmem:[%s1461 + $0x130] sm:$0xff]
        %v1501 = vld [vmem:[%s1461 + $0x138] sm:$0xff]
        %v1502 = vld [vmem:[%s1461 + $0x140] sm:$0xff]
        %v1503 = vld [vmem:[%s1461 + $0x148] sm:$0xff]
        %v1504 = vld [vmem:[%s1461 + $0x150] sm:$0xff]
        %v1505 = vld [vmem:[%s1461 + $0x158] sm:$0xff]
        %v1506 = vld [vmem:[%s1461 + $0x160] sm:$0xff]
        %v1507 = vld [vmem:[%s1461 + $0x168] sm:$0xff]
        %v1508 = vld [vmem:[%s1461 + $0x170] sm:$0xff]
        %v1509 = vld [vmem:[%s1461 + $0x178] sm:$0xff]
        %v1510 = vld [vmem:[%s1461 + $0x180] sm:$0xff]
        %v1511 = vld [vmem:[%s1461 + $0x188] sm:$0xff]
        %v1512 = vld [vmem:[%s1461 + $0x190] sm:$0xff]
        %v1513 = vld [vmem:[%s1461 + $0x198] sm:$0xff]
        %v1514 = vld [vmem:[%s1461 + $0x1a0] sm:$0xff]
        %v1515 = vld [vmem:[%s1461 + $0x1a8] sm:$0xff]
        %v1516 = vld [vmem:[%s1461 + $0x1b0] sm:$0xff]
        %v1517 = vld [vmem:[%s1461 + $0x1b8] sm:$0xff]
        %v1518 = vld [vmem:[%s1461 + $0x1c0] sm:$0xff]
        %v1519 = vld [vmem:[%s1461 + $0x1c8] sm:$0xff]
        %v1520 = vld [vmem:[%s1461 + $0x1d0] sm:$0xff]
        %v1521 = vld [vmem:[%s1461 + $0x1d8] sm:$0xff]
        %v1522 = vld [vmem:[%s1461 + $0x1e0] sm:$0xff]
        %v1523 = vld [vmem:[%s1461 + $0x1e8] sm:$0xff]
        %v1524 = vld [vmem:[%s1461 + $0x1f0] sm:$0xff]
        %v1525 = vld [vmem:[%s1461 + $0x1f8] sm:$0xff]
        %1526 = vmatprep.subr.mxu0 %v1463
        %1527 = vmatpush1.msra.mxu0 %v1462
        %1528 = vmatprep.subr.mxu0 %v1465
        %1529 = vmatpush1.msra.mxu0 %v1464
        %1530 = vmatprep.subr.mxu0 %v1467
        %1531 = vmatpush1.msra.mxu0 %v1466
        %1532 = vmatprep.subr.mxu0 %v1469
        %1533 = vmatpush1.msra.mxu0 %v1468
        %1534 = vmatprep.subr.mxu0 %v1471
        %1535 = vmatpush1.msra.mxu0 %v1470
        %1536 = vmatprep.subr.mxu0 %v1473
        %1537 = vmatpush1.msra.mxu0 %v1472
        %1538 = vmatprep.subr.mxu0 %v1475
        %1539 = vmatpush1.msra.mxu0 %v1474
        %1540 = vmatprep.subr.mxu0 %v1477
        %1541 = vmatpush1.msra.mxu0 %v1476
        %1542 = vmatprep.subr.mxu0 %v1479
        %1543 = vmatpush1.msra.mxu0 %v1478
        %1544 = vmatprep.subr.mxu0 %v1481
        %1545 = vmatpush1.msra.mxu0 %v1480
        %1546 = vmatprep.subr.mxu0 %v1483
        %1547 = vmatpush1.msra.mxu0 %v1482
        %1548 = vmatprep.subr.mxu0 %v1485
        %1549 = vmatpush1.msra.mxu0 %v1484
        %1550 = vmatprep.subr.mxu0 %v1487
        %1551 = vmatpush1.msra.mxu0 %v1486
        %1552 = vmatprep.subr.mxu0 %v1489
        %1553 = vmatpush1.msra.mxu0 %v1488
        %1554 = vmatprep.subr.mxu0 %v1491
        %1555 = vmatpush1.msra.mxu0 %v1490
        %1556 = vmatprep.subr.mxu0 %v1493
        %1557 = vmatpush1.msra.mxu0 %v1492
        %1558 = vmatprep.subr.mxu0 %v1495
        %1559 = vmatpush1.msra.mxu0 %v1494
        %1560 = vmatprep.subr.mxu0 %v1497
        %1561 = vmatpush1.msra.mxu0 %v1496
        %1562 = vmatprep.subr.mxu0 %v1499
        %1563 = vmatpush1.msra.mxu0 %v1498
        %1564 = vmatprep.subr.mxu0 %v1501
        %1565 = vmatpush1.msra.mxu0 %v1500
        %1566 = vmatprep.subr.mxu0 %v1503
        %1567 = vmatpush1.msra.mxu0 %v1502
        %1568 = vmatprep.subr.mxu0 %v1505
        %1569 = vmatpush1.msra.mxu0 %v1504
        %1570 = vmatprep.subr.mxu0 %v1507
        %1571 = vmatpush1.msra.mxu0 %v1506
        %1572 = vmatprep.subr.mxu0 %v1509
        %1573 = vmatpush1.msra.mxu0 %v1508
        %1574 = vmatprep.subr.mxu0 %v1511
        %1575 = vmatpush1.msra.mxu0 %v1510
        %1576 = vmatprep.subr.mxu0 %v1513
        %1577 = vmatpush1.msra.mxu0 %v1512
        %1578 = vmatprep.subr.mxu0 %v1515
        %1579 = vmatpush1.msra.mxu0 %v1514
        %1580 = vmatprep.subr.mxu0 %v1517
        %1581 = vmatpush1.msra.mxu0 %v1516
        %1582 = vmatprep.subr.mxu0 %v1519
        %1583 = vmatpush1.msra.mxu0 %v1518
        %1584 = vmatprep.subr.mxu0 %v1521
        %1585 = vmatpush1.msra.mxu0 %v1520
        %1586 = vmatprep.subr.mxu0 %v1523
        %1587 = vmatpush1.msra.mxu0 %v1522
        %1588 = vmatprep.subr.mxu0 %v1525
        %1589 = vmatpush1.msra.mxu0 %v1524
        %1590 = vmatprep.mubr.f32.mxu0 %v1459
        %1591 = vmatmul.mubr.f32.gmra.mrb[0].mxu0 %v1457
        %v1592 = vpop.f32.mrb[0].mxu0
        %v1593 = vadd.f32 0.0, %v1592
        %v1594 = vpop.f32.mrb[0].mxu0
        %v1595 = vadd.f32 0.0, %v1594
        %1596 = vdwg.mxu0
        %v1597 = vadd.f32 %v1383, %v1593
        %v1598 = vadd.f32 %v1384, %v1595
        %s1599 = scalar_lea.vmem %s4, 40
        %v1600 = vld [vmem:[%s1599] sm:$0xff]
        %v1602 = vsel %vm535, %v1600, 0
        %1604 = vmatprep.subr.mxu0 %v533
        %1605 = vmatpush1.msra.mxu0 %v532
        %1606 = vmatprep.subr.mxu0 0.0
        %1607 = vmatpush1.msra.mxu0 0.0
        %1608 = vmatprep.subr.mxu0 0.0
        %1609 = vmatpush1.msra.mxu0 0.0
        %1610 = vmatprep.subr.mxu0 0.0
        %1611 = vmatpush1.msra.mxu0 0.0
        %1612 = vmatprep.subr.mxu0 0.0
        %1613 = vmatpush1.msra.mxu0 0.0
        %1614 = vmatprep.subr.mxu0 0.0
        %1615 = vmatpush1.msra.mxu0 0.0
        %1616 = vmatprep.subr.mxu0 0.0
        %1617 = vmatpush1.msra.mxu0 0.0
        %1618 = vmatprep.subr.mxu0 0.0
        %1619 = vmatpush1.msra.mxu0 0.0
        %1620 = vmatprep.subr.mxu0 0.0
        %1621 = vmatpush1.msra.mxu0 0.0
        %1622 = vmatprep.subr.mxu0 0.0
        %1623 = vmatpush1.msra.mxu0 0.0
        %1624 = vmatprep.subr.mxu0 0.0
        %1625 = vmatpush1.msra.mxu0 0.0
        %1626 = vmatprep.subr.mxu0 0.0
        %1627 = vmatpush1.msra.mxu0 0.0
        %1628 = vmatprep.subr.mxu0 0.0
        %1629 = vmatpush1.msra.mxu0 0.0
        %1630 = vmatprep.subr.mxu0 0.0
        %1631 = vmatpush1.msra.mxu0 0.0
        %1632 = vmatprep.subr.mxu0 0.0
        %1633 = vmatpush1.msra.mxu0 0.0
        %1634 = vmatprep.subr.mxu0 0.0
        %1635 = vmatpush1.msra.mxu0 0.0
        %1636 = vmatprep.subr.mxu0 0.0
        %1637 = vmatpush1.msra.mxu0 0.0
        %1638 = vmatprep.subr.mxu0 0.0
        %1639 = vmatpush1.msra.mxu0 0.0
        %1640 = vmatprep.subr.mxu0 0.0
        %1641 = vmatpush1.msra.mxu0 0.0
        %1642 = vmatprep.subr.mxu0 0.0
        %1643 = vmatpush1.msra.mxu0 0.0
        %1644 = vmatprep.subr.mxu0 0.0
        %1645 = vmatpush1.msra.mxu0 0.0
        %1646 = vmatprep.subr.mxu0 0.0
        %1647 = vmatpush1.msra.mxu0 0.0
        %1648 = vmatprep.subr.mxu0 0.0
        %1649 = vmatpush1.msra.mxu0 0.0
        %1650 = vmatprep.subr.mxu0 0.0
        %1651 = vmatpush1.msra.mxu0 0.0
        %1652 = vmatprep.subr.mxu0 0.0
        %1653 = vmatpush1.msra.mxu0 0.0
        %1654 = vmatprep.subr.mxu0 0.0
        %1655 = vmatpush1.msra.mxu0 0.0
        %1656 = vmatprep.subr.mxu0 0.0
        %1657 = vmatpush1.msra.mxu0 0.0
        %1658 = vmatprep.subr.mxu0 0.0
        %1659 = vmatpush1.msra.mxu0 0.0
        %1660 = vmatprep.subr.mxu0 0.0
        %1661 = vmatpush1.msra.mxu0 0.0
        %1662 = vmatprep.subr.mxu0 0.0
        %1663 = vmatpush1.msra.mxu0 0.0
        %1664 = vmatprep.subr.mxu0 0.0
        %1665 = vmatpush1.msra.mxu0 0.0
        %1666 = vmatprep.subr.mxu0 0.0
        %1667 = vmatpush1.msra.mxu0 0.0
        %1668 = vmatprep.mubr.f32.mxu0 0.0
        %1669 = vmatmul.mubr.f32.gmra.mrb[0].mxu0 %v1602
        %v1670 = vpop.f32.mrb[0].mxu0
        %v1671 = vadd.f32 0.0, %v1670
        %v1672 = vpop.f32.mrb[0].mxu0
        %v1673 = vadd.f32 0.0, %v1672
        %1674 = vdwg.mxu0
        %s1675 = scalar_lea.vmem [#allocation7], 2560
        %v1676 = vld [vmem:[%s1675] sm:$0xff]
        %v1677 = vld [vmem:[%s1675 + $0x8] sm:$0xff]
        %v1678 = vld [vmem:[%s1675 + $0x10] sm:$0xff]
        %v1679 = vld [vmem:[%s1675 + $0x18] sm:$0xff]
        %v1680 = vld [vmem:[%s1675 + $0x20] sm:$0xff]
        %v1681 = vld [vmem:[%s1675 + $0x28] sm:$0xff]
        %v1682 = vld [vmem:[%s1675 + $0x30] sm:$0xff]
        %v1683 = vld [vmem:[%s1675 + $0x38] sm:$0xff]
        %v1684 = vld [vmem:[%s1675 + $0x40] sm:$0xff]
        %v1685 = vld [vmem:[%s1675 + $0x48] sm:$0xff]
        %v1686 = vld [vmem:[%s1675 + $0x50] sm:$0xff]
        %v1687 = vld [vmem:[%s1675 + $0x58] sm:$0xff]
        %v1688 = vld [vmem:[%s1675 + $0x60] sm:$0xff]
        %v1689 = vld [vmem:[%s1675 + $0x68] sm:$0xff]
        %v1690 = vld [vmem:[%s1675 + $0x70] sm:$0xff]
        %v1691 = vld [vmem:[%s1675 + $0x78] sm:$0xff]
        %v1692 = vld [vmem:[%s1675 + $0x80] sm:$0xff]
        %v1693 = vld [vmem:[%s1675 + $0x88] sm:$0xff]
        %v1694 = vld [vmem:[%s1675 + $0x90] sm:$0xff]
        %v1695 = vld [vmem:[%s1675 + $0x98] sm:$0xff]
        %v1696 = vld [vmem:[%s1675 + $0xa0] sm:$0xff]
        %v1697 = vld [vmem:[%s1675 + $0xa8] sm:$0xff]
        %v1698 = vld [vmem:[%s1675 + $0xb0] sm:$0xff]
        %v1699 = vld [vmem:[%s1675 + $0xb8] sm:$0xff]
        %v1700 = vld [vmem:[%s1675 + $0xc0] sm:$0xff]
        %v1701 = vld [vmem:[%s1675 + $0xc8] sm:$0xff]
        %v1702 = vld [vmem:[%s1675 + $0xd0] sm:$0xff]
        %v1703 = vld [vmem:[%s1675 + $0xd8] sm:$0xff]
        %v1704 = vld [vmem:[%s1675 + $0xe0] sm:$0xff]
        %v1705 = vld [vmem:[%s1675 + $0xe8] sm:$0xff]
        %v1706 = vld [vmem:[%s1675 + $0xf0] sm:$0xff]
        %v1707 = vld [vmem:[%s1675 + $0xf8] sm:$0xff]
        %v1708 = vld [vmem:[%s1675 + $0x100] sm:$0xff]
        %v1709 = vld [vmem:[%s1675 + $0x108] sm:$0xff]
        %v1710 = vld [vmem:[%s1675 + $0x110] sm:$0xff]
        %v1711 = vld [vmem:[%s1675 + $0x118] sm:$0xff]
        %v1712 = vld [vmem:[%s1675 + $0x120] sm:$0xff]
        %v1713 = vld [vmem:[%s1675 + $0x128] sm:$0xff]
        %v1714 = vld [vmem:[%s1675 + $0x130] sm:$0xff]
        %v1715 = vld [vmem:[%s1675 + $0x138] sm:$0xff]
        %v1716 = vld [vmem:[%s1675 + $0x140] sm:$0xff]
        %v1717 = vld [vmem:[%s1675 + $0x148] sm:$0xff]
        %v1718 = vld [vmem:[%s1675 + $0x150] sm:$0xff]
        %v1719 = vld [vmem:[%s1675 + $0x158] sm:$0xff]
        %v1720 = vld [vmem:[%s1675 + $0x160] sm:$0xff]
        %v1721 = vld [vmem:[%s1675 + $0x168] sm:$0xff]
        %v1722 = vld [vmem:[%s1675 + $0x170] sm:$0xff]
        %v1723 = vld [vmem:[%s1675 + $0x178] sm:$0xff]
        %v1724 = vld [vmem:[%s1675 + $0x180] sm:$0xff]
        %v1725 = vld [vmem:[%s1675 + $0x188] sm:$0xff]
        %v1726 = vld [vmem:[%s1675 + $0x190] sm:$0xff]
        %v1727 = vld [vmem:[%s1675 + $0x198] sm:$0xff]
        %v1728 = vld [vmem:[%s1675 + $0x1a0] sm:$0xff]
        %v1729 = vld [vmem:[%s1675 + $0x1a8] sm:$0xff]
        %v1730 = vld [vmem:[%s1675 + $0x1b0] sm:$0xff]
        %v1731 = vld [vmem:[%s1675 + $0x1b8] sm:$0xff]
        %v1732 = vld [vmem:[%s1675 + $0x1c0] sm:$0xff]
        %v1733 = vld [vmem:[%s1675 + $0x1c8] sm:$0xff]
        %v1734 = vld [vmem:[%s1675 + $0x1d0] sm:$0xff]
        %v1735 = vld [vmem:[%s1675 + $0x1d8] sm:$0xff]
        %v1736 = vld [vmem:[%s1675 + $0x1e0] sm:$0xff]
        %v1737 = vld [vmem:[%s1675 + $0x1e8] sm:$0xff]
        %v1738 = vld [vmem:[%s1675 + $0x1f0] sm:$0xff]
        %v1739 = vld [vmem:[%s1675 + $0x1f8] sm:$0xff]
        %1740 = vmatprep.subr.mxu0 %v1677
        %1741 = vmatpush1.msra.mxu0 %v1676
        %1742 = vmatprep.subr.mxu0 %v1679
        %1743 = vmatpush1.msra.mxu0 %v1678
        %1744 = vmatprep.subr.mxu0 %v1681
        %1745 = vmatpush1.msra.mxu0 %v1680
        %1746 = vmatprep.subr.mxu0 %v1683
        %1747 = vmatpush1.msra.mxu0 %v1682
        %1748 = vmatprep.subr.mxu0 %v1685
        %1749 = vmatpush1.msra.mxu0 %v1684
        %1750 = vmatprep.subr.mxu0 %v1687
        %1751 = vmatpush1.msra.mxu0 %v1686
        %1752 = vmatprep.subr.mxu0 %v1689
        %1753 = vmatpush1.msra.mxu0 %v1688
        %1754 = vmatprep.subr.mxu0 %v1691
        %1755 = vmatpush1.msra.mxu0 %v1690
        %1756 = vmatprep.subr.mxu0 %v1693
        %1757 = vmatpush1.msra.mxu0 %v1692
        %1758 = vmatprep.subr.mxu0 %v1695
        %1759 = vmatpush1.msra.mxu0 %v1694
        %1760 = vmatprep.subr.mxu0 %v1697
        %1761 = vmatpush1.msra.mxu0 %v1696
        %1762 = vmatprep.subr.mxu0 %v1699
        %1763 = vmatpush1.msra.mxu0 %v1698
        %1764 = vmatprep.subr.mxu0 %v1701
        %1765 = vmatpush1.msra.mxu0 %v1700
        %1766 = vmatprep.subr.mxu0 %v1703
        %1767 = vmatpush1.msra.mxu0 %v1702
        %1768 = vmatprep.subr.mxu0 %v1705
        %1769 = vmatpush1.msra.mxu0 %v1704
        %1770 = vmatprep.subr.mxu0 %v1707
        %1771 = vmatpush1.msra.mxu0 %v1706
        %1772 = vmatprep.subr.mxu0 %v1709
        %1773 = vmatpush1.msra.mxu0 %v1708
        %1774 = vmatprep.subr.mxu0 %v1711
        %1775 = vmatpush1.msra.mxu0 %v1710
        %1776 = vmatprep.subr.mxu0 %v1713
        %1777 = vmatpush1.msra.mxu0 %v1712
        %1778 = vmatprep.subr.mxu0 %v1715
        %1779 = vmatpush1.msra.mxu0 %v1714
        %1780 = vmatprep.subr.mxu0 %v1717
        %1781 = vmatpush1.msra.mxu0 %v1716
        %1782 = vmatprep.subr.mxu0 %v1719
        %1783 = vmatpush1.msra.mxu0 %v1718
        %1784 = vmatprep.subr.mxu0 %v1721
        %1785 = vmatpush1.msra.mxu0 %v1720
        %1786 = vmatprep.subr.mxu0 %v1723
        %1787 = vmatpush1.msra.mxu0 %v1722
        %1788 = vmatprep.subr.mxu0 %v1725
        %1789 = vmatpush1.msra.mxu0 %v1724
        %1790 = vmatprep.subr.mxu0 %v1727
        %1791 = vmatpush1.msra.mxu0 %v1726
        %1792 = vmatprep.subr.mxu0 %v1729
        %1793 = vmatpush1.msra.mxu0 %v1728
        %1794 = vmatprep.subr.mxu0 %v1731
        %1795 = vmatpush1.msra.mxu0 %v1730
        %1796 = vmatprep.subr.mxu0 %v1733
        %1797 = vmatpush1.msra.mxu0 %v1732
        %1798 = vmatprep.subr.mxu0 %v1735
        %1799 = vmatpush1.msra.mxu0 %v1734
        %1800 = vmatprep.subr.mxu0 %v1737
        %1801 = vmatpush1.msra.mxu0 %v1736
        %1802 = vmatprep.subr.mxu0 %v1739
        %1803 = vmatpush1.msra.mxu0 %v1738
        %1804 = vmatprep.mubr.f32.mxu0 %v1673
        %1805 = vmatmul.mubr.f32.gmra.mrb[0].mxu0 %v1671
        %v1806 = vpop.f32.mrb[0].mxu0
        %v1807 = vadd.f32 0.0, %v1806
        %v1808 = vpop.f32.mrb[0].mxu0
        %v1809 = vadd.f32 0.0, %v1808
        %1810 = vdwg.mxu0
        %v1811 = vadd.f32 %v1597, %v1807
        %v1812 = vadd.f32 %v1598, %v1809
        %s1813 = scalar_lea.vmem %s4, 48
        %v1814 = vld [vmem:[%s1813] sm:$0xff]
        %v1816 = vsel %vm535, %v1814, 0
        %1818 = vmatprep.subr.mxu0 %v533
        %1819 = vmatpush1.msra.mxu0 %v532
        %1820 = vmatprep.subr.mxu0 0.0
        %1821 = vmatpush1.msra.mxu0 0.0
        %1822 = vmatprep.subr.mxu0 0.0
        %1823 = vmatpush1.msra.mxu0 0.0
        %1824 = vmatprep.subr.mxu0 0.0
        %1825 = vmatpush1.msra.mxu0 0.0
        %1826 = vmatprep.subr.mxu0 0.0
        %1827 = vmatpush1.msra.mxu0 0.0
        %1828 = vmatprep.subr.mxu0 0.0
        %1829 = vmatpush1.msra.mxu0 0.0
        %1830 = vmatprep.subr.mxu0 0.0
        %1831 = vmatpush1.msra.mxu0 0.0
        %1832 = vmatprep.subr.mxu0 0.0
        %1833 = vmatpush1.msra.mxu0 0.0
        %1834 = vmatprep.subr.mxu0 0.0
        %1835 = vmatpush1.msra.mxu0 0.0
        %1836 = vmatprep.subr.mxu0 0.0
        %1837 = vmatpush1.msra.mxu0 0.0
        %1838 = vmatprep.subr.mxu0 0.0
        %1839 = vmatpush1.msra.mxu0 0.0
        %1840 = vmatprep.subr.mxu0 0.0
        %1841 = vmatpush1.msra.mxu0 0.0
        %1842 = vmatprep.subr.mxu0 0.0
        %1843 = vmatpush1.msra.mxu0 0.0
        %1844 = vmatprep.subr.mxu0 0.0
        %1845 = vmatpush1.msra.mxu0 0.0
        %1846 = vmatprep.subr.mxu0 0.0
        %1847 = vmatpush1.msra.mxu0 0.0
        %1848 = vmatprep.subr.mxu0 0.0
        %1849 = vmatpush1.msra.mxu0 0.0
        %1850 = vmatprep.subr.mxu0 0.0
        %1851 = vmatpush1.msra.mxu0 0.0
        %1852 = vmatprep.subr.mxu0 0.0
        %1853 = vmatpush1.msra.mxu0 0.0
        %1854 = vmatprep.subr.mxu0 0.0
        %1855 = vmatpush1.msra.mxu0 0.0
        %1856 = vmatprep.subr.mxu0 0.0
        %1857 = vmatpush1.msra.mxu0 0.0
        %1858 = vmatprep.subr.mxu0 0.0
        %1859 = vmatpush1.msra.mxu0 0.0
        %1860 = vmatprep.subr.mxu0 0.0
        %1861 = vmatpush1.msra.mxu0 0.0
        %1862 = vmatprep.subr.mxu0 0.0
        %1863 = vmatpush1.msra.mxu0 0.0
        %1864 = vmatprep.subr.mxu0 0.0
        %1865 = vmatpush1.msra.mxu0 0.0
        %1866 = vmatprep.subr.mxu0 0.0
        %1867 = vmatpush1.msra.mxu0 0.0
        %1868 = vmatprep.subr.mxu0 0.0
        %1869 = vmatpush1.msra.mxu0 0.0
        %1870 = vmatprep.subr.mxu0 0.0
        %1871 = vmatpush1.msra.mxu0 0.0
        %1872 = vmatprep.subr.mxu0 0.0
        %1873 = vmatpush1.msra.mxu0 0.0
        %1874 = vmatprep.subr.mxu0 0.0
        %1875 = vmatpush1.msra.mxu0 0.0
        %1876 = vmatprep.subr.mxu0 0.0
        %1877 = vmatpush1.msra.mxu0 0.0
        %1878 = vmatprep.subr.mxu0 0.0
        %1879 = vmatpush1.msra.mxu0 0.0
        %1880 = vmatprep.subr.mxu0 0.0
        %1881 = vmatpush1.msra.mxu0 0.0
        %1882 = vmatprep.mubr.f32.mxu0 0.0
        %1883 = vmatmul.mubr.f32.gmra.mrb[0].mxu0 %v1816
        %v1884 = vpop.f32.mrb[0].mxu0
        %v1885 = vadd.f32 0.0, %v1884
        %v1886 = vpop.f32.mrb[0].mxu0
        %v1887 = vadd.f32 0.0, %v1886
        %1888 = vdwg.mxu0
        %s1889 = scalar_lea.vmem [#allocation7], 3072
        %v1890 = vld [vmem:[%s1889] sm:$0xff]
        %v1891 = vld [vmem:[%s1889 + $0x8] sm:$0xff]
        %v1892 = vld [vmem:[%s1889 + $0x10] sm:$0xff]
        %v1893 = vld [vmem:[%s1889 + $0x18] sm:$0xff]
        %v1894 = vld [vmem:[%s1889 + $0x20] sm:$0xff]
        %v1895 = vld [vmem:[%s1889 + $0x28] sm:$0xff]
        %v1896 = vld [vmem:[%s1889 + $0x30] sm:$0xff]
        %v1897 = vld [vmem:[%s1889 + $0x38] sm:$0xff]
        %v1898 = vld [vmem:[%s1889 + $0x40] sm:$0xff]
        %v1899 = vld [vmem:[%s1889 + $0x48] sm:$0xff]
        %v1900 = vld [vmem:[%s1889 + $0x50] sm:$0xff]
        %v1901 = vld [vmem:[%s1889 + $0x58] sm:$0xff]
        %v1902 = vld [vmem:[%s1889 + $0x60] sm:$0xff]
        %v1903 = vld [vmem:[%s1889 + $0x68] sm:$0xff]
        %v1904 = vld [vmem:[%s1889 + $0x70] sm:$0xff]
        %v1905 = vld [vmem:[%s1889 + $0x78] sm:$0xff]
        %v1906 = vld [vmem:[%s1889 + $0x80] sm:$0xff]
        %v1907 = vld [vmem:[%s1889 + $0x88] sm:$0xff]
        %v1908 = vld [vmem:[%s1889 + $0x90] sm:$0xff]
        %v1909 = vld [vmem:[%s1889 + $0x98] sm:$0xff]
        %v1910 = vld [vmem:[%s1889 + $0xa0] sm:$0xff]
        %v1911 = vld [vmem:[%s1889 + $0xa8] sm:$0xff]
        %v1912 = vld [vmem:[%s1889 + $0xb0] sm:$0xff]
        %v1913 = vld [vmem:[%s1889 + $0xb8] sm:$0xff]
        %v1914 = vld [vmem:[%s1889 + $0xc0] sm:$0xff]
        %v1915 = vld [vmem:[%s1889 + $0xc8] sm:$0xff]
        %v1916 = vld [vmem:[%s1889 + $0xd0] sm:$0xff]
        %v1917 = vld [vmem:[%s1889 + $0xd8] sm:$0xff]
        %v1918 = vld [vmem:[%s1889 + $0xe0] sm:$0xff]
        %v1919 = vld [vmem:[%s1889 + $0xe8] sm:$0xff]
        %v1920 = vld [vmem:[%s1889 + $0xf0] sm:$0xff]
        %v1921 = vld [vmem:[%s1889 + $0xf8] sm:$0xff]
        %v1922 = vld [vmem:[%s1889 + $0x100] sm:$0xff]
        %v1923 = vld [vmem:[%s1889 + $0x108] sm:$0xff]
        %v1924 = vld [vmem:[%s1889 + $0x110] sm:$0xff]
        %v1925 = vld [vmem:[%s1889 + $0x118] sm:$0xff]
        %v1926 = vld [vmem:[%s1889 + $0x120] sm:$0xff]
        %v1927 = vld [vmem:[%s1889 + $0x128] sm:$0xff]
        %v1928 = vld [vmem:[%s1889 + $0x130] sm:$0xff]
        %v1929 = vld [vmem:[%s1889 + $0x138] sm:$0xff]
        %v1930 = vld [vmem:[%s1889 + $0x140] sm:$0xff]
        %v1931 = vld [vmem:[%s1889 + $0x148] sm:$0xff]
        %v1932 = vld [vmem:[%s1889 + $0x150] sm:$0xff]
        %v1933 = vld [vmem:[%s1889 + $0x158] sm:$0xff]
        %v1934 = vld [vmem:[%s1889 + $0x160] sm:$0xff]
        %v1935 = vld [vmem:[%s1889 + $0x168] sm:$0xff]
        %v1936 = vld [vmem:[%s1889 + $0x170] sm:$0xff]
        %v1937 = vld [vmem:[%s1889 + $0x178] sm:$0xff]
        %v1938 = vld [vmem:[%s1889 + $0x180] sm:$0xff]
        %v1939 = vld [vmem:[%s1889 + $0x188] sm:$0xff]
        %v1940 = vld [vmem:[%s1889 + $0x190] sm:$0xff]
        %v1941 = vld [vmem:[%s1889 + $0x198] sm:$0xff]
        %v1942 = vld [vmem:[%s1889 + $0x1a0] sm:$0xff]
        %v1943 = vld [vmem:[%s1889 + $0x1a8] sm:$0xff]
        %v1944 = vld [vmem:[%s1889 + $0x1b0] sm:$0xff]
        %v1945 = vld [vmem:[%s1889 + $0x1b8] sm:$0xff]
        %v1946 = vld [vmem:[%s1889 + $0x1c0] sm:$0xff]
        %v1947 = vld [vmem:[%s1889 + $0x1c8] sm:$0xff]
        %v1948 = vld [vmem:[%s1889 + $0x1d0] sm:$0xff]
        %v1949 = vld [vmem:[%s1889 + $0x1d8] sm:$0xff]
        %v1950 = vld [vmem:[%s1889 + $0x1e0] sm:$0xff]
        %v1951 = vld [vmem:[%s1889 + $0x1e8] sm:$0xff]
        %v1952 = vld [vmem:[%s1889 + $0x1f0] sm:$0xff]
        %v1953 = vld [vmem:[%s1889 + $0x1f8] sm:$0xff]
        %1954 = vmatprep.subr.mxu0 %v1891
        %1955 = vmatpush1.msra.mxu0 %v1890
        %1956 = vmatprep.subr.mxu0 %v1893
        %1957 = vmatpush1.msra.mxu0 %v1892
        %1958 = vmatprep.subr.mxu0 %v1895
        %1959 = vmatpush1.msra.mxu0 %v1894
        %1960 = vmatprep.subr.mxu0 %v1897
        %1961 = vmatpush1.msra.mxu0 %v1896
        %1962 = vmatprep.subr.mxu0 %v1899
        %1963 = vmatpush1.msra.mxu0 %v1898
        %1964 = vmatprep.subr.mxu0 %v1901
        %1965 = vmatpush1.msra.mxu0 %v1900
        %1966 = vmatprep.subr.mxu0 %v1903
        %1967 = vmatpush1.msra.mxu0 %v1902
        %1968 = vmatprep.subr.mxu0 %v1905
        %1969 = vmatpush1.msra.mxu0 %v1904
        %1970 = vmatprep.subr.mxu0 %v1907
        %1971 = vmatpush1.msra.mxu0 %v1906
        %1972 = vmatprep.subr.mxu0 %v1909
        %1973 = vmatpush1.msra.mxu0 %v1908
        %1974 = vmatprep.subr.mxu0 %v1911
        %1975 = vmatpush1.msra.mxu0 %v1910
        %1976 = vmatprep.subr.mxu0 %v1913
        %1977 = vmatpush1.msra.mxu0 %v1912
        %1978 = vmatprep.subr.mxu0 %v1915
        %1979 = vmatpush1.msra.mxu0 %v1914
        %1980 = vmatprep.subr.mxu0 %v1917
        %1981 = vmatpush1.msra.mxu0 %v1916
        %1982 = vmatprep.subr.mxu0 %v1919
        %1983 = vmatpush1.msra.mxu0 %v1918
        %1984 = vmatprep.subr.mxu0 %v1921
        %1985 = vmatpush1.msra.mxu0 %v1920
        %1986 = vmatprep.subr.mxu0 %v1923
        %1987 = vmatpush1.msra.mxu0 %v1922
        %1988 = vmatprep.subr.mxu0 %v1925
        %1989 = vmatpush1.msra.mxu0 %v1924
        %1990 = vmatprep.subr.mxu0 %v1927
        %1991 = vmatpush1.msra.mxu0 %v1926
        %1992 = vmatprep.subr.mxu0 %v1929
        %1993 = vmatpush1.msra.mxu0 %v1928
        %1994 = vmatprep.subr.mxu0 %v1931
        %1995 = vmatpush1.msra.mxu0 %v1930
        %1996 = vmatprep.subr.mxu0 %v1933
        %1997 = vmatpush1.msra.mxu0 %v1932
        %1998 = vmatprep.subr.mxu0 %v1935
        %1999 = vmatpush1.msra.mxu0 %v1934
        %2000 = vmatprep.subr.mxu0 %v1937
        %2001 = vmatpush1.msra.mxu0 %v1936
        %2002 = vmatprep.subr.mxu0 %v1939
        %2003 = vmatpush1.msra.mxu0 %v1938
        %2004 = vmatprep.subr.mxu0 %v1941
        %2005 = vmatpush1.msra.mxu0 %v1940
        %2006 = vmatprep.subr.mxu0 %v1943
        %2007 = vmatpush1.msra.mxu0 %v1942
        %2008 = vmatprep.subr.mxu0 %v1945
        %2009 = vmatpush1.msra.mxu0 %v1944
        %2010 = vmatprep.subr.mxu0 %v1947
        %2011 = vmatpush1.msra.mxu0 %v1946
        %2012 = vmatprep.subr.mxu0 %v1949
        %2013 = vmatpush1.msra.mxu0 %v1948
        %2014 = vmatprep.subr.mxu0 %v1951
        %2015 = vmatpush1.msra.mxu0 %v1950
        %2016 = vmatprep.subr.mxu0 %v1953
        %2017 = vmatpush1.msra.mxu0 %v1952
        %2018 = vmatprep.mubr.f32.mxu0 %v1887
        %2019 = vmatmul.mubr.f32.gmra.mrb[0].mxu0 %v1885
        %v2020 = vpop.f32.mrb[0].mxu0
        %v2021 = vadd.f32 0.0, %v2020
        %v2022 = vpop.f32.mrb[0].mxu0
        %v2023 = vadd.f32 0.0, %v2022
        %2024 = vdwg.mxu0
        %v2025 = vadd.f32 %v1811, %v2021
        %v2026 = vadd.f32 %v1812, %v2023
        %s2027 = scalar_lea.vmem %s4, 56
        %v2028 = vld [vmem:[%s2027] sm:$0xff]
        %v2030 = vsel %vm535, %v2028, 0
        %2032 = vmatprep.subr.mxu0 %v533
        %2033 = vmatpush1.msra.mxu0 %v532
        %2034 = vmatprep.subr.mxu0 0.0
        %2035 = vmatpush1.msra.mxu0 0.0
        %2036 = vmatprep.subr.mxu0 0.0
        %2037 = vmatpush1.msra.mxu0 0.0
        %2038 = vmatprep.subr.mxu0 0.0
        %2039 = vmatpush1.msra.mxu0 0.0
        %2040 = vmatprep.subr.mxu0 0.0
        %2041 = vmatpush1.msra.mxu0 0.0
        %2042 = vmatprep.subr.mxu0 0.0
        %2043 = vmatpush1.msra.mxu0 0.0
        %2044 = vmatprep.subr.mxu0 0.0
        %2045 = vmatpush1.msra.mxu0 0.0
        %2046 = vmatprep.subr.mxu0 0.0
        %2047 = vmatpush1.msra.mxu0 0.0
        %2048 = vmatprep.subr.mxu0 0.0
        %2049 = vmatpush1.msra.mxu0 0.0
        %2050 = vmatprep.subr.mxu0 0.0
        %2051 = vmatpush1.msra.mxu0 0.0
        %2052 = vmatprep.subr.mxu0 0.0
        %2053 = vmatpush1.msra.mxu0 0.0
        %2054 = vmatprep.subr.mxu0 0.0
        %2055 = vmatpush1.msra.mxu0 0.0
        %2056 = vmatprep.subr.mxu0 0.0
        %2057 = vmatpush1.msra.mxu0 0.0
        %2058 = vmatprep.subr.mxu0 0.0
        %2059 = vmatpush1.msra.mxu0 0.0
        %2060 = vmatprep.subr.mxu0 0.0
        %2061 = vmatpush1.msra.mxu0 0.0
        %2062 = vmatprep.subr.mxu0 0.0
        %2063 = vmatpush1.msra.mxu0 0.0
        %2064 = vmatprep.subr.mxu0 0.0
        %2065 = vmatpush1.msra.mxu0 0.0
        %2066 = vmatprep.subr.mxu0 0.0
        %2067 = vmatpush1.msra.mxu0 0.0
        %2068 = vmatprep.subr.mxu0 0.0
        %2069 = vmatpush1.msra.mxu0 0.0
        %2070 = vmatprep.subr.mxu0 0.0
        %2071 = vmatpush1.msra.mxu0 0.0
        %2072 = vmatprep.subr.mxu0 0.0
        %2073 = vmatpush1.msra.mxu0 0.0
        %2074 = vmatprep.subr.mxu0 0.0
        %2075 = vmatpush1.msra.mxu0 0.0
        %2076 = vmatprep.subr.mxu0 0.0
        %2077 = vmatpush1.msra.mxu0 0.0
        %2078 = vmatprep.subr.mxu0 0.0
        %2079 = vmatpush1.msra.mxu0 0.0
        %2080 = vmatprep.subr.mxu0 0.0
        %2081 = vmatpush1.msra.mxu0 0.0
        %2082 = vmatprep.subr.mxu0 0.0
        %2083 = vmatpush1.msra.mxu0 0.0
        %2084 = vmatprep.subr.mxu0 0.0
        %2085 = vmatpush1.msra.mxu0 0.0
        %2086 = vmatprep.subr.mxu0 0.0
        %2087 = vmatpush1.msra.mxu0 0.0
        %2088 = vmatprep.subr.mxu0 0.0
        %2089 = vmatpush1.msra.mxu0 0.0
        %2090 = vmatprep.subr.mxu0 0.0
        %2091 = vmatpush1.msra.mxu0 0.0
        %2092 = vmatprep.subr.mxu0 0.0
        %2093 = vmatpush1.msra.mxu0 0.0
        %2094 = vmatprep.subr.mxu0 0.0
        %2095 = vmatpush1.msra.mxu0 0.0
        %2096 = vmatprep.mubr.f32.mxu0 0.0
        %2097 = vmatmul.mubr.f32.gmra.mrb[0].mxu0 %v2030
        %v2098 = vpop.f32.mrb[0].mxu0
        %v2099 = vadd.f32 0.0, %v2098
        %v2100 = vpop.f32.mrb[0].mxu0
        %v2101 = vadd.f32 0.0, %v2100
        %2102 = vdwg.mxu0
        %s2103 = scalar_lea.vmem [#allocation7], 3584
        %v2104 = vld [vmem:[%s2103] sm:$0xff]
        %v2105 = vld [vmem:[%s2103 + $0x8] sm:$0xff]
        %v2106 = vld [vmem:[%s2103 + $0x10] sm:$0xff]
        %v2107 = vld [vmem:[%s2103 + $0x18] sm:$0xff]
        %v2108 = vld [vmem:[%s2103 + $0x20] sm:$0xff]
        %v2109 = vld [vmem:[%s2103 + $0x28] sm:$0xff]
        %v2110 = vld [vmem:[%s2103 + $0x30] sm:$0xff]
        %v2111 = vld [vmem:[%s2103 + $0x38] sm:$0xff]
        %v2112 = vld [vmem:[%s2103 + $0x40] sm:$0xff]
        %v2113 = vld [vmem:[%s2103 + $0x48] sm:$0xff]
        %v2114 = vld [vmem:[%s2103 + $0x50] sm:$0xff]
        %v2115 = vld [vmem:[%s2103 + $0x58] sm:$0xff]
        %v2116 = vld [vmem:[%s2103 + $0x60] sm:$0xff]
        %v2117 = vld [vmem:[%s2103 + $0x68] sm:$0xff]
        %v2118 = vld [vmem:[%s2103 + $0x70] sm:$0xff]
        %v2119 = vld [vmem:[%s2103 + $0x78] sm:$0xff]
        %v2120 = vld [vmem:[%s2103 + $0x80] sm:$0xff]
        %v2121 = vld [vmem:[%s2103 + $0x88] sm:$0xff]
        %v2122 = vld [vmem:[%s2103 + $0x90] sm:$0xff]
        %v2123 = vld [vmem:[%s2103 + $0x98] sm:$0xff]
        %v2124 = vld [vmem:[%s2103 + $0xa0] sm:$0xff]
        %v2125 = vld [vmem:[%s2103 + $0xa8] sm:$0xff]
        %v2126 = vld [vmem:[%s2103 + $0xb0] sm:$0xff]
        %v2127 = vld [vmem:[%s2103 + $0xb8] sm:$0xff]
        %v2128 = vld [vmem:[%s2103 + $0xc0] sm:$0xff]
        %v2129 = vld [vmem:[%s2103 + $0xc8] sm:$0xff]
        %v2130 = vld [vmem:[%s2103 + $0xd0] sm:$0xff]
        %v2131 = vld [vmem:[%s2103 + $0xd8] sm:$0xff]
        %v2132 = vld [vmem:[%s2103 + $0xe0] sm:$0xff]
        %v2133 = vld [vmem:[%s2103 + $0xe8] sm:$0xff]
        %v2134 = vld [vmem:[%s2103 + $0xf0] sm:$0xff]
        %v2135 = vld [vmem:[%s2103 + $0xf8] sm:$0xff]
        %v2136 = vld [vmem:[%s2103 + $0x100] sm:$0xff]
        %v2137 = vld [vmem:[%s2103 + $0x108] sm:$0xff]
        %v2138 = vld [vmem:[%s2103 + $0x110] sm:$0xff]
        %v2139 = vld [vmem:[%s2103 + $0x118] sm:$0xff]
        %v2140 = vld [vmem:[%s2103 + $0x120] sm:$0xff]
        %v2141 = vld [vmem:[%s2103 + $0x128] sm:$0xff]
        %v2142 = vld [vmem:[%s2103 + $0x130] sm:$0xff]
        %v2143 = vld [vmem:[%s2103 + $0x138] sm:$0xff]
        %v2144 = vld [vmem:[%s2103 + $0x140] sm:$0xff]
        %v2145 = vld [vmem:[%s2103 + $0x148] sm:$0xff]
        %v2146 = vld [vmem:[%s2103 + $0x150] sm:$0xff]
        %v2147 = vld [vmem:[%s2103 + $0x158] sm:$0xff]
        %v2148 = vld [vmem:[%s2103 + $0x160] sm:$0xff]
        %v2149 = vld [vmem:[%s2103 + $0x168] sm:$0xff]
        %v2150 = vld [vmem:[%s2103 + $0x170] sm:$0xff]
        %v2151 = vld [vmem:[%s2103 + $0x178] sm:$0xff]
        %v2152 = vld [vmem:[%s2103 + $0x180] sm:$0xff]
        %v2153 = vld [vmem:[%s2103 + $0x188] sm:$0xff]
        %v2154 = vld [vmem:[%s2103 + $0x190] sm:$0xff]
        %v2155 = vld [vmem:[%s2103 + $0x198] sm:$0xff]
        %v2156 = vld [vmem:[%s2103 + $0x1a0] sm:$0xff]
        %v2157 = vld [vmem:[%s2103 + $0x1a8] sm:$0xff]
        %v2158 = vld [vmem:[%s2103 + $0x1b0] sm:$0xff]
        %v2159 = vld [vmem:[%s2103 + $0x1b8] sm:$0xff]
        %v2160 = vld [vmem:[%s2103 + $0x1c0] sm:$0xff]
        %v2161 = vld [vmem:[%s2103 + $0x1c8] sm:$0xff]
        %v2162 = vld [vmem:[%s2103 + $0x1d0] sm:$0xff]
        %v2163 = vld [vmem:[%s2103 + $0x1d8] sm:$0xff]
        %v2164 = vld [vmem:[%s2103 + $0x1e0] sm:$0xff]
        %v2165 = vld [vmem:[%s2103 + $0x1e8] sm:$0xff]
        %v2166 = vld [vmem:[%s2103 + $0x1f0] sm:$0xff]
        %v2167 = vld [vmem:[%s2103 + $0x1f8] sm:$0xff]
        %2168 = vmatprep.subr.mxu0 %v2105
        %2169 = vmatpush1.msra.mxu0 %v2104
        %2170 = vmatprep.subr.mxu0 %v2107
        %2171 = vmatpush1.msra.mxu0 %v2106
        %2172 = vmatprep.subr.mxu0 %v2109
        %2173 = vmatpush1.msra.mxu0 %v2108
        %2174 = vmatprep.subr.mxu0 %v2111
        %2175 = vmatpush1.msra.mxu0 %v2110
        %2176 = vmatprep.subr.mxu0 %v2113
        %2177 = vmatpush1.msra.mxu0 %v2112
        %2178 = vmatprep.subr.mxu0 %v2115
        %2179 = vmatpush1.msra.mxu0 %v2114
        %2180 = vmatprep.subr.mxu0 %v2117
        %2181 = vmatpush1.msra.mxu0 %v2116
        %2182 = vmatprep.subr.mxu0 %v2119
        %2183 = vmatpush1.msra.mxu0 %v2118
        %2184 = vmatprep.subr.mxu0 %v2121
        %2185 = vmatpush1.msra.mxu0 %v2120
        %2186 = vmatprep.subr.mxu0 %v2123
        %2187 = vmatpush1.msra.mxu0 %v2122
        %2188 = vmatprep.subr.mxu0 %v2125
        %2189 = vmatpush1.msra.mxu0 %v2124
        %2190 = vmatprep.subr.mxu0 %v2127
        %2191 = vmatpush1.msra.mxu0 %v2126
        %2192 = vmatprep.subr.mxu0 %v2129
        %2193 = vmatpush1.msra.mxu0 %v2128
        %2194 = vmatprep.subr.mxu0 %v2131
        %2195 = vmatpush1.msra.mxu0 %v2130
        %2196 = vmatprep.subr.mxu0 %v2133
        %2197 = vmatpush1.msra.mxu0 %v2132
        %2198 = vmatprep.subr.mxu0 %v2135
        %2199 = vmatpush1.msra.mxu0 %v2134
        %2200 = vmatprep.subr.mxu0 %v2137
        %2201 = vmatpush1.msra.mxu0 %v2136
        %2202 = vmatprep.subr.mxu0 %v2139
        %2203 = vmatpush1.msra.mxu0 %v2138
        %2204 = vmatprep.subr.mxu0 %v2141
        %2205 = vmatpush1.msra.mxu0 %v2140
        %2206 = vmatprep.subr.mxu0 %v2143
        %2207 = vmatpush1.msra.mxu0 %v2142
        %2208 = vmatprep.subr.mxu0 %v2145
        %2209 = vmatpush1.msra.mxu0 %v2144
        %2210 = vmatprep.subr.mxu0 %v2147
        %2211 = vmatpush1.msra.mxu0 %v2146
        %2212 = vmatprep.subr.mxu0 %v2149
        %2213 = vmatpush1.msra.mxu0 %v2148
        %2214 = vmatprep.subr.mxu0 %v2151
        %2215 = vmatpush1.msra.mxu0 %v2150
        %2216 = vmatprep.subr.mxu0 %v2153
        %2217 = vmatpush1.msra.mxu0 %v2152
        %2218 = vmatprep.subr.mxu0 %v2155
        %2219 = vmatpush1.msra.mxu0 %v2154
        %2220 = vmatprep.subr.mxu0 %v2157
        %2221 = vmatpush1.msra.mxu0 %v2156
        %2222 = vmatprep.subr.mxu0 %v2159
        %2223 = vmatpush1.msra.mxu0 %v2158
        %2224 = vmatprep.subr.mxu0 %v2161
        %2225 = vmatpush1.msra.mxu0 %v2160
        %2226 = vmatprep.subr.mxu0 %v2163
        %2227 = vmatpush1.msra.mxu0 %v2162
        %2228 = vmatprep.subr.mxu0 %v2165
        %2229 = vmatpush1.msra.mxu0 %v2164
        %2230 = vmatprep.subr.mxu0 %v2167
        %2231 = vmatpush1.msra.mxu0 %v2166
        %2232 = vmatprep.mubr.f32.mxu0 %v2101
        %2233 = vmatmul.mubr.f32.gmra.mrb[0].mxu0 %v2099
        %v2234 = vpop.f32.mrb[0].mxu0
        %v2235 = vadd.f32 0.0, %v2234
        %v2236 = vpop.f32.mrb[0].mxu0
        %v2237 = vadd.f32 0.0, %v2236
        %2238 = vdwg.mxu0
        %v2239 = vadd.f32 %v2025, %v2235
        %v2240 = vadd.f32 %v2026, %v2237
        %s2241 = scalar_lea.vmem %s4, 64
        %v2242 = vld [vmem:[%s2241] sm:$0xff]
        %v2244 = vsel %vm535, %v2242, 0
        %2246 = vmatprep.subr.mxu0 %v533
        %2247 = vmatpush1.msra.mxu0 %v532
        %2248 = vmatprep.subr.mxu0 0.0
        %2249 = vmatpush1.msra.mxu0 0.0
        %2250 = vmatprep.subr.mxu0 0.0
        %2251 = vmatpush1.msra.mxu0 0.0
        %2252 = vmatprep.subr.mxu0 0.0
        %2253 = vmatpush1.msra.mxu0 0.0
        %2254 = vmatprep.subr.mxu0 0.0
        %2255 = vmatpush1.msra.mxu0 0.0
        %2256 = vmatprep.subr.mxu0 0.0
        %2257 = vmatpush1.msra.mxu0 0.0
        %2258 = vmatprep.subr.mxu0 0.0
        %2259 = vmatpush1.msra.mxu0 0.0
        %2260 = vmatprep.subr.mxu0 0.0
        %2261 = vmatpush1.msra.mxu0 0.0
        %2262 = vmatprep.subr.mxu0 0.0
        %2263 = vmatpush1.msra.mxu0 0.0
        %2264 = vmatprep.subr.mxu0 0.0
        %2265 = vmatpush1.msra.mxu0 0.0
        %2266 = vmatprep.subr.mxu0 0.0
        %2267 = vmatpush1.msra.mxu0 0.0
        %2268 = vmatprep.subr.mxu0 0.0
        %2269 = vmatpush1.msra.mxu0 0.0
        %2270 = vmatprep.subr.mxu0 0.0
        %2271 = vmatpush1.msra.mxu0 0.0
        %2272 = vmatprep.subr.mxu0 0.0
        %2273 = vmatpush1.msra.mxu0 0.0
        %2274 = vmatprep.subr.mxu0 0.0
        %2275 = vmatpush1.msra.mxu0 0.0
        %2276 = vmatprep.subr.mxu0 0.0
        %2277 = vmatpush1.msra.mxu0 0.0
        %2278 = vmatprep.subr.mxu0 0.0
        %2279 = vmatpush1.msra.mxu0 0.0
        %2280 = vmatprep.subr.mxu0 0.0
        %2281 = vmatpush1.msra.mxu0 0.0
        %2282 = vmatprep.subr.mxu0 0.0
        %2283 = vmatpush1.msra.mxu0 0.0
        %2284 = vmatprep.subr.mxu0 0.0
        %2285 = vmatpush1.msra.mxu0 0.0
        %2286 = vmatprep.subr.mxu0 0.0
        %2287 = vmatpush1.msra.mxu0 0.0
        %2288 = vmatprep.subr.mxu0 0.0
        %2289 = vmatpush1.msra.mxu0 0.0
        %2290 = vmatprep.subr.mxu0 0.0
        %2291 = vmatpush1.msra.mxu0 0.0
        %2292 = vmatprep.subr.mxu0 0.0
        %2293 = vmatpush1.msra.mxu0 0.0
        %2294 = vmatprep.subr.mxu0 0.0
        %2295 = vmatpush1.msra.mxu0 0.0
        %2296 = vmatprep.subr.mxu0 0.0
        %2297 = vmatpush1.msra.mxu0 0.0
        %2298 = vmatprep.subr.mxu0 0.0
        %2299 = vmatpush1.msra.mxu0 0.0
        %2300 = vmatprep.subr.mxu0 0.0
        %2301 = vmatpush1.msra.mxu0 0.0
        %2302 = vmatprep.subr.mxu0 0.0
        %2303 = vmatpush1.msra.mxu0 0.0
        %2304 = vmatprep.subr.mxu0 0.0
        %2305 = vmatpush1.msra.mxu0 0.0
        %2306 = vmatprep.subr.mxu0 0.0
        %2307 = vmatpush1.msra.mxu0 0.0
        %2308 = vmatprep.subr.mxu0 0.0
        %2309 = vmatpush1.msra.mxu0 0.0
        %2310 = vmatprep.mubr.f32.mxu0 0.0
        %2311 = vmatmul.mubr.f32.gmra.mrb[0].mxu0 %v2244
        %v2312 = vpop.f32.mrb[0].mxu0
        %v2313 = vadd.f32 0.0, %v2312
        %v2314 = vpop.f32.mrb[0].mxu0
        %v2315 = vadd.f32 0.0, %v2314
        %2316 = vdwg.mxu0
        %s2317 = scalar_lea.vmem [#allocation7], 4096
        %v2318 = vld [vmem:[%s2317] sm:$0xff]
        %v2319 = vld [vmem:[%s2317 + $0x8] sm:$0xff]
        %v2320 = vld [vmem:[%s2317 + $0x10] sm:$0xff]
        %v2321 = vld [vmem:[%s2317 + $0x18] sm:$0xff]
        %v2322 = vld [vmem:[%s2317 + $0x20] sm:$0xff]
        %v2323 = vld [vmem:[%s2317 + $0x28] sm:$0xff]
        %v2324 = vld [vmem:[%s2317 + $0x30] sm:$0xff]
        %v2325 = vld [vmem:[%s2317 + $0x38] sm:$0xff]
        %v2326 = vld [vmem:[%s2317 + $0x40] sm:$0xff]
        %v2327 = vld [vmem:[%s2317 + $0x48] sm:$0xff]
        %v2328 = vld [vmem:[%s2317 + $0x50] sm:$0xff]
        %v2329 = vld [vmem:[%s2317 + $0x58] sm:$0xff]
        %v2330 = vld [vmem:[%s2317 + $0x60] sm:$0xff]
        %v2331 = vld [vmem:[%s2317 + $0x68] sm:$0xff]
        %v2332 = vld [vmem:[%s2317 + $0x70] sm:$0xff]
        %v2333 = vld [vmem:[%s2317 + $0x78] sm:$0xff]
        %v2334 = vld [vmem:[%s2317 + $0x80] sm:$0xff]
        %v2335 = vld [vmem:[%s2317 + $0x88] sm:$0xff]
        %v2336 = vld [vmem:[%s2317 + $0x90] sm:$0xff]
        %v2337 = vld [vmem:[%s2317 + $0x98] sm:$0xff]
        %v2338 = vld [vmem:[%s2317 + $0xa0] sm:$0xff]
        %v2339 = vld [vmem:[%s2317 + $0xa8] sm:$0xff]
        %v2340 = vld [vmem:[%s2317 + $0xb0] sm:$0xff]
        %v2341 = vld [vmem:[%s2317 + $0xb8] sm:$0xff]
        %v2342 = vld [vmem:[%s2317 + $0xc0] sm:$0xff]
        %v2343 = vld [vmem:[%s2317 + $0xc8] sm:$0xff]
        %v2344 = vld [vmem:[%s2317 + $0xd0] sm:$0xff]
        %v2345 = vld [vmem:[%s2317 + $0xd8] sm:$0xff]
        %v2346 = vld [vmem:[%s2317 + $0xe0] sm:$0xff]
        %v2347 = vld [vmem:[%s2317 + $0xe8] sm:$0xff]
        %v2348 = vld [vmem:[%s2317 + $0xf0] sm:$0xff]
        %v2349 = vld [vmem:[%s2317 + $0xf8] sm:$0xff]
        %v2350 = vld [vmem:[%s2317 + $0x100] sm:$0xff]
        %v2351 = vld [vmem:[%s2317 + $0x108] sm:$0xff]
        %v2352 = vld [vmem:[%s2317 + $0x110] sm:$0xff]
        %v2353 = vld [vmem:[%s2317 + $0x118] sm:$0xff]
        %v2354 = vld [vmem:[%s2317 + $0x120] sm:$0xff]
        %v2355 = vld [vmem:[%s2317 + $0x128] sm:$0xff]
        %v2356 = vld [vmem:[%s2317 + $0x130] sm:$0xff]
        %v2357 = vld [vmem:[%s2317 + $0x138] sm:$0xff]
        %v2358 = vld [vmem:[%s2317 + $0x140] sm:$0xff]
        %v2359 = vld [vmem:[%s2317 + $0x148] sm:$0xff]
        %v2360 = vld [vmem:[%s2317 + $0x150] sm:$0xff]
        %v2361 = vld [vmem:[%s2317 + $0x158] sm:$0xff]
        %v2362 = vld [vmem:[%s2317 + $0x160] sm:$0xff]
        %v2363 = vld [vmem:[%s2317 + $0x168] sm:$0xff]
        %v2364 = vld [vmem:[%s2317 + $0x170] sm:$0xff]
        %v2365 = vld [vmem:[%s2317 + $0x178] sm:$0xff]
        %v2366 = vld [vmem:[%s2317 + $0x180] sm:$0xff]
        %v2367 = vld [vmem:[%s2317 + $0x188] sm:$0xff]
        %v2368 = vld [vmem:[%s2317 + $0x190] sm:$0xff]
        %v2369 = vld [vmem:[%s2317 + $0x198] sm:$0xff]
        %v2370 = vld [vmem:[%s2317 + $0x1a0] sm:$0xff]
        %v2371 = vld [vmem:[%s2317 + $0x1a8] sm:$0xff]
        %v2372 = vld [vmem:[%s2317 + $0x1b0] sm:$0xff]
        %v2373 = vld [vmem:[%s2317 + $0x1b8] sm:$0xff]
        %v2374 = vld [vmem:[%s2317 + $0x1c0] sm:$0xff]
        %v2375 = vld [vmem:[%s2317 + $0x1c8] sm:$0xff]
        %v2376 = vld [vmem:[%s2317 + $0x1d0] sm:$0xff]
        %v2377 = vld [vmem:[%s2317 + $0x1d8] sm:$0xff]
        %v2378 = vld [vmem:[%s2317 + $0x1e0] sm:$0xff]
        %v2379 = vld [vmem:[%s2317 + $0x1e8] sm:$0xff]
        %v2380 = vld [vmem:[%s2317 + $0x1f0] sm:$0xff]
        %v2381 = vld [vmem:[%s2317 + $0x1f8] sm:$0xff]
        %2382 = vmatprep.subr.mxu0 %v2319
        %2383 = vmatpush1.msra.mxu0 %v2318
        %2384 = vmatprep.subr.mxu0 %v2321
        %2385 = vmatpush1.msra.mxu0 %v2320
        %2386 = vmatprep.subr.mxu0 %v2323
        %2387 = vmatpush1.msra.mxu0 %v2322
        %2388 = vmatprep.subr.mxu0 %v2325
        %2389 = vmatpush1.msra.mxu0 %v2324
        %2390 = vmatprep.subr.mxu0 %v2327
        %2391 = vmatpush1.msra.mxu0 %v2326
        %2392 = vmatprep.subr.mxu0 %v2329
        %2393 = vmatpush1.msra.mxu0 %v2328
        %2394 = vmatprep.subr.mxu0 %v2331
        %2395 = vmatpush1.msra.mxu0 %v2330
        %2396 = vmatprep.subr.mxu0 %v2333
        %2397 = vmatpush1.msra.mxu0 %v2332
        %2398 = vmatprep.subr.mxu0 %v2335
        %2399 = vmatpush1.msra.mxu0 %v2334
        %2400 = vmatprep.subr.mxu0 %v2337
        %2401 = vmatpush1.msra.mxu0 %v2336
        %2402 = vmatprep.subr.mxu0 %v2339
        %2403 = vmatpush1.msra.mxu0 %v2338
        %2404 = vmatprep.subr.mxu0 %v2341
        %2405 = vmatpush1.msra.mxu0 %v2340
        %2406 = vmatprep.subr.mxu0 %v2343
        %2407 = vmatpush1.msra.mxu0 %v2342
        %2408 = vmatprep.subr.mxu0 %v2345
        %2409 = vmatpush1.msra.mxu0 %v2344
        %2410 = vmatprep.subr.mxu0 %v2347
        %2411 = vmatpush1.msra.mxu0 %v2346
        %2412 = vmatprep.subr.mxu0 %v2349
        %2413 = vmatpush1.msra.mxu0 %v2348
        %2414 = vmatprep.subr.mxu0 %v2351
        %2415 = vmatpush1.msra.mxu0 %v2350
        %2416 = vmatprep.subr.mxu0 %v2353
        %2417 = vmatpush1.msra.mxu0 %v2352
        %2418 = vmatprep.subr.mxu0 %v2355
        %2419 = vmatpush1.msra.mxu0 %v2354
        %2420 = vmatprep.subr.mxu0 %v2357
        %2421 = vmatpush1.msra.mxu0 %v2356
        %2422 = vmatprep.subr.mxu0 %v2359
        %2423 = vmatpush1.msra.mxu0 %v2358
        %2424 = vmatprep.subr.mxu0 %v2361
        %2425 = vmatpush1.msra.mxu0 %v2360
        %2426 = vmatprep.subr.mxu0 %v2363
        %2427 = vmatpush1.msra.mxu0 %v2362
        %2428 = vmatprep.subr.mxu0 %v2365
        %2429 = vmatpush1.msra.mxu0 %v2364
        %2430 = vmatprep.subr.mxu0 %v2367
        %2431 = vmatpush1.msra.mxu0 %v2366
        %2432 = vmatprep.subr.mxu0 %v2369
        %2433 = vmatpush1.msra.mxu0 %v2368
        %2434 = vmatprep.subr.mxu0 %v2371
        %2435 = vmatpush1.msra.mxu0 %v2370
        %2436 = vmatprep.subr.mxu0 %v2373
        %2437 = vmatpush1.msra.mxu0 %v2372
        %2438 = vmatprep.subr.mxu0 %v2375
        %2439 = vmatpush1.msra.mxu0 %v2374
        %2440 = vmatprep.subr.mxu0 %v2377
        %2441 = vmatpush1.msra.mxu0 %v2376
        %2442 = vmatprep.subr.mxu0 %v2379
        %2443 = vmatpush1.msra.mxu0 %v2378
        %2444 = vmatprep.subr.mxu0 %v2381
        %2445 = vmatpush1.msra.mxu0 %v2380
        %2446 = vmatprep.mubr.f32.mxu0 %v2315
        %2447 = vmatmul.mubr.f32.gmra.mrb[0].mxu0 %v2313
        %v2448 = vpop.f32.mrb[0].mxu0
        %v2449 = vadd.f32 0.0, %v2448
        %v2450 = vpop.f32.mrb[0].mxu0
        %v2451 = vadd.f32 0.0, %v2450
        %2452 = vdwg.mxu0
        %v2453 = vadd.f32 %v2239, %v2449
        %v2454 = vadd.f32 %v2240, %v2451
        %v2455 = vld [vmem:[%s5] sm:$0xff]
        %2457 = vset.pattern.permute.xlu0 0
        %2458 = vperm.xlu0 %2457, %v2455
        %v2459 = vpop.permute.xlu0 %2458
        %v2461 = vmul.f32 %v2453, %v2459
        %v2462 = vmul.f32 %v2454, %v2459
        %v2463 = vld [vmem:[%s6] sm:$0xff]
        %2465 = vset.pattern.permute.xlu0 0
        %2466 = vperm.xlu0 %2465, %v2463
        %v2467 = vpop.permute.xlu0 %2466
        %v2469 = vadd.f32 %v2461, %v2467
        %v2470 = vadd.f32 %v2462, %v2467
        %v2471 = vmax.f32 %v2469, 0.0
        %v2472 = vmax.f32 %v2470, 0.0
        %v2473 = vld [vmem:[%s7] sm:$0xff]
        %v2474 = vld [vmem:[%s7 + $0x8] sm:$0xff]
        %v2475 = vld [vmem:[%s7 + $0x10] sm:$0xff]
        %v2476 = vld [vmem:[%s7 + $0x18] sm:$0xff]
        %v2478 = vsel %vm535, %v2473, 0
        %v2481 = vsel %vm535, %v2474, 0
        %v2484 = vsel %vm535, %v2475, 0
        %v2487 = vsel %vm535, %v2476, 0
        %2489 = vmatprep.subr.mxu0 %v2472
        %2490 = vmatpush1.msra.mxu0 %v2471
        %2491 = vmatprep.subr.mxu0 0.0
        %2492 = vmatpush1.msra.mxu0 0.0
        %2493 = vmatprep.subr.mxu0 0.0
        %2494 = vmatpush1.msra.mxu0 0.0
        %2495 = vmatprep.subr.mxu0 0.0
        %2496 = vmatpush1.msra.mxu0 0.0
        %2497 = vmatprep.subr.mxu0 0.0
        %2498 = vmatpush1.msra.mxu0 0.0
        %2499 = vmatprep.subr.mxu0 0.0
        %2500 = vmatpush1.msra.mxu0 0.0
        %2501 = vmatprep.subr.mxu0 0.0
        %2502 = vmatpush1.msra.mxu0 0.0
        %2503 = vmatprep.subr.mxu0 0.0
        %2504 = vmatpush1.msra.mxu0 0.0
        %2505 = vmatprep.subr.mxu0 0.0
        %2506 = vmatpush1.msra.mxu0 0.0
        %2507 = vmatprep.subr.mxu0 0.0
        %2508 = vmatpush1.msra.mxu0 0.0
        %2509 = vmatprep.subr.mxu0 0.0
        %2510 = vmatpush1.msra.mxu0 0.0
        %2511 = vmatprep.subr.mxu0 0.0
        %2512 = vmatpush1.msra.mxu0 0.0
        %2513 = vmatprep.subr.mxu0 0.0
        %2514 = vmatpush1.msra.mxu0 0.0
        %2515 = vmatprep.subr.mxu0 0.0
        %2516 = vmatpush1.msra.mxu0 0.0
        %2517 = vmatprep.subr.mxu0 0.0
        %2518 = vmatpush1.msra.mxu0 0.0
        %2519 = vmatprep.subr.mxu0 0.0
        %2520 = vmatpush1.msra.mxu0 0.0
        %2521 = vmatprep.subr.mxu0 0.0
        %2522 = vmatpush1.msra.mxu0 0.0
        %2523 = vmatprep.subr.mxu0 0.0
        %2524 = vmatpush1.msra.mxu0 0.0
        %2525 = vmatprep.subr.mxu0 0.0
        %2526 = vmatpush1.msra.mxu0 0.0
        %2527 = vmatprep.subr.mxu0 0.0
        %2528 = vmatpush1.msra.mxu0 0.0
        %2529 = vmatprep.subr.mxu0 0.0
        %2530 = vmatpush1.msra.mxu0 0.0
        %2531 = vmatprep.subr.mxu0 0.0
        %2532 = vmatpush1.msra.mxu0 0.0
        %2533 = vmatprep.subr.mxu0 0.0
        %2534 = vmatpush1.msra.mxu0 0.0
        %2535 = vmatprep.subr.mxu0 0.0
        %2536 = vmatpush1.msra.mxu0 0.0
        %2537 = vmatprep.subr.mxu0 0.0
        %2538 = vmatpush1.msra.mxu0 0.0
        %2539 = vmatprep.subr.mxu0 0.0
        %2540 = vmatpush1.msra.mxu0 0.0
        %2541 = vmatprep.subr.mxu0 0.0
        %2542 = vmatpush1.msra.mxu0 0.0
        %2543 = vmatprep.subr.mxu0 0.0
        %2544 = vmatpush1.msra.mxu0 0.0
        %2545 = vmatprep.subr.mxu0 0.0
        %2546 = vmatpush1.msra.mxu0 0.0
        %2547 = vmatprep.subr.mxu0 0.0
        %2548 = vmatpush1.msra.mxu0 0.0
        %2549 = vmatprep.subr.mxu0 0.0
        %2550 = vmatpush1.msra.mxu0 0.0
        %2551 = vmatprep.subr.mxu0 0.0
        %2552 = vmatpush1.msra.mxu0 0.0
        %2553 = vmatprep.mubr.f32.mxu0 0.0
        %2554 = vmatmul.mubr.f32.gmra.mrb[0].mxu0 %v2478
        %v2555 = vpop.f32.mrb[0].mxu0
        %v2556 = vadd.f32 0.0, %v2555
        %v2557 = vpop.f32.mrb[0].mxu0
        %v2558 = vadd.f32 0.0, %v2557
        %2559 = vmatprep.mubr.f32.mxu0 0.0
        %2560 = vmatmul.mubr.f32.gmra.mrb[0].mxu0 %v2481
        %v2561 = vpop.f32.mrb[0].mxu0
        %v2562 = vadd.f32 0.0, %v2561
        %v2563 = vpop.f32.mrb[0].mxu0
        %v2564 = vadd.f32 0.0, %v2563
        %2565 = vmatprep.mubr.f32.mxu0 0.0
        %2566 = vmatmul.mubr.f32.gmra.mrb[0].mxu0 %v2484
        %v2567 = vpop.f32.mrb[0].mxu0
        %v2568 = vadd.f32 0.0, %v2567
        %v2569 = vpop.f32.mrb[0].mxu0
        %v2570 = vadd.f32 0.0, %v2569
        %2571 = vmatprep.mubr.f32.mxu0 0.0
        %2572 = vmatmul.mubr.f32.gmra.mrb[0].mxu0 %v2487
        %v2573 = vpop.f32.mrb[0].mxu0
        %v2574 = vadd.f32 0.0, %v2573
        %v2575 = vpop.f32.mrb[0].mxu0
        %v2576 = vadd.f32 0.0, %v2575
        %2577 = vdwg.mxu0
        %v2578 = vld [vmem:[%s8] sm:$0xff]
        %v2579 = vld [vmem:[%s8 + $0x8] sm:$0xff]
        %v2580 = vld [vmem:[%s8 + $0x10] sm:$0xff]
        %v2581 = vld [vmem:[%s8 + $0x18] sm:$0xff]
        %2583 = vset.pattern.permute.xlu0 0
        %2584 = vperm.xlu0 %2583, %v2578
        %v2585 = vpop.permute.xlu0 %2584
        %2588 = vset.pattern.permute.xlu0 0
        %2589 = vperm.xlu0 %2588, %v2579
        %v2590 = vpop.permute.xlu0 %2589
        %2593 = vset.pattern.permute.xlu0 0
        %2594 = vperm.xlu0 %2593, %v2580
        %v2595 = vpop.permute.xlu0 %2594
        %2598 = vset.pattern.permute.xlu0 0
        %2599 = vperm.xlu0 %2598, %v2581
        %v2600 = vpop.permute.xlu0 %2599
        %v2602 = vmul.f32 %v2556, %v2585
        %v2603 = vmul.f32 %v2558, %v2585
        %v2604 = vmul.f32 %v2562, %v2590
        %v2605 = vmul.f32 %v2564, %v2590
        %v2606 = vmul.f32 %v2568, %v2595
        %v2607 = vmul.f32 %v2570, %v2595
        %v2608 = vmul.f32 %v2574, %v2600
        %v2609 = vmul.f32 %v2576, %v2600
        %v2610 = vld [vmem:[%s9] sm:$0xff]
        %v2611 = vld [vmem:[%s9 + $0x8] sm:$0xff]
        %v2612 = vld [vmem:[%s9 + $0x10] sm:$0xff]
        %v2613 = vld [vmem:[%s9 + $0x18] sm:$0xff]
        %2615 = vset.pattern.permute.xlu0 0
        %2616 = vperm.xlu0 %2615, %v2610
        %v2617 = vpop.permute.xlu0 %2616
        %2620 = vset.pattern.permute.xlu0 0
        %2621 = vperm.xlu0 %2620, %v2611
        %v2622 = vpop.permute.xlu0 %2621
        %2625 = vset.pattern.permute.xlu0 0
        %2626 = vperm.xlu0 %2625, %v2612
        %v2627 = vpop.permute.xlu0 %2626
        %2630 = vset.pattern.permute.xlu0 0
        %2631 = vperm.xlu0 %2630, %v2613
        %v2632 = vpop.permute.xlu0 %2631
        %v2634 = vadd.f32 %v2602, %v2617
        %v2635 = vadd.f32 %v2603, %v2617
        %v2636 = vadd.f32 %v2604, %v2622
        %v2637 = vadd.f32 %v2605, %v2622
        %v2638 = vadd.f32 %v2606, %v2627
        %v2639 = vadd.f32 %v2607, %v2627
        %v2640 = vadd.f32 %v2608, %v2632
        %v2641 = vadd.f32 %v2609, %v2632
        %v2642 = vadd.f32 %v2634, %v432
        %v2643 = vadd.f32 %v2635, %v433
        %v2644 = vadd.f32 %v2636, %v434
        %v2645 = vadd.f32 %v2637, %v435
        %v2646 = vadd.f32 %v2638, %v436
        %v2647 = vadd.f32 %v2639, %v437
        %v2648 = vadd.f32 %v2640, %v438
        %v2649 = vadd.f32 %v2641, %v439
        %v2650 = vmax.f32 %v2642, 0.0
        %v2651 = vmax.f32 %v2643, 0.0
        %v2652 = vmax.f32 %v2644, 0.0
        %v2653 = vmax.f32 %v2645, 0.0
        %v2654 = vmax.f32 %v2646, 0.0
        %v2655 = vmax.f32 %v2647, 0.0
        %v2656 = vmax.f32 %v2648, 0.0
        %v2657 = vmax.f32 %v2649, 0.0
        %2658 = vst [vmem:[%s431] sm:$0xff] %v2650
        %2659 = vst [vmem:[%s431 + $0x8] sm:$0xff] %v2651
        %2660 = vst [vmem:[%s431 + $0x10] sm:$0xff] %v2652
        %2661 = vst [vmem:[%s431 + $0x18] sm:$0xff] %v2653
        %2662 = vst [vmem:[%s431 + $0x20] sm:$0xff] %v2654
        %2663 = vst [vmem:[%s431 + $0x28] sm:$0xff] %v2655
        %2664 = vst [vmem:[%s431 + $0x30] sm:$0xff] %v2656
        %2665 = vst [vmem:[%s431 + $0x38] sm:$0xff] %v2657
        %s2666 = sand.u32 %s273, 1
        %s2667 = scalar_lea.sflag [#allocation4], %s2666
        %s2668 = sand.u32 %s273, 1
        %s2669 = smul.addr %s2668, 64
        %s2670 = scalar_lea.vmem [#allocation8], %s2669
        // Predicated region
        $region77: #{tpu_custom_call.1} parent=63 // pred_check
          %p2671 = pneg %p283
        $region78: #{tpu_custom_call.1} parent=63 // pred_check_branch
          %2673 = sbr.rel (%p2671) target = $region80
        $region79: #{tpu_custom_call.1} parent=63 // pred_region
          %s2675 = ssub.s32 1024, 1024
          %2676 = vsyncadd %s2667, %s2675
          %s2677 = smul.addr %s29, 8
          %s2678 = smul.addr %s2677, 128
          %s2679 = scalar_lea.hbm %s11, %s2678
          %s2680 = sshll.u32 %s2670, 4
          %s2681 = int_to_ptr.vmem [resolvable:$true] %s2680
          %2686 = dma.vmem_to_hbm [thread:$0]  %s2681, 1024, %s2679, %s2667, 256, 256, 16
        $region80: #{tpu_custom_call.1} parent=63 // pred_fallthru
          _
      $region64: #{tpu_custom_call.1} parent=5 // pred_fallthru
        _
      %p2687 = scmp.le.s32.totalorder 2, %s24
      // Predicated region
      $region81: #{tpu_custom_call.1} parent=5 // pred_check
        %p2688 = pneg %p2687
      $region82: #{tpu_custom_call.1} parent=5 // pred_check_branch
        %2690 = sbr.rel (%p2688) target = $region84
      $region83: #{tpu_custom_call.1} parent=5 // pred_region
        %s2691 = ssub.s32 %s24, 2
        // Predicated region
        $region85: #{tpu_custom_call.1} parent=83 // pred_check
          %p2692 = pneg %p289
        $region86: #{tpu_custom_call.1} parent=83 // pred_check_branch
          %2694 = sbr.rel (%p2692) target = $region88
        $region87: #{tpu_custom_call.1} parent=83 // pred_region
          %s2695 = sand.u32 %s274, 1
          %s2696 = scalar_lea.sflag [#allocation4], %s2695
          %s2697 = sand.u32 %s274, 1
          %s2698 = smul.addr %s2697, 64
          %s2699 = scalar_lea.vmem [#allocation8], %s2698
          %2700 = dma.done %s2696, 1024
        $region88: #{tpu_custom_call.1} parent=83 // pred_fallthru
          _
      $region84: #{tpu_custom_call.1} parent=5 // pred_fallthru
        _
    $region6: #{tpu_custom_call.1} parent=1 // loop_footer
      %s28 = sadd.s32 1, %s24
    $region7: #{tpu_custom_call.1} parent=1 // loop_footer_branch
      %23 = sbr.rel target = $region3
    $region8: #{tpu_custom_call.1} parent=1 // loop_exit
      _
    %2701 = vsyncpa [#allocation3], 1
    %s2702 = scalar_lea.sflag [#allocation3], 1
    %2703 = vsyncpa %s2702, 1
    %2704 = vsyncpa [#allocation6], 1
    %2705 = vsyncpa [#allocation4], 1
    %s2706 = scalar_lea.sflag [#allocation4], 1
    %2707 = vsyncpa %s2706, 1

</llo_original>
